<compile_context>
chip_gen: v7x
topology: tpu7x:2x2x1
jax: 0.10.0
libtpu: 0.0.40
codegen_flags: <defaults>
</compile_context>

<pallas_src>
import functools

import jax
import jax.numpy as jnp
import numpy as np
from jax import lax
from jax.experimental import pallas as pl
from jax.experimental.pallas import tpu as pltpu

COUT_PAD = 128           # lane-dense output width (Cout zero-padded up to this)
TARGET_TILE_ROWS = 512   # ~512 output rows per grid step (measured pipelining sweet spot)


def _pick_row_tile(H, W):
    """Largest divisor TH of H such that TH*W <= max(TARGET_TILE_ROWS, W)."""
    cap = max(TARGET_TILE_ROWS // W, 1)
    th = 1
    for cand in range(1, H + 1):
        if H % cand == 0 and cand <= cap:
            th = cand
    return th


def _conv_tile(x_ref, w_ref, *, tile_rows, w_cols):
    """3x3 conv on one row-tile as three row-shifted MXU matmuls.

    x_ref: ((TH+2)*W, 3*Cin) bf16 -- width-im2col'd, zero-padded, row-flattened tile.
    w_ref: (3, 3*Cin, COUT_PAD)   bf16 -- w[dy, dx*Cin + ci, co].
    returns (TH*W, COUT_PAD) f32 accumulator.
    """
    acc = jnp.dot(x_ref[0:tile_rows, :], w_ref[0],
                  preferred_element_type=jnp.float32)
    for dy in range(1, 3):
        lo = dy * w_cols   # static, multiples of W -> sublane-aligned slices
        acc = acc + jnp.dot(x_ref[lo:lo + tile_rows, :], w_ref[dy],
                            preferred_element_type=jnp.float32)
    return acc


def _stats_kernel(x_ref, w_ref, stats_ref, *, tile_rows, w_cols):
    """Pass 1: conv tile -> per-tile per-channel (sum, centered sum of squares)."""
    acc = _conv_tile(x_ref, w_ref, tile_rows=tile_rows, w_cols=w_cols)
    s = jnp.sum(acc, axis=0, keepdims=True)                  # (1, 128)
    mu = s * (1.0 / tile_rows)
    c = acc - mu
    css = jnp.sum(c * c, axis=0, keepdims=True)              # (1, 128)
    stats_ref[...] = jnp.concatenate([s, css], axis=0)       # (2, 128)


def _norm_kernel(x_ref, w_ref, scale_ref, shift_ref, o_ref, *,
                 tile_rows, w_cols, relu):
    """Pass 2: recompute conv tile, apply global-BN affine + ReLU, lane-dense store."""
    acc = _conv_tile(x_ref, w_ref, tile_rows=tile_rows, w_cols=w_cols)
    y = acc * scale_ref[...] + shift_ref[...]
    if relu:
        y = jnp.maximum(y, 0.0)
    o_ref[...] = y.astype(o_ref.dtype)


def upsamp_block_forward(x_nchw, weight_oihw, conv_bias, bn_gamma, bn_beta, *,
                         relu=True, scale_factor=2, eps=1e-5):
    # Conv bias is exactly cancelled by training-mode BN's mean subtraction.
    del conv_bias
    N, Cin, Hin, Win = x_nchw.shape
    Cout, Cin_w, KH, KW = weight_oihw.shape
    assert Cin_w == Cin and KH == 3 and KW == 3, "this kernel supports k_size=3"
    assert Cout <= COUT_PAD
    pad = 1
    H, W = Hin * scale_factor, Win * scale_factor

    # ---------------- wrapper-side layout glue (cheap vs. the old 9x im2col) ----------------
    # TODO(synk): fold the nearest-neighbor repeat into the kernel tiling (read each
    # original row twice) to also avoid materializing the 4x upsampled intermediate.
    x_nhwc = jnp.transpose(x_nchw, (0, 2, 3, 1))                                  # NCHW -> NHWC
    x_up = jnp.repeat(jnp.repeat(x_nhwc, scale_factor, axis=1), scale_factor, axis=2)
    xp = jnp.pad(x_up, ((0, 0), (pad, pad), (pad, pad), (0, 0)))                  # (N, H+2, W+2, Cin)

    # Width-only im2col: (N, H+2, W, 3*Cin), channel order (dx, ci).
    xw = jnp.concatenate([xp[:, :, dx:dx + W, :] for dx in range(KW)], axis=3)

    TH = _pick_row_tile(H, W)
    n_t = H // TH
    TM = TH * W                      # output rows per grid step
    KC = KW * Cin                    # matmul contraction width (kept narrow: mem-bound op)
    assert TM % 8 == 0, "row tile must be a multiple of 8 sublanes"

    # Flatten rows and pre-stack overlapping (+2 padded rows) halo tiles so each grid
    # step reads one contiguous block (avoids overlapping-window BlockSpec tricks).
    xw_flat = xw.reshape(N, (H + 2 * pad) * W, KC)
    x_tiles = jnp.stack(
        [xw_flat[:, t * TM:(t * TH + TH + 2) * W, :] for t in range(n_t)], axis=1)
    x_tiles = x_tiles.astype(jnp.bfloat16)                   # (N, n_t, (TH+2)*W, KC)

    # OIHW -> (KH, KW*Cin, COUT_PAD) bf16 with zero-padded output channels.
    w_r = jnp.transpose(weight_oihw, (2, 3, 1, 0)).reshape(KH, KC, Cout)
    w_r = jnp.pad(w_r, ((0, 0), (0, 0), (0, COUT_PAD - Cout))).astype(jnp.bfloat16)

    grid = (N, n_t)
    x_spec = pl.BlockSpec((None, None, (TH + 2) * W, KC), lambda n, t: (n, t, 0, 0))
    w_spec = pl.BlockSpec((KH, KC, COUT_PAD), lambda n, t: (0, 0, 0))
    cparams = pltpu.CompilerParams(
        dimension_semantics=("parallel", "parallel"),
        # per-step VMEM use is ~1.3 MiB incl. double buffers -> comfortably inside the
        # scoped budget on v5e/v6e and v7x's smaller 64 MiB physical VMEM.
        vmem_limit_bytes=32 * 1024 * 1024)

    M = N * H * W
    conv_flops = 2 * M * KH * KC * COUT_PAD
    in_bytes = x_tiles.size * 2 + w_r.size * 2

    # ---------------- pass 1: conv + per-tile partial BN statistics ----------------
    stats = pl.pallas_call(
        functools.partial(_stats_kernel, tile_rows=TM, w_cols=W),
        out_shape=jax.ShapeDtypeStruct((N, n_t, 2, COUT_PAD), jnp.float32),
        grid_spec=pltpu.PrefetchScalarGridSpec(
            num_scalar_prefetch=0, grid=grid,
            in_specs=[x_spec, w_spec],
            out_specs=pl.BlockSpec((None, None, 2, COUT_PAD), lambda n, t: (n, t, 0, 0))),
        compiler_params=cparams,
        cost_estimate=pl.CostEstimate(
            flops=conv_flops, transcendentals=0,
            bytes_accessed=in_bytes + N * n_t * 2 * COUT_PAD * 4),
    )(x_tiles, w_r)

    # -------- global BN statistics (Chan parallel-variance combine; numerically stable) --------
    sums = stats[:, :, 0, :]                                  # (N, n_t, 128)
    css = stats[:, :, 1, :]
    mean = jnp.sum(sums, axis=(0, 1)) / M                     # (128,)
    mu_t = sums / float(TM)
    var = (jnp.sum(css, axis=(0, 1))
           + float(TM) * jnp.sum((mu_t - mean) ** 2, axis=(0, 1))) / M
    gamma_p = jnp.pad(bn_gamma.astype(jnp.float32), (0, COUT_PAD - Cout))
    beta_p = jnp.pad(bn_beta.astype(jnp.float32), (0, COUT_PAD - Cout))
    g_inv = gamma_p * lax.rsqrt(var + eps)
    scale = g_inv.reshape(1, COUT_PAD)
    shift = (beta_p - mean * g_inv).reshape(1, COUT_PAD)

    # ---------------- pass 2: conv (recomputed) + normalize + ReLU ----------------
    y2d = pl.pallas_call(
        functools.partial(_norm_kernel, tile_rows=TM, w_cols=W, relu=relu),
        out_shape=jax.ShapeDtypeStruct((M, COUT_PAD), jnp.float32),
        grid_spec=pltpu.PrefetchScalarGridSpec(
            num_scalar_prefetch=0, grid=grid,
            in_specs=[x_spec, w_spec,
                      pl.BlockSpec((1, COUT_PAD), lambda n, t: (0, 0)),
                      pl.BlockSpec((1, COUT_PAD), lambda n, t: (0, 0))],
            out_specs=pl.BlockSpec((TM, COUT_PAD), lambda n, t: (n * n_t + t, 0))),
        compiler_params=cparams,
        cost_estimate=pl.CostEstimate(
            flops=conv_flops, transcendentals=0,
            bytes_accessed=in_bytes + M * COUT_PAD * 4),
    )(x_tiles, w_r, scale, shift)

    # (M, 128) -> NCHW for PyTorch-API parity (slice off the lane padding).  A consumer
    # that accepts NHWC / (M, 128) could take y2d directly and skip this transpose.
    y = y2d[:, :Cout].reshape(N, H, W, Cout)
    return jnp.transpose(y, (0, 3, 1, 2))


def reference_forward(x, w, b, g, beta, *, relu=True, scale_factor=2, eps=1e-5,
                      quantize_bf16=False):
    """Pure-JAX reference of Upsamp_Block.forward (BN in training mode)."""
    x_up = jnp.repeat(jnp.repeat(x, scale_factor, axis=2), scale_factor, axis=3)
    if quantize_bf16:  # round conv inputs the same way the kernel's MXU operands are
        x_up = x_up.astype(jnp.bfloat16).astype(jnp.float32)
        w = w.astype(jnp.bfloat16).astype(jnp.float32)
    y = lax.conv_general_dilated(
        x_up, w, window_strides=(1, 1), padding=((1, 1), (1, 1)),
        dimension_numbers=('NCHW', 'OIHW', 'NCHW'),
        precision=lax.Precision.HIGHEST)
    y = y + b[None, :, None, None]
    mean = jnp.mean(y, axis=(0, 2, 3), keepdims=True)
    var = jnp.mean((y - mean) ** 2, axis=(0, 2, 3), keepdims=True)
    y = (y - mean) / jnp.sqrt(var + eps) * g[None, :, None, None] + beta[None, :, None, None]
    if relu:
        y = jnp.maximum(y, 0.0)
    return y


if __name__ == "__main__":
    # Upsamp_Block(in_chan=4, out_chan=8, relu=True, k_size=3, bias=True, scale_factor=2)
    in_chan, out_chan, k_size = 4, 8, 3
    N, Hin, Win = 2, 16, 16

    key = jax.random.PRNGKey(0)
    kx, kw, kb, kg, kbe = jax.random.split(key, 5)
    x = jax.random.normal(kx, (N, in_chan, Hin, Win), dtype=jnp.float32)
    weight = 0.1 * jax.random.normal(kw, (out_chan, in_chan, k_size, k_size), dtype=jnp.float32)
    bias = 0.1 * jax.random.normal(kb, (out_chan,), dtype=jnp.float32)
    gamma = 1.0 + 0.1 * jax.random.normal(kg, (out_chan,), dtype=jnp.float32)
    beta = 0.1 * jax.random.normal(kbe, (out_chan,), dtype=jnp.float32)

    fwd = jax.jit(functools.partial(upsamp_block_forward,
                                    relu=True, scale_factor=2, eps=1e-5))
    out = jax.block_until_ready(fwd(x, weight, bias, gamma, beta))
    assert out.shape == (N, out_chan, Hin * 2, Win * 2), out.shape

    # Tight check against a reference whose conv inputs are rounded to bf16 exactly like
    # the kernel's MXU operands (f32 accumulation in both) -> only summation-order diffs.
    ref_q = jax.block_until_ready(reference_forward(
        x, weight, bias, gamma, beta, relu=True, scale_factor=2, eps=1e-5,
        quantize_bf16=True))
    np.testing.assert_allclose(np.asarray(out), np.asarray(ref_q), atol=2e-3, rtol=2e-3)

    # Fidelity check against the full-f32 reference with a bf16-input-appropriate tolerance.
    ref = jax.block_until_ready(reference_forward(
        x, weight, bias, gamma, beta, relu=True, scale_factor=2, eps=1e-5))
    np.testing.assert_allclose(np.asarray(out), np.asarray(ref), atol=3e-2, rtol=3e-2)

    print("KERNEL_OK")
</pallas_src>

<mosaic_0001>
module attributes {stable_mosaic.version = 11 : i64} {
  func.func @_stats_kernel(%arg0: i32, %arg1: i32, %arg2: memref<1x1x576x12xbf16, #tpu.memory_space<vmem>>, %arg3: memref<3x12x128xbf16, #tpu.memory_space<vmem>>, %arg4: memref<1x1x2x128xf32, #tpu.memory_space<vmem>>) attributes {dimension_semantics = [#tpu.dimension_semantics<parallel>, #tpu.dimension_semantics<parallel>], iteration_bounds = array<i64: 2, 2>, scalar_prefetch = 0 : i64, scratch_operands = 0 : i64, tpu.core_type = #tpu.core_type<tc>, window_params = [{transform_indices = @transform_0, window_bounds = array<i64: 1, 1, 576, 12>}, {pipeline_mode = #tpu.pipeline_mode<synchronous>, transform_indices = @transform_1, window_bounds = array<i64: 3, 12, 128>}, {transform_indices = @transform_2, window_bounds = array<i64: 1, 1, 2, 128>}]} {
    %c0 = arith.constant 0 : index
    %c0_0 = arith.constant 0 : index
    %c0_1 = arith.constant 0 : index
    %c0_2 = arith.constant 0 : index
    %0 = vector.load %arg2[%c0, %c0_0, %c0_1, %c0_2] : memref<1x1x576x12xbf16, #tpu.memory_space<vmem>>, vector<1x1x512x12xbf16>
    %1 = vector.shape_cast %0 : vector<1x1x512x12xbf16> to vector<512x12xbf16>
    %c0_3 = arith.constant 0 : index
    %c0_4 = arith.constant 0 : index
    %c0_5 = arith.constant 0 : index
    %2 = vector.load %arg3[%c0_3, %c0_4, %c0_5] : memref<3x12x128xbf16, #tpu.memory_space<vmem>>, vector<1x12x128xbf16>
    %3 = vector.shape_cast %2 : vector<1x12x128xbf16> to vector<12x128xbf16>
    %cst = arith.constant dense<0.000000e+00> : vector<512x128xf32>
    %4 = tpu.matmul %1, %3, %cst {dimension_numbers = #tpu.dot_dimension_numbers<[1], [0], [0], [1], [0, 0, 1, 1], [], []>} : vector<512x12xbf16>, vector<12x128xbf16>, vector<512x128xf32> -> vector<512x128xf32>
    %c0_6 = arith.constant 0 : index
    %c0_7 = arith.constant 0 : index
    %c32 = arith.constant 32 : index
    %c0_8 = arith.constant 0 : index
    %5 = vector.load %arg2[%c0_6, %c0_7, %c32, %c0_8] : memref<1x1x576x12xbf16, #tpu.memory_space<vmem>>, vector<1x1x512x12xbf16>
    %6 = vector.shape_cast %5 : vector<1x1x512x12xbf16> to vector<512x12xbf16>
    %c1 = arith.constant 1 : index
    %c0_9 = arith.constant 0 : index
    %c0_10 = arith.constant 0 : index
    %7 = vector.load %arg3[%c1, %c0_9, %c0_10] : memref<3x12x128xbf16, #tpu.memory_space<vmem>>, vector<1x12x128xbf16>
    %8 = vector.shape_cast %7 : vector<1x12x128xbf16> to vector<12x128xbf16>
    %cst_11 = arith.constant dense<0.000000e+00> : vector<512x128xf32>
    %9 = tpu.matmul %6, %8, %cst_11 {dimension_numbers = #tpu.dot_dimension_numbers<[1], [0], [0], [1], [0, 0, 1, 1], [], []>} : vector<512x12xbf16>, vector<12x128xbf16>, vector<512x128xf32> -> vector<512x128xf32>
    %10 = arith.addf %4, %9 : vector<512x128xf32>
    %c0_12 = arith.constant 0 : index
    %c0_13 = arith.constant 0 : index
    %c64 = arith.constant 64 : index
    %c0_14 = arith.constant 0 : index
    %11 = vector.load %arg2[%c0_12, %c0_13, %c64, %c0_14] : memref<1x1x576x12xbf16, #tpu.memory_space<vmem>>, vector<1x1x512x12xbf16>
    %12 = vector.shape_cast %11 : vector<1x1x512x12xbf16> to vector<512x12xbf16>
    %c2 = arith.constant 2 : index
    %c0_15 = arith.constant 0 : index
    %c0_16 = arith.constant 0 : index
    %13 = vector.load %arg3[%c2, %c0_15, %c0_16] : memref<3x12x128xbf16, #tpu.memory_space<vmem>>, vector<1x12x128xbf16>
    %14 = vector.shape_cast %13 : vector<1x12x128xbf16> to vector<12x128xbf16>
    %cst_17 = arith.constant dense<0.000000e+00> : vector<512x128xf32>
    %15 = tpu.matmul %12, %14, %cst_17 {dimension_numbers = #tpu.dot_dimension_numbers<[1], [0], [0], [1], [0, 0, 1, 1], [], []>} : vector<512x12xbf16>, vector<12x128xbf16>, vector<512x128xf32> -> vector<512x128xf32>
    %16 = arith.addf %10, %15 : vector<512x128xf32>
    %cst_18 = arith.constant dense<0.000000e+00> : vector<128xf32>
    %17 = vector.multi_reduction <add>, %16, %cst_18 [0] : vector<512x128xf32> to vector<128xf32>
    %18 = vector.shape_cast %17 : vector<128xf32> to vector<1x128xf32>
    %cst_19 = arith.constant 0.001953125 : f32
    %19 = vector.broadcast %cst_19 : f32 to vector<1x128xf32>
    %20 = arith.mulf %18, %19 : vector<1x128xf32>
    %21 = vector.broadcast %20 : vector<1x128xf32> to vector<512x128xf32>
    %22 = arith.subf %16, %21 : vector<512x128xf32>
    %23 = arith.mulf %22, %22 : vector<512x128xf32>
    %cst_20 = arith.constant dense<0.000000e+00> : vector<128xf32>
    %24 = vector.multi_reduction <add>, %23, %cst_20 [0] : vector<512x128xf32> to vector<128xf32>
    %25 = vector.shape_cast %24 : vector<128xf32> to vector<1x128xf32>
    %26 = tpu.concatenate %18, %25 in 0 : vector<1x128xf32>, vector<1x128xf32> -> vector<2x128xf32>
    %c0_21 = arith.constant 0 : index
    %c0_22 = arith.constant 0 : index
    %c0_23 = arith.constant 0 : index
    %c0_24 = arith.constant 0 : index
    %27 = vector.load %arg4[%c0_21, %c0_22, %c0_23, %c0_24] : memref<1x1x2x128xf32, #tpu.memory_space<vmem>>, vector<1x1x2x128xf32>
    %28 = vector.shape_cast %27 : vector<1x1x2x128xf32> to vector<2x128xf32>
    %29 = vector.shape_cast %26 : vector<2x128xf32> to vector<1x1x2x128xf32>
    tpu.vector_store %arg4[%c0_21, %c0_22, %c0_23, %c0_24], %29 {strides = array<i32>} : memref<1x1x2x128xf32, #tpu.memory_space<vmem>>, vector<1x1x2x128xf32>,
    return
  }
  func.func @transform_0(%arg0: i32, %arg1: i32) -> (i32, i32, i32, i32) {
    %c0_i32 = arith.constant 0 : i32
    %c0_i32_0 = arith.constant 0 : i32
    %c0_i32_1 = arith.constant 0 : i32
    return %arg0, %arg1, %c0_i32, %c0_i32_0 : i32, i32, i32, i32
  }
  func.func @transform_1(%arg0: i32, %arg1: i32) -> (i32, i32, i32) {
    %c0_i32 = arith.constant 0 : i32
    %c0_i32_0 = arith.constant 0 : i32
    %c0_i32_1 = arith.constant 0 : i32
    %c0_i32_2 = arith.constant 0 : i32
    return %c0_i32, %c0_i32_0, %c0_i32_1 : i32, i32, i32
  }
  func.func @transform_2(%arg0: i32, %arg1: i32) -> (i32, i32, i32, i32) {
    %c0_i32 = arith.constant 0 : i32
    %c0_i32_0 = arith.constant 0 : i32
    %c0_i32_1 = arith.constant 0 : i32
    return %arg0, %arg1, %c0_i32, %c0_i32_0 : i32, i32, i32, i32
  }
}

module attributes {stable_mosaic.version = 11 : i64} {
  func.func @_norm_kernel(%arg0: i32, %arg1: i32, %arg2: memref<1x1x576x12xbf16, #tpu.memory_space<vmem>>, %arg3: memref<3x12x128xbf16, #tpu.memory_space<vmem>>, %arg4: memref<1x128xf32, #tpu.memory_space<vmem>>, %arg5: memref<1x128xf32, #tpu.memory_space<vmem>>, %arg6: memref<512x128xf32, #tpu.memory_space<vmem>>) attributes {dimension_semantics = [#tpu.dimension_semantics<parallel>, #tpu.dimension_semantics<parallel>], iteration_bounds = array<i64: 2, 2>, scalar_prefetch = 0 : i64, scratch_operands = 0 : i64, tpu.core_type = #tpu.core_type<tc>, window_params = [{transform_indices = @transform_0, window_bounds = array<i64: 1, 1, 576, 12>}, {pipeline_mode = #tpu.pipeline_mode<synchronous>, transform_indices = @transform_1, window_bounds = array<i64: 3, 12, 128>}, {pipeline_mode = #tpu.pipeline_mode<synchronous>, transform_indices = @transform_2, window_bounds = array<i64: 1, 128>}, {pipeline_mode = #tpu.pipeline_mode<synchronous>, transform_indices = @transform_3, window_bounds = array<i64: 1, 128>}, {transform_indices = @transform_4, window_bounds = array<i64: 512, 128>}]} {
    %c0 = arith.constant 0 : index
    %c0_0 = arith.constant 0 : index
    %c0_1 = arith.constant 0 : index
    %c0_2 = arith.constant 0 : index
    %0 = vector.load %arg2[%c0, %c0_0, %c0_1, %c0_2] : memref<1x1x576x12xbf16, #tpu.memory_space<vmem>>, vector<1x1x512x12xbf16>
    %1 = vector.shape_cast %0 : vector<1x1x512x12xbf16> to vector<512x12xbf16>
    %c0_3 = arith.constant 0 : index
    %c0_4 = arith.constant 0 : index
    %c0_5 = arith.constant 0 : index
    %2 = vector.load %arg3[%c0_3, %c0_4, %c0_5] : memref<3x12x128xbf16, #tpu.memory_space<vmem>>, vector<1x12x128xbf16>
    %3 = vector.shape_cast %2 : vector<1x12x128xbf16> to vector<12x128xbf16>
    %cst = arith.constant dense<0.000000e+00> : vector<512x128xf32>
    %4 = tpu.matmul %1, %3, %cst {dimension_numbers = #tpu.dot_dimension_numbers<[1], [0], [0], [1], [0, 0, 1, 1], [], []>} : vector<512x12xbf16>, vector<12x128xbf16>, vector<512x128xf32> -> vector<512x128xf32>
    %c0_6 = arith.constant 0 : index
    %c0_7 = arith.constant 0 : index
    %c32 = arith.constant 32 : index
    %c0_8 = arith.constant 0 : index
    %5 = vector.load %arg2[%c0_6, %c0_7, %c32, %c0_8] : memref<1x1x576x12xbf16, #tpu.memory_space<vmem>>, vector<1x1x512x12xbf16>
    %6 = vector.shape_cast %5 : vector<1x1x512x12xbf16> to vector<512x12xbf16>
    %c1 = arith.constant 1 : index
    %c0_9 = arith.constant 0 : index
    %c0_10 = arith.constant 0 : index
    %7 = vector.load %arg3[%c1, %c0_9, %c0_10] : memref<3x12x128xbf16, #tpu.memory_space<vmem>>, vector<1x12x128xbf16>
    %8 = vector.shape_cast %7 : vector<1x12x128xbf16> to vector<12x128xbf16>
    %cst_11 = arith.constant dense<0.000000e+00> : vector<512x128xf32>
    %9 = tpu.matmul %6, %8, %cst_11 {dimension_numbers = #tpu.dot_dimension_numbers<[1], [0], [0], [1], [0, 0, 1, 1], [], []>} : vector<512x12xbf16>, vector<12x128xbf16>, vector<512x128xf32> -> vector<512x128xf32>
    %10 = arith.addf %4, %9 : vector<512x128xf32>
    %c0_12 = arith.constant 0 : index
    %c0_13 = arith.constant 0 : index
    %c64 = arith.constant 64 : index
    %c0_14 = arith.constant 0 : index
    %11 = vector.load %arg2[%c0_12, %c0_13, %c64, %c0_14] : memref<1x1x576x12xbf16, #tpu.memory_space<vmem>>, vector<1x1x512x12xbf16>
    %12 = vector.shape_cast %11 : vector<1x1x512x12xbf16> to vector<512x12xbf16>
    %c2 = arith.constant 2 : index
    %c0_15 = arith.constant 0 : index
    %c0_16 = arith.constant 0 : index
    %13 = vector.load %arg3[%c2, %c0_15, %c0_16] : memref<3x12x128xbf16, #tpu.memory_space<vmem>>, vector<1x12x128xbf16>
    %14 = vector.shape_cast %13 : vector<1x12x128xbf16> to vector<12x128xbf16>
    %cst_17 = arith.constant dense<0.000000e+00> : vector<512x128xf32>
    %15 = tpu.matmul %12, %14, %cst_17 {dimension_numbers = #tpu.dot_dimension_numbers<[1], [0], [0], [1], [0, 0, 1, 1], [], []>} : vector<512x12xbf16>, vector<12x128xbf16>, vector<512x128xf32> -> vector<512x128xf32>
    %16 = arith.addf %10, %15 : vector<512x128xf32>
    %c0_18 = arith.constant 0 : index
    %c0_19 = arith.constant 0 : index
    %17 = vector.load %arg4[%c0_18, %c0_19] : memref<1x128xf32, #tpu.memory_space<vmem>>, vector<1x128xf32>
    %18 = vector.broadcast %17 : vector<1x128xf32> to vector<512x128xf32>
    %19 = arith.mulf %16, %18 : vector<512x128xf32>
    %c0_20 = arith.constant 0 : index
    %c0_21 = arith.constant 0 : index
    %20 = vector.load %arg5[%c0_20, %c0_21] : memref<1x128xf32, #tpu.memory_space<vmem>>, vector<1x128xf32>
    %21 = vector.broadcast %20 : vector<1x128xf32> to vector<512x128xf32>
    %22 = arith.addf %19, %21 : vector<512x128xf32>
    %cst_22 = arith.constant 0.000000e+00 : f32
    %23 = vector.broadcast %cst_22 : f32 to vector<512x128xf32>
    %24 = arith.maximumf %22, %23 : vector<512x128xf32>
    %c0_23 = arith.constant 0 : index
    %c0_24 = arith.constant 0 : index
    %25 = vector.load %arg6[%c0_23, %c0_24] : memref<512x128xf32, #tpu.memory_space<vmem>>, vector<512x128xf32>
    tpu.vector_store %arg6[%c0_23, %c0_24], %24 {strides = array<i32>} : memref<512x128xf32, #tpu.memory_space<vmem>>, vector<512x128xf32>,
    return
  }
  func.func @transform_0(%arg0: i32, %arg1: i32) -> (i32, i32, i32, i32) {
    %c0_i32 = arith.constant 0 : i32
    %c0_i32_0 = arith.constant 0 : i32
    %c0_i32_1 = arith.constant 0 : i32
    return %arg0, %arg1, %c0_i32, %c0_i32_0 : i32, i32, i32, i32
  }
  func.func @transform_1(%arg0: i32, %arg1: i32) -> (i32, i32, i32) {
    %c0_i32 = arith.constant 0 : i32
    %c0_i32_0 = arith.constant 0 : i32
    %c0_i32_1 = arith.constant 0 : i32
    %c0_i32_2 = arith.constant 0 : i32
    return %c0_i32, %c0_i32_0, %c0_i32_1 : i32, i32, i32
  }
  func.func @transform_2(%arg0: i32, %arg1: i32) -> (i32, i32) {
    %c0_i32 = arith.constant 0 : i32
    %c0_i32_0 = arith.constant 0 : i32
    %c0_i32_1 = arith.constant 0 : i32
    return %c0_i32, %c0_i32_0 : i32, i32
  }
  func.func @transform_3(%arg0: i32, %arg1: i32) -> (i32, i32) {
    %c0_i32 = arith.constant 0 : i32
    %c0_i32_0 = arith.constant 0 : i32
    %c0_i32_1 = arith.constant 0 : i32
    return %c0_i32, %c0_i32_0 : i32, i32
  }
  func.func @transform_4(%arg0: i32, %arg1: i32) -> (i32, i32) {
    %c2_i32 = arith.constant 2 : i32
    %0 = arith.muli %arg0, %c2_i32 : i32
    %1 = arith.addi %0, %arg1 : i32
    %c0_i32 = arith.constant 0 : i32
    %c0_i32_0 = arith.constant 0 : i32
    return %1, %c0_i32 : i32, i32
  }
}

</mosaic_0001>

<llo_original>
// kernel: upsamp_block_forward.2
$region0: #{upsamp_block_forward.2}
  #allocation0 [shape = 'u32[]', space=smem, size = 0x4, offset = 0x4, fixed_abs, tag = 'smem constant byte address 0x4 - core index']
  #allocation1 [shape = 'u32[144,128]{1,0:T(1,128)}', space=vmem, size = 0x12000, scoped, tag = 'internal scratch']
  %s0 = inlined_call_operand.vmem [shape: bf16[2,2,576,12], index: 0, kind: input, shape index: {}]
  %s1 = inlined_call_operand.vmem [shape: bf16[3,12,128], index: 1, kind: input, shape index: {}]
  %s2 = inlined_call_operand.vmem [shape: f32[2,2,2,128], index: 2, kind: output, shape index: {}]
  %s3 = sld [smem:[#allocation0]]
  $region41: #{upsamp_block_forward.2} parent=0
    _
  %s5 = ssub.s32 1, %s3
  %s6 = scalar_select 0, %s5, %s3
  loop: start=0, step=1, limit=6
  $region2: #{upsamp_block_forward.2} parent=0 // loop_pre_header
    _
  $region3: #{upsamp_block_forward.2} parent=0 // loop_header
    %s8 = sphi 0, %s12
    %p9 = scmp.ge.s32.totalorder %s8, 6
    %s15 = sphi 0, %s27
    %s16 = sphi 0, %s23
    %s17 = sphi 0, %s15
    %s18 = sphi 0, %s16
    %s19 = sphi 0, %s17
    %s20 = sphi 0, %s18
    %s32 = sphi 0, %s34
    %s35 = sphi 0, %s32
    %s36 = sphi 0, %s35
    %s52 = sphi 0, %s36
    %s56 = sphi 0, %s56
    %s58 = sphi 0, %s56
    %s59 = sphi 0, %s58
    %s73 = sphi 0, %s59
    %s81 = sphi 0, %s83
    %s84 = sphi 0, %s81
    %s85 = sphi 0, %s84
    %s101 = sphi 0, %s85
  $region4: #{upsamp_block_forward.2} parent=0 // loop_header_branch
    %11 = sbr.rel (%p9) target = $region8
  $region5: #{upsamp_block_forward.2} parent=0 // loop_body
    %s13 = ssub.s32 %s8, 1
    %s14 = ssub.s32 %s8, 2
    %s21 = sadd.s32 1, %s16
    %p22 = scmp.ge.s32.totalorder %s21, 2
    %s23 = scalar_select %p22, 0, %s21
    %s24 = sadd.s32 1, %s15
    %s25 = scalar_select %p22, %s24, %s15
    %p26 = scmp.ge.s32.totalorder %s25, 2
    %s27 = scalar_select %p26, 0, %s25
    %s28 = ssub.s32 %s15, %s27
    %s29 = ssub.s32 %s16, %s23
    %s30 = sor.u32 %s28, %s29
    %p31 = scmp.eq.s32.totalorder %s30, 0
    %s33 = sadd.s32 %s32, 1
    %s34 = scalar_select %p31, %s32, %s33
    %p37 = pneg %p31
    %p38 = scmp.eq.s32.totalorder %s8, 3
    %p39 = por %p37, %p38
    %p40 = scmp.ne.s32.totalorder %s32, %s35
    %p41 = scmp.eq.s32.totalorder %s8, 0
    %p42 = por %p40, %p41
    %p43 = scmp.ne.s32.totalorder %s32, %s35
    %p44 = scmp.eq.s32.totalorder %s13, 3
    %p45 = por %p43, %p44
    %p46 = scmp.ne.s32.totalorder %s35, %s36
    %p47 = scmp.eq.s32.totalorder %s13, 0
    %p48 = por %p46, %p47
    %p49 = scmp.ne.s32.totalorder %s35, %s36
    %p50 = scmp.eq.s32.totalorder %s14, 3
    %p51 = por %p49, %p50
    %p53 = scmp.ne.s32.totalorder %s36, %s52
    %p54 = scmp.eq.s32.totalorder %s14, 0
    %p55 = por %p53, %p54
    %s57 = sadd.s32 %s56, 1
    %p60 = scmp.eq.s32.totalorder %s8, 3
    %p61 = scmp.ne.s32.totalorder %s56, %s58
    %p62 = scmp.eq.s32.totalorder %s8, 0
    %p63 = por %p61, %p62
    %p64 = scmp.ne.s32.totalorder %s56, %s58
    %p65 = scmp.eq.s32.totalorder %s13, 3
    %p66 = por %p64, %p65
    %p67 = scmp.ne.s32.totalorder %s58, %s59
    %p68 = scmp.eq.s32.totalorder %s13, 0
    %p69 = por %p67, %p68
    %p70 = scmp.ne.s32.totalorder %s58, %s59
    %p71 = scmp.eq.s32.totalorder %s14, 3
    %p72 = por %p70, %p71
    %p74 = scmp.ne.s32.totalorder %s59, %s73
    %p75 = scmp.eq.s32.totalorder %s14, 0
    %p76 = por %p74, %p75
    %s77 = ssub.s32 %s15, %s27
    %s78 = ssub.s32 %s16, %s23
    %s79 = sor.u32 %s77, %s78
    %p80 = scmp.eq.s32.totalorder %s79, 0
    %s82 = sadd.s32 %s81, 1
    %s83 = scalar_select %p80, %s81, %s82
    %p86 = pneg %p80
    %p87 = scmp.eq.s32.totalorder %s8, 3
    %p88 = por %p86, %p87
    %p89 = scmp.ne.s32.totalorder %s81, %s84
    %p90 = scmp.eq.s32.totalorder %s8, 0
    %p91 = por %p89, %p90
    %p92 = scmp.ne.s32.totalorder %s81, %s84
    %p93 = scmp.eq.s32.totalorder %s13, 3
    %p94 = por %p92, %p93
    %p95 = scmp.ne.s32.totalorder %s84, %s85
    %p96 = scmp.eq.s32.totalorder %s13, 0
    %p97 = por %p95, %p96
    %p98 = scmp.ne.s32.totalorder %s84, %s85
    %p99 = scmp.eq.s32.totalorder %s14, 3
    %p100 = por %p98, %p99
    %p102 = scmp.ne.s32.totalorder %s85, %s101
    %p103 = scmp.eq.s32.totalorder %s14, 0
    %p104 = por %p102, %p103
    %p105 = scmp.le.s32.totalorder 1, %s8
    %p106 = scmp.lt.s32.totalorder %s8, 5
    %p107 = pnand %p105, %p106
    %p108 = pneg %p107
    // Predicated region
    $region9: #{upsamp_block_forward.2} parent=5 // pred_check
      _
    $region10: #{upsamp_block_forward.2} parent=5 // pred_check_branch
      %110 = sbr.rel (%p107) target = $region12
    $region11: #{upsamp_block_forward.2} parent=5 // pred_region
      %s111 = ssub.s32 %s8, 1
      // Predicated region
      $region13: #{upsamp_block_forward.2} parent=11 // pred_check
        %p112 = pneg %p69
      $region14: #{upsamp_block_forward.2} parent=11 // pred_check_branch
        %114 = sbr.rel (%p112) target = $region16
      $region15: #{upsamp_block_forward.2} parent=11 // pred_region
        _
      $region16: #{upsamp_block_forward.2} parent=11 // pred_fallthru
        _
    $region12: #{upsamp_block_forward.2} parent=5 // pred_fallthru
      _
    %p115 = scmp.lt.s32.totalorder %s8, 4
    // Predicated region
    $region17: #{upsamp_block_forward.2} parent=5 // pred_check
      %p116 = pneg %p115
    $region18: #{upsamp_block_forward.2} parent=5 // pred_check_branch
      %118 = sbr.rel (%p116) target = $region20
    $region19: #{upsamp_block_forward.2} parent=5 // pred_region
      // Predicated region
      $region21: #{upsamp_block_forward.2} parent=19 // pred_check
        %p119 = pneg %p42
      $region22: #{upsamp_block_forward.2} parent=19 // pred_check_branch
        %121 = sbr.rel (%p119) target = $region24
      $region23: #{upsamp_block_forward.2} parent=19 // pred_region
        %p122 = scmp.lt.s32.totalorder %s15, 1
        %s123 = scalar_select %p122, %s15, 1
        %p124 = scmp.lt.s32.totalorder %s16, 1
        %s125 = scalar_select %p124, %s16, 1
        %s126 = smul.addr %s125, 72
        %s127 = smul.addr %s123, 144
        %s128 = sadd.s32 %s126, %s127
        %s129 = smul.addr %s128, 4
        %s130 = scalar_lea.vmem %s0, %s129
      $region24: #{upsamp_block_forward.2} parent=19 // pred_fallthru
        _
    $region20: #{upsamp_block_forward.2} parent=5 // pred_fallthru
      _
    %p131 = scmp.le.s32.totalorder 1, %s8
    %p132 = scmp.lt.s32.totalorder %s8, 5
    %p133 = pnand %p131, %p132
    %p134 = pneg %p133
    // Predicated region
    $region25: #{upsamp_block_forward.2} parent=5 // pred_check
      _
    $region26: #{upsamp_block_forward.2} parent=5 // pred_check_branch
      %136 = sbr.rel (%p133) target = $region28
    $region27: #{upsamp_block_forward.2} parent=5 // pred_region
      %s137 = ssub.s32 %s8, 1
      %p138 = scmp.lt.s32.totalorder %s17, 1
      %s139 = scalar_select %p138, %s17, 1
      %p140 = scmp.lt.s32.totalorder %s18, 1
      %s141 = scalar_select %p140, %s18, 1
      %s142 = smul.addr %s141, 72
      %s143 = smul.addr %s139, 144
      %s144 = sadd.s32 %s142, %s143
      %s145 = smul.addr %s144, 4
      %s146 = scalar_lea.vmem %s0, %s145
      %p147 = pneg %p48
      %p148 = pneg %p45
      %p149 = pneg %p69
      %p150 = pneg %p66
      %p151 = pneg %p97
      %p152 = pneg %p94
      %p153 = scmp.lt.s32.totalorder %s17, 1
      %s154 = scalar_select %p153, %s17, 1
      %p155 = scmp.lt.s32.totalorder %s18, 1
      %s156 = scalar_select %p155, %s18, 1
      %s157 = smul.addr %s154, 2
      %s158 = sadd.s32 %s156, %s157
      %s159 = smul.addr %s158, 2
      %s160 = scalar_lea.vmem %s2, %s159
      %p161 = scmp.lt.s32.totalorder %s17, 1
      %s162 = scalar_select %p161, %s17, 1
      %p163 = scmp.lt.s32.totalorder %s18, 1
      %s164 = scalar_select %p163, %s18, 1
      %s165 = smul.addr %s164, 72
      %s166 = smul.addr %s162, 144
      %s167 = sadd.s32 %s165, %s166
      %s168 = smul.addr %s167, 4
      %s169 = scalar_lea.vmem %s0, %s168
      %p170 = scmp.lt.s32.totalorder %s17, 1
      %s171 = scalar_select %p170, %s17, 1
      %p172 = scmp.lt.s32.totalorder %s18, 1
      %s173 = scalar_select %p172, %s18, 1
      %s174 = smul.addr %s171, 2
      %s175 = sadd.s32 %s173, %s174
      %s176 = smul.addr %s175, 2
      %s177 = scalar_lea.vmem %s2, %s176
      %v179 = vld [vmem:[%s169] sm:$0xf]
      %v180 = vld [vmem:[%s169 + $0x4] sm:$0xf]
      %v181 = vld [vmem:[%s169 + $0x8] sm:$0xf]
      %v182 = vld [vmem:[%s169 + $0xc] sm:$0xf]
      %v183 = vld [vmem:[%s169 + $0x10] sm:$0xf]
      %v184 = vld [vmem:[%s169 + $0x14] sm:$0xf]
      %v185 = vld [vmem:[%s169 + $0x18] sm:$0xf]
      %v186 = vld [vmem:[%s169 + $0x1c] sm:$0xf]
      %v187 = vld [vmem:[%s169 + $0x20] sm:$0xf]
      %v188 = vld [vmem:[%s169 + $0x24] sm:$0xf]
      %v189 = vld [vmem:[%s169 + $0x28] sm:$0xf]
      %v190 = vld [vmem:[%s169 + $0x2c] sm:$0xf]
      %v191 = vld [vmem:[%s169 + $0x30] sm:$0xf]
      %v192 = vld [vmem:[%s169 + $0x34] sm:$0xf]
      %v193 = vld [vmem:[%s169 + $0x38] sm:$0xf]
      %v194 = vld [vmem:[%s169 + $0x3c] sm:$0xf]
      %v195 = vld [vmem:[%s169 + $0x40] sm:$0xf]
      %v196 = vld [vmem:[%s169 + $0x44] sm:$0xf]
      %v197 = vld [vmem:[%s169 + $0x48] sm:$0xf]
      %v198 = vld [vmem:[%s169 + $0x4c] sm:$0xf]
      %v199 = vld [vmem:[%s169 + $0x50] sm:$0xf]
      %v200 = vld [vmem:[%s169 + $0x54] sm:$0xf]
      %v201 = vld [vmem:[%s169 + $0x58] sm:$0xf]
      %v202 = vld [vmem:[%s169 + $0x5c] sm:$0xf]
      %v203 = vld [vmem:[%s169 + $0x60] sm:$0xf]
      %v204 = vld [vmem:[%s169 + $0x64] sm:$0xf]
      %v205 = vld [vmem:[%s169 + $0x68] sm:$0xf]
      %v206 = vld [vmem:[%s169 + $0x6c] sm:$0xf]
      %v207 = vld [vmem:[%s169 + $0x70] sm:$0xf]
      %v208 = vld [vmem:[%s169 + $0x74] sm:$0xf]
      %v209 = vld [vmem:[%s169 + $0x78] sm:$0xf]
      %v210 = vld [vmem:[%s169 + $0x7c] sm:$0xf]
      %v211 = vld [vmem:[%s169 + $0x80] sm:$0xf]
      %v212 = vld [vmem:[%s169 + $0x84] sm:$0xf]
      %v213 = vld [vmem:[%s169 + $0x88] sm:$0xf]
      %v214 = vld [vmem:[%s169 + $0x8c] sm:$0xf]
      %v215 = vld [vmem:[%s169 + $0x90] sm:$0xf]
      %v216 = vld [vmem:[%s169 + $0x94] sm:$0xf]
      %v217 = vld [vmem:[%s169 + $0x98] sm:$0xf]
      %v218 = vld [vmem:[%s169 + $0x9c] sm:$0xf]
      %v219 = vld [vmem:[%s169 + $0xa0] sm:$0xf]
      %v220 = vld [vmem:[%s169 + $0xa4] sm:$0xf]
      %v221 = vld [vmem:[%s169 + $0xa8] sm:$0xf]
      %v222 = vld [vmem:[%s169 + $0xac] sm:$0xf]
      %v223 = vld [vmem:[%s169 + $0xb0] sm:$0xf]
      %v224 = vld [vmem:[%s169 + $0xb4] sm:$0xf]
      %v225 = vld [vmem:[%s169 + $0xb8] sm:$0xf]
      %v226 = vld [vmem:[%s169 + $0xbc] sm:$0xf]
      %v227 = vld [vmem:[%s169 + $0xc0] sm:$0xf]
      %v228 = vld [vmem:[%s169 + $0xc4] sm:$0xf]
      %v229 = vld [vmem:[%s169 + $0xc8] sm:$0xf]
      %v230 = vld [vmem:[%s169 + $0xcc] sm:$0xf]
      %v231 = vld [vmem:[%s169 + $0xd0] sm:$0xf]
      %v232 = vld [vmem:[%s169 + $0xd4] sm:$0xf]
      %v233 = vld [vmem:[%s169 + $0xd8] sm:$0xf]
      %v234 = vld [vmem:[%s169 + $0xdc] sm:$0xf]
      %v235 = vld [vmem:[%s169 + $0xe0] sm:$0xf]
      %v236 = vld [vmem:[%s169 + $0xe4] sm:$0xf]
      %v237 = vld [vmem:[%s169 + $0xe8] sm:$0xf]
      %v238 = vld [vmem:[%s169 + $0xec] sm:$0xf]
      %v239 = vld [vmem:[%s169 + $0xf0] sm:$0xf]
      %v240 = vld [vmem:[%s169 + $0xf4] sm:$0xf]
      %v241 = vld [vmem:[%s169 + $0xf8] sm:$0xf]
      %v242 = vld [vmem:[%s169 + $0xfc] sm:$0xf]
      %v243 = vld [vmem:[%s1] sm:$0xf]
      %v244 = vld [vmem:[%s1 + $0x4] sm:$0x3]
      %v245 = vld [vmem:[%s169 + $0x100] sm:$0xf]
      %v246 = vld [vmem:[%s169 + $0x104] sm:$0xf]
      %v247 = vld [vmem:[%s169 + $0x108] sm:$0xf]
      %v248 = vld [vmem:[%s169 + $0x10c] sm:$0xf]
      %s249 = scalar_lea.vmem %s1, 8
      %v250 = vld [vmem:[%s249] sm:$0xf]
      %v251 = vld [vmem:[%s249 + $0x4] sm:$0x3]
      %v316 = vunpack.c.l.b16 %v183
      %v317 = vunpack.c.l.b16 %v184
      %v318 = vunpack.c.l.b16 %v185
      %v319 = vunpack.c.l.b16 %v186
      %v320 = vunpack.c.l.b16 %v187
      %v321 = vunpack.c.l.b16 %v188
      %v322 = vunpack.c.l.b16 %v189
      %v323 = vunpack.c.l.b16 %v190
      %v324 = vunpack.c.l.b16 %v191
      %v325 = vunpack.c.l.b16 %v192
      %v326 = vunpack.c.l.b16 %v193
      %v327 = vunpack.c.l.b16 %v194
      %v328 = vunpack.c.l.b16 %v195
      %v329 = vunpack.c.l.b16 %v196
      %v330 = vunpack.c.l.b16 %v197
      %v331 = vunpack.c.l.b16 %v198
      %v332 = vunpack.c.l.b16 %v199
      %v333 = vunpack.c.l.b16 %v200
      %v334 = vunpack.c.l.b16 %v201
      %v335 = vunpack.c.l.b16 %v202
      %v336 = vunpack.c.l.b16 %v203
      %v337 = vunpack.c.l.b16 %v204
      %v338 = vunpack.c.l.b16 %v205
      %v339 = vunpack.c.l.b16 %v206
      %v340 = vunpack.c.l.b16 %v207
      %v341 = vunpack.c.l.b16 %v208
      %v342 = vunpack.c.l.b16 %v209
      %v343 = vunpack.c.l.b16 %v210
      %v344 = vunpack.c.l.b16 %v211
      %v345 = vunpack.c.l.b16 %v212
      %v346 = vunpack.c.l.b16 %v213
      %v347 = vunpack.c.l.b16 %v214
      %v348 = vunpack.c.l.b16 %v215
      %v349 = vunpack.c.l.b16 %v216
      %v350 = vunpack.c.l.b16 %v217
      %v351 = vunpack.c.l.b16 %v218
      %v352 = vunpack.c.l.b16 %v219
      %v353 = vunpack.c.l.b16 %v220
      %v354 = vunpack.c.l.b16 %v221
      %v355 = vunpack.c.l.b16 %v222
      %v356 = vunpack.c.l.b16 %v223
      %v357 = vunpack.c.l.b16 %v224
      %v358 = vunpack.c.l.b16 %v225
      %v359 = vunpack.c.l.b16 %v226
      %v360 = vunpack.c.l.b16 %v227
      %v361 = vunpack.c.l.b16 %v228
      %v362 = vunpack.c.l.b16 %v229
      %v363 = vunpack.c.l.b16 %v230
      %v364 = vunpack.c.l.b16 %v231
      %v365 = vunpack.c.l.b16 %v232
      %v366 = vunpack.c.l.b16 %v233
      %v367 = vunpack.c.l.b16 %v234
      %v368 = vunpack.c.l.b16 %v235
      %v369 = vunpack.c.l.b16 %v236
      %v370 = vunpack.c.l.b16 %v237
      %v371 = vunpack.c.l.b16 %v238
      %v372 = vunpack.c.l.b16 %v239
      %v373 = vunpack.c.l.b16 %v240
      %v374 = vunpack.c.l.b16 %v241
      %v375 = vunpack.c.l.b16 %v242
      %v376 = vunpack.c.l.b16 %v245
      %v377 = vunpack.c.l.b16 %v246
      %v378 = vunpack.c.l.b16 %v247
      %v379 = vunpack.c.l.b16 %v248
      %v380 = vpack.c.b16 %v317, %v316
      %v381 = vpack.c.b16 %v319, %v318
      %v382 = vpack.c.b16 %v321, %v320
      %v383 = vpack.c.b16 %v323, %v322
      %v384 = vpack.c.b16 %v325, %v324
      %v385 = vpack.c.b16 %v327, %v326
      %v386 = vpack.c.b16 %v329, %v328
      %v387 = vpack.c.b16 %v331, %v330
      %v388 = vpack.c.b16 %v333, %v332
      %v389 = vpack.c.b16 %v335, %v334
      %v390 = vpack.c.b16 %v337, %v336
      %v391 = vpack.c.b16 %v339, %v338
      %v392 = vpack.c.b16 %v341, %v340
      %v393 = vpack.c.b16 %v343, %v342
      %v394 = vpack.c.b16 %v345, %v344
      %v395 = vpack.c.b16 %v347, %v346
      %v396 = vpack.c.b16 %v349, %v348
      %v397 = vpack.c.b16 %v351, %v350
      %v398 = vpack.c.b16 %v353, %v352
      %v399 = vpack.c.b16 %v355, %v354
      %v400 = vpack.c.b16 %v357, %v356
      %v401 = vpack.c.b16 %v359, %v358
      %v402 = vpack.c.b16 %v361, %v360
      %v403 = vpack.c.b16 %v363, %v362
      %v404 = vpack.c.b16 %v365, %v364
      %v405 = vpack.c.b16 %v367, %v366
      %v406 = vpack.c.b16 %v369, %v368
      %v407 = vpack.c.b16 %v371, %v370
      %v408 = vpack.c.b16 %v373, %v372
      %v409 = vpack.c.b16 %v375, %v374
      %v410 = vpack.c.b16 %v377, %v376
      %v411 = vpack.c.b16 %v379, %v378
      %v414 = vunpack.c.l.b16 %v250
      %v415 = vunpack.c.l.b16 %v251
      %v416 = vpack.c.b16 %v415, %v414
      %vm417 = vcmask 97280
      %v419 = vsel %vm417, %v380, 0
      %v422 = vsel %vm417, %v381, 0
      %v425 = vsel %vm417, %v382, 0
      %v428 = vsel %vm417, %v383, 0
      %v431 = vsel %vm417, %v384, 0
      %v434 = vsel %vm417, %v385, 0
      %v437 = vsel %vm417, %v386, 0
      %v440 = vsel %vm417, %v387, 0
      %v443 = vsel %vm417, %v388, 0
      %v446 = vsel %vm417, %v389, 0
      %v449 = vsel %vm417, %v390, 0
      %v452 = vsel %vm417, %v391, 0
      %v455 = vsel %vm417, %v392, 0
      %v458 = vsel %vm417, %v393, 0
      %v461 = vsel %vm417, %v394, 0
      %v464 = vsel %vm417, %v395, 0
      %v467 = vsel %vm417, %v396, 0
      %v470 = vsel %vm417, %v397, 0
      %v473 = vsel %vm417, %v398, 0
      %v476 = vsel %vm417, %v399, 0
      %v479 = vsel %vm417, %v400, 0
      %v482 = vsel %vm417, %v401, 0
      %v485 = vsel %vm417, %v402, 0
      %v488 = vsel %vm417, %v403, 0
      %v491 = vsel %vm417, %v404, 0
      %v494 = vsel %vm417, %v405, 0
      %v497 = vsel %vm417, %v406, 0
      %v500 = vsel %vm417, %v407, 0
      %v503 = vsel %vm417, %v408, 0
      %v506 = vsel %vm417, %v409, 0
      %v509 = vsel %vm417, %v410, 0
      %v512 = vsel %vm417, %v411, 0
      %vm514 = vcmask 1045504
      %v516 = vsel %vm514, %v416, 0
      %518 = vmatprep.subr.bf16.mxu0 0
      %519 = vmatpush1.bf16.msra.mxu0 %v516
      %520 = vmatprep.subr.bf16.mxu0 0
      %521 = vmatpush1.bf16.msra.mxu0 0
      %522 = vmatprep.subr.bf16.mxu0 0
      %523 = vmatpush1.bf16.msra.mxu0 0
      %524 = vmatprep.subr.bf16.mxu0 0
      %525 = vmatpush1.bf16.msra.mxu0 0
      %526 = vmatprep.subr.bf16.mxu0 0
      %527 = vmatpush1.bf16.msra.mxu0 0
      %528 = vmatprep.subr.bf16.mxu0 0
      %529 = vmatpush1.bf16.msra.mxu0 0
      %530 = vmatprep.subr.bf16.mxu0 0
      %531 = vmatpush1.bf16.msra.mxu0 0
      %532 = vmatprep.subr.bf16.mxu0 0
      %533 = vmatpush1.bf16.msra.mxu0 0
      %534 = vmatprep.subr.bf16.mxu0 0
      %535 = vmatpush1.bf16.msra.mxu0 0
      %536 = vmatprep.subr.bf16.mxu0 0
      %537 = vmatpush1.bf16.msra.mxu0 0
      %538 = vmatprep.subr.bf16.mxu0 0
      %539 = vmatpush1.bf16.msra.mxu0 0
      %540 = vmatprep.subr.bf16.mxu0 0
      %541 = vmatpush1.bf16.msra.mxu0 0
      %542 = vmatprep.subr.bf16.mxu0 0
      %543 = vmatpush1.bf16.msra.mxu0 0
      %544 = vmatprep.subr.bf16.mxu0 0
      %545 = vmatpush1.bf16.msra.mxu0 0
      %546 = vmatprep.subr.bf16.mxu0 0
      %547 = vmatpush1.bf16.msra.mxu0 0
      %548 = vmatprep.subr.bf16.mxu0 0
      %549 = vmatpush1.bf16.msra.mxu0 0
      %550 = vmatprep.mubr.bf16.mxu0 0
      %551 = vmatmul.mubr.bf16.gmra.mrb[0].mxu0 %v419
      %v552 = vpop.f32.mrb[0].mxu0
      %v553 = vadd.f32 0.0, %v552
      %v554 = vpop.f32.mrb[0].mxu0
      %v555 = vpop.f32.mrb[0].mxu0
      %v556 = vadd.f32 0.0, %v555
      %v557 = vpop.f32.mrb[0].mxu0
      %558 = vmatprep.mubr.bf16.mxu0 0
      %559 = vmatmul.mubr.bf16.gmra.mrb[0].mxu0 %v422
      %v560 = vpop.f32.mrb[0].mxu0
      %v561 = vadd.f32 0.0, %v560
      %v562 = vpop.f32.mrb[0].mxu0
      %v563 = vpop.f32.mrb[0].mxu0
      %v564 = vadd.f32 0.0, %v563
      %v565 = vpop.f32.mrb[0].mxu0
      %566 = vmatprep.mubr.bf16.mxu0 0
      %567 = vmatmul.mubr.bf16.gmra.mrb[0].mxu0 %v425
      %v568 = vpop.f32.mrb[0].mxu0
      %v569 = vadd.f32 0.0, %v568
      %v570 = vpop.f32.mrb[0].mxu0
      %v571 = vpop.f32.mrb[0].mxu0
      %v572 = vadd.f32 0.0, %v571
      %v573 = vpop.f32.mrb[0].mxu0
      %574 = vmatprep.mubr.bf16.mxu0 0
      %575 = vmatmul.mubr.bf16.gmra.mrb[0].mxu0 %v428
      %v576 = vpop.f32.mrb[0].mxu0
      %v577 = vadd.f32 0.0, %v576
      %v578 = vpop.f32.mrb[0].mxu0
      %v579 = vpop.f32.mrb[0].mxu0
      %v580 = vadd.f32 0.0, %v579
      %v581 = vpop.f32.mrb[0].mxu0
      %582 = vmatprep.mubr.bf16.mxu0 0
      %583 = vmatmul.mubr.bf16.gmra.mrb[0].mxu0 %v431
      %v584 = vpop.f32.mrb[0].mxu0
      %v585 = vadd.f32 0.0, %v584
      %v586 = vpop.f32.mrb[0].mxu0
      %v587 = vpop.f32.mrb[0].mxu0
      %v588 = vadd.f32 0.0, %v587
      %v589 = vpop.f32.mrb[0].mxu0
      %590 = vmatprep.mubr.bf16.mxu0 0
      %591 = vmatmul.mubr.bf16.gmra.mrb[0].mxu0 %v434
      %v592 = vpop.f32.mrb[0].mxu0
      %v593 = vadd.f32 0.0, %v592
      %v594 = vpop.f32.mrb[0].mxu0
      %v595 = vpop.f32.mrb[0].mxu0
      %v596 = vadd.f32 0.0, %v595
      %v597 = vpop.f32.mrb[0].mxu0
      %598 = vmatprep.mubr.bf16.mxu0 0
      %599 = vmatmul.mubr.bf16.gmra.mrb[0].mxu0 %v437
      %v600 = vpop.f32.mrb[0].mxu0
      %v601 = vadd.f32 0.0, %v600
      %v602 = vpop.f32.mrb[0].mxu0
      %v603 = vpop.f32.mrb[0].mxu0
      %v604 = vadd.f32 0.0, %v603
      %v605 = vpop.f32.mrb[0].mxu0
      %606 = vmatprep.mubr.bf16.mxu0 0
      %607 = vmatmul.mubr.bf16.gmra.mrb[0].mxu0 %v440
      %v608 = vpop.f32.mrb[0].mxu0
      %v609 = vadd.f32 0.0, %v608
      %v610 = vpop.f32.mrb[0].mxu0
      %v611 = vpop.f32.mrb[0].mxu0
      %v612 = vadd.f32 0.0, %v611
      %v613 = vpop.f32.mrb[0].mxu0
      %614 = vmatprep.mubr.bf16.mxu0 0
      %615 = vmatmul.mubr.bf16.gmra.mrb[0].mxu0 %v443
      %v616 = vpop.f32.mrb[0].mxu0
      %v617 = vadd.f32 0.0, %v616
      %v618 = vpop.f32.mrb[0].mxu0
      %v619 = vpop.f32.mrb[0].mxu0
      %v620 = vadd.f32 0.0, %v619
      %v621 = vpop.f32.mrb[0].mxu0
      %622 = vmatprep.mubr.bf16.mxu0 0
      %623 = vmatmul.mubr.bf16.gmra.mrb[0].mxu0 %v446
      %v624 = vpop.f32.mrb[0].mxu0
      %v625 = vadd.f32 0.0, %v624
      %v626 = vpop.f32.mrb[0].mxu0
      %v627 = vpop.f32.mrb[0].mxu0
      %v628 = vadd.f32 0.0, %v627
      %v629 = vpop.f32.mrb[0].mxu0
      %630 = vmatprep.mubr.bf16.mxu0 0
      %631 = vmatmul.mubr.bf16.gmra.mrb[0].mxu0 %v449
      %v632 = vpop.f32.mrb[0].mxu0
      %v633 = vadd.f32 0.0, %v632
      %v634 = vpop.f32.mrb[0].mxu0
      %v635 = vpop.f32.mrb[0].mxu0
      %v636 = vadd.f32 0.0, %v635
      %v637 = vpop.f32.mrb[0].mxu0
      %638 = vmatprep.mubr.bf16.mxu0 0
      %639 = vmatmul.mubr.bf16.gmra.mrb[0].mxu0 %v452
      %v640 = vpop.f32.mrb[0].mxu0
      %v641 = vadd.f32 0.0, %v640
      %v642 = vpop.f32.mrb[0].mxu0
      %v643 = vpop.f32.mrb[0].mxu0
      %v644 = vadd.f32 0.0, %v643
      %v645 = vpop.f32.mrb[0].mxu0
      %646 = vmatprep.mubr.bf16.mxu0 0
      %647 = vmatmul.mubr.bf16.gmra.mrb[0].mxu0 %v455
      %v648 = vpop.f32.mrb[0].mxu0
      %v649 = vadd.f32 0.0, %v648
      %v650 = vpop.f32.mrb[0].mxu0
      %v651 = vpop.f32.mrb[0].mxu0
      %v652 = vadd.f32 0.0, %v651
      %v653 = vpop.f32.mrb[0].mxu0
      %654 = vmatprep.mubr.bf16.mxu0 0
      %655 = vmatmul.mubr.bf16.gmra.mrb[0].mxu0 %v458
      %v656 = vpop.f32.mrb[0].mxu0
      %v657 = vadd.f32 0.0, %v656
      %v658 = vpop.f32.mrb[0].mxu0
      %v659 = vpop.f32.mrb[0].mxu0
      %v660 = vadd.f32 0.0, %v659
      %v661 = vpop.f32.mrb[0].mxu0
      %662 = vmatprep.mubr.bf16.mxu0 0
      %663 = vmatmul.mubr.bf16.gmra.mrb[0].mxu0 %v461
      %v664 = vpop.f32.mrb[0].mxu0
      %v665 = vadd.f32 0.0, %v664
      %v666 = vpop.f32.mrb[0].mxu0
      %v667 = vpop.f32.mrb[0].mxu0
      %v668 = vadd.f32 0.0, %v667
      %v669 = vpop.f32.mrb[0].mxu0
      %670 = vmatprep.mubr.bf16.mxu0 0
      %671 = vmatmul.mubr.bf16.gmra.mrb[0].mxu0 %v464
      %v672 = vpop.f32.mrb[0].mxu0
      %v673 = vadd.f32 0.0, %v672
      %v674 = vpop.f32.mrb[0].mxu0
      %v675 = vpop.f32.mrb[0].mxu0
      %v676 = vadd.f32 0.0, %v675
      %v677 = vpop.f32.mrb[0].mxu0
      %678 = vmatprep.mubr.bf16.mxu0 0
      %679 = vmatmul.mubr.bf16.gmra.mrb[0].mxu0 %v467
      %v680 = vpop.f32.mrb[0].mxu0
      %v681 = vadd.f32 0.0, %v680
      %v682 = vpop.f32.mrb[0].mxu0
      %v683 = vpop.f32.mrb[0].mxu0
      %v684 = vadd.f32 0.0, %v683
      %v685 = vpop.f32.mrb[0].mxu0
      %686 = vmatprep.mubr.bf16.mxu0 0
      %687 = vmatmul.mubr.bf16.gmra.mrb[0].mxu0 %v470
      %v688 = vpop.f32.mrb[0].mxu0
      %v689 = vadd.f32 0.0, %v688
      %v690 = vpop.f32.mrb[0].mxu0
      %v691 = vpop.f32.mrb[0].mxu0
      %v692 = vadd.f32 0.0, %v691
      %v693 = vpop.f32.mrb[0].mxu0
      %694 = vmatprep.mubr.bf16.mxu0 0
      %695 = vmatmul.mubr.bf16.gmra.mrb[0].mxu0 %v473
      %v696 = vpop.f32.mrb[0].mxu0
      %v697 = vadd.f32 0.0, %v696
      %v698 = vpop.f32.mrb[0].mxu0
      %v699 = vpop.f32.mrb[0].mxu0
      %v700 = vadd.f32 0.0, %v699
      %v701 = vpop.f32.mrb[0].mxu0
      %702 = vmatprep.mubr.bf16.mxu0 0
      %703 = vmatmul.mubr.bf16.gmra.mrb[0].mxu0 %v476
      %v704 = vpop.f32.mrb[0].mxu0
      %v705 = vadd.f32 0.0, %v704
      %v706 = vpop.f32.mrb[0].mxu0
      %v707 = vpop.f32.mrb[0].mxu0
      %v708 = vadd.f32 0.0, %v707
      %v709 = vpop.f32.mrb[0].mxu0
      %710 = vmatprep.mubr.bf16.mxu0 0
      %711 = vmatmul.mubr.bf16.gmra.mrb[0].mxu0 %v479
      %v712 = vpop.f32.mrb[0].mxu0
      %v713 = vadd.f32 0.0, %v712
      %v714 = vpop.f32.mrb[0].mxu0
      %v715 = vpop.f32.mrb[0].mxu0
      %v716 = vadd.f32 0.0, %v715
      %v717 = vpop.f32.mrb[0].mxu0
      %718 = vmatprep.mubr.bf16.mxu0 0
      %719 = vmatmul.mubr.bf16.gmra.mrb[0].mxu0 %v482
      %v720 = vpop.f32.mrb[0].mxu0
      %v721 = vadd.f32 0.0, %v720
      %v722 = vpop.f32.mrb[0].mxu0
      %v723 = vpop.f32.mrb[0].mxu0
      %v724 = vadd.f32 0.0, %v723
      %v725 = vpop.f32.mrb[0].mxu0
      %726 = vmatprep.mubr.bf16.mxu0 0
      %727 = vmatmul.mubr.bf16.gmra.mrb[0].mxu0 %v485
      %v728 = vpop.f32.mrb[0].mxu0
      %v729 = vadd.f32 0.0, %v728
      %v730 = vpop.f32.mrb[0].mxu0
      %v731 = vpop.f32.mrb[0].mxu0
      %v732 = vadd.f32 0.0, %v731
      %v733 = vpop.f32.mrb[0].mxu0
      %734 = vmatprep.mubr.bf16.mxu0 0
      %735 = vmatmul.mubr.bf16.gmra.mrb[0].mxu0 %v488
      %v736 = vpop.f32.mrb[0].mxu0
      %v737 = vadd.f32 0.0, %v736
      %v738 = vpop.f32.mrb[0].mxu0
      %v739 = vpop.f32.mrb[0].mxu0
      %v740 = vadd.f32 0.0, %v739
      %v741 = vpop.f32.mrb[0].mxu0
      %742 = vmatprep.mubr.bf16.mxu0 0
      %743 = vmatmul.mubr.bf16.gmra.mrb[0].mxu0 %v491
      %v744 = vpop.f32.mrb[0].mxu0
      %v745 = vadd.f32 0.0, %v744
      %v746 = vpop.f32.mrb[0].mxu0
      %v747 = vpop.f32.mrb[0].mxu0
      %v748 = vadd.f32 0.0, %v747
      %v749 = vpop.f32.mrb[0].mxu0
      %750 = vmatprep.mubr.bf16.mxu0 0
      %751 = vmatmul.mubr.bf16.gmra.mrb[0].mxu0 %v494
      %v752 = vpop.f32.mrb[0].mxu0
      %v753 = vadd.f32 0.0, %v752
      %v754 = vpop.f32.mrb[0].mxu0
      %v755 = vpop.f32.mrb[0].mxu0
      %v756 = vadd.f32 0.0, %v755
      %v757 = vpop.f32.mrb[0].mxu0
      %758 = vmatprep.mubr.bf16.mxu0 0
      %759 = vmatmul.mubr.bf16.gmra.mrb[0].mxu0 %v497
      %v760 = vpop.f32.mrb[0].mxu0
      %v761 = vadd.f32 0.0, %v760
      %v762 = vpop.f32.mrb[0].mxu0
      %v763 = vpop.f32.mrb[0].mxu0
      %v764 = vadd.f32 0.0, %v763
      %v765 = vpop.f32.mrb[0].mxu0
      %766 = vmatprep.mubr.bf16.mxu0 0
      %767 = vmatmul.mubr.bf16.gmra.mrb[0].mxu0 %v500
      %v768 = vpop.f32.mrb[0].mxu0
      %v769 = vadd.f32 0.0, %v768
      %v770 = vpop.f32.mrb[0].mxu0
      %v771 = vpop.f32.mrb[0].mxu0
      %v772 = vadd.f32 0.0, %v771
      %v773 = vpop.f32.mrb[0].mxu0
      %774 = vmatprep.mubr.bf16.mxu0 0
      %775 = vmatmul.mubr.bf16.gmra.mrb[0].mxu0 %v503
      %v776 = vpop.f32.mrb[0].mxu0
      %v777 = vadd.f32 0.0, %v776
      %v778 = vpop.f32.mrb[0].mxu0
      %v779 = vpop.f32.mrb[0].mxu0
      %v780 = vadd.f32 0.0, %v779
      %v781 = vpop.f32.mrb[0].mxu0
      %782 = vmatprep.mubr.bf16.mxu0 0
      %783 = vmatmul.mubr.bf16.gmra.mrb[0].mxu0 %v506
      %v784 = vpop.f32.mrb[0].mxu0
      %v785 = vadd.f32 0.0, %v784
      %v786 = vpop.f32.mrb[0].mxu0
      %v787 = vpop.f32.mrb[0].mxu0
      %v788 = vadd.f32 0.0, %v787
      %v789 = vpop.f32.mrb[0].mxu0
      %790 = vmatprep.mubr.bf16.mxu0 0
      %791 = vmatmul.mubr.bf16.gmra.mrb[0].mxu0 %v509
      %v792 = vpop.f32.mrb[0].mxu0
      %v793 = vadd.f32 0.0, %v792
      %v794 = vpop.f32.mrb[0].mxu0
      %v795 = vpop.f32.mrb[0].mxu0
      %v796 = vadd.f32 0.0, %v795
      %v797 = vpop.f32.mrb[0].mxu0
      %798 = vmatprep.mubr.bf16.mxu0 0
      %799 = vmatmul.mubr.bf16.gmra.mrb[0].mxu0 %v512
      %v800 = vpop.f32.mrb[0].mxu0
      %v801 = vadd.f32 0.0, %v800
      %v802 = vpop.f32.mrb[0].mxu0
      %v803 = vpop.f32.mrb[0].mxu0
      %v804 = vadd.f32 0.0, %v803
      %v805 = vpop.f32.mrb[0].mxu0
      %806 = vdwg.mxu0
      %v811 = vunpack.c.l.b16 %v179
      %v812 = vunpack.c.l.b16 %v180
      %v813 = vunpack.c.l.b16 %v181
      %v814 = vunpack.c.l.b16 %v182
      %v815 = vpack.c.b16 %v812, %v811
      %v816 = vpack.c.b16 %v814, %v813
      %v819 = vunpack.c.l.b16 %v243
      %v820 = vunpack.c.l.b16 %v244
      %v821 = vpack.c.b16 %v820, %v819
      %v823 = vsel %vm417, %v815, 0
      %v826 = vsel %vm417, %v816, 0
      %v829 = vsel %vm514, %v821, 0
      %831 = vmatprep.subr.bf16.mxu0 0
      %832 = vmatpush1.bf16.msra.mxu0 %v829
      %833 = vmatprep.subr.bf16.mxu0 0
      %834 = vmatpush1.bf16.msra.mxu0 0
      %835 = vmatprep.subr.bf16.mxu0 0
      %836 = vmatpush1.bf16.msra.mxu0 0
      %837 = vmatprep.subr.bf16.mxu0 0
      %838 = vmatpush1.bf16.msra.mxu0 0
      %839 = vmatprep.subr.bf16.mxu0 0
      %840 = vmatpush1.bf16.msra.mxu0 0
      %841 = vmatprep.subr.bf16.mxu0 0
      %842 = vmatpush1.bf16.msra.mxu0 0
      %843 = vmatprep.subr.bf16.mxu0 0
      %844 = vmatpush1.bf16.msra.mxu0 0
      %845 = vmatprep.subr.bf16.mxu0 0
      %846 = vmatpush1.bf16.msra.mxu0 0
      %847 = vmatprep.subr.bf16.mxu0 0
      %848 = vmatpush1.bf16.msra.mxu0 0
      %849 = vmatprep.subr.bf16.mxu0 0
      %850 = vmatpush1.bf16.msra.mxu0 0
      %851 = vmatprep.subr.bf16.mxu0 0
      %852 = vmatpush1.bf16.msra.mxu0 0
      %853 = vmatprep.subr.bf16.mxu0 0
      %854 = vmatpush1.bf16.msra.mxu0 0
      %855 = vmatprep.subr.bf16.mxu0 0
      %856 = vmatpush1.bf16.msra.mxu0 0
      %857 = vmatprep.subr.bf16.mxu0 0
      %858 = vmatpush1.bf16.msra.mxu0 0
      %859 = vmatprep.subr.bf16.mxu0 0
      %860 = vmatpush1.bf16.msra.mxu0 0
      %861 = vmatprep.subr.bf16.mxu0 0
      %862 = vmatpush1.bf16.msra.mxu0 0
      %863 = vmatprep.mubr.bf16.mxu0 0
      %864 = vmatmul.mubr.bf16.gmra.mrb[0].mxu0 %v823
      %v865 = vpop.f32.mrb[0].mxu0
      %v866 = vadd.f32 %v553, %v865
      %v867 = vpop.f32.mrb[0].mxu0
      %v868 = vpop.f32.mrb[0].mxu0
      %v869 = vadd.f32 %v556, %v868
      %v870 = vpop.f32.mrb[0].mxu0
      %871 = vmatprep.mubr.bf16.mxu0 0
      %872 = vmatmul.mubr.bf16.gmra.mrb[0].mxu0 %v826
      %v873 = vpop.f32.mrb[0].mxu0
      %v874 = vadd.f32 %v561, %v873
      %v875 = vpop.f32.mrb[0].mxu0
      %v876 = vpop.f32.mrb[0].mxu0
      %v877 = vadd.f32 %v564, %v876
      %v878 = vpop.f32.mrb[0].mxu0
      %879 = vmatprep.mubr.bf16.mxu0 0
      %880 = vmatmul.mubr.bf16.gmra.mrb[0].mxu0 %v419
      %v881 = vpop.f32.mrb[0].mxu0
      %v882 = vadd.f32 %v569, %v881
      %v883 = vpop.f32.mrb[0].mxu0
      %v884 = vpop.f32.mrb[0].mxu0
      %v885 = vadd.f32 %v572, %v884
      %v886 = vpop.f32.mrb[0].mxu0
      %887 = vmatprep.mubr.bf16.mxu0 0
      %888 = vmatmul.mubr.bf16.gmra.mrb[0].mxu0 %v422
      %v889 = vpop.f32.mrb[0].mxu0
      %v890 = vadd.f32 %v577, %v889
      %v891 = vpop.f32.mrb[0].mxu0
      %v892 = vpop.f32.mrb[0].mxu0
      %v893 = vadd.f32 %v580, %v892
      %v894 = vpop.f32.mrb[0].mxu0
      %895 = vmatprep.mubr.bf16.mxu0 0
      %896 = vmatmul.mubr.bf16.gmra.mrb[0].mxu0 %v425
      %v897 = vpop.f32.mrb[0].mxu0
      %v898 = vadd.f32 %v585, %v897
      %v899 = vpop.f32.mrb[0].mxu0
      %v900 = vpop.f32.mrb[0].mxu0
      %v901 = vadd.f32 %v588, %v900
      %v902 = vpop.f32.mrb[0].mxu0
      %903 = vmatprep.mubr.bf16.mxu0 0
      %904 = vmatmul.mubr.bf16.gmra.mrb[0].mxu0 %v428
      %v905 = vpop.f32.mrb[0].mxu0
      %v906 = vadd.f32 %v593, %v905
      %v907 = vpop.f32.mrb[0].mxu0
      %v908 = vpop.f32.mrb[0].mxu0
      %v909 = vadd.f32 %v596, %v908
      %v910 = vpop.f32.mrb[0].mxu0
      %911 = vmatprep.mubr.bf16.mxu0 0
      %912 = vmatmul.mubr.bf16.gmra.mrb[0].mxu0 %v431
      %v913 = vpop.f32.mrb[0].mxu0
      %v914 = vadd.f32 %v601, %v913
      %v915 = vpop.f32.mrb[0].mxu0
      %v916 = vpop.f32.mrb[0].mxu0
      %v917 = vadd.f32 %v604, %v916
      %v918 = vpop.f32.mrb[0].mxu0
      %919 = vmatprep.mubr.bf16.mxu0 0
      %920 = vmatmul.mubr.bf16.gmra.mrb[0].mxu0 %v434
      %v921 = vpop.f32.mrb[0].mxu0
      %v922 = vadd.f32 %v609, %v921
      %v923 = vpop.f32.mrb[0].mxu0
      %v924 = vpop.f32.mrb[0].mxu0
      %v925 = vadd.f32 %v612, %v924
      %v926 = vpop.f32.mrb[0].mxu0
      %927 = vmatprep.mubr.bf16.mxu0 0
      %928 = vmatmul.mubr.bf16.gmra.mrb[0].mxu0 %v437
      %v929 = vpop.f32.mrb[0].mxu0
      %v930 = vadd.f32 %v617, %v929
      %v931 = vpop.f32.mrb[0].mxu0
      %v932 = vpop.f32.mrb[0].mxu0
      %v933 = vadd.f32 %v620, %v932
      %v934 = vpop.f32.mrb[0].mxu0
      %935 = vmatprep.mubr.bf16.mxu0 0
      %936 = vmatmul.mubr.bf16.gmra.mrb[0].mxu0 %v440
      %v937 = vpop.f32.mrb[0].mxu0
      %v938 = vadd.f32 %v625, %v937
      %v939 = vpop.f32.mrb[0].mxu0
      %v940 = vpop.f32.mrb[0].mxu0
      %v941 = vadd.f32 %v628, %v940
      %v942 = vpop.f32.mrb[0].mxu0
      %943 = vmatprep.mubr.bf16.mxu0 0
      %944 = vmatmul.mubr.bf16.gmra.mrb[0].mxu0 %v443
      %v945 = vpop.f32.mrb[0].mxu0
      %v946 = vadd.f32 %v633, %v945
      %v947 = vpop.f32.mrb[0].mxu0
      %v948 = vpop.f32.mrb[0].mxu0
      %v949 = vadd.f32 %v636, %v948
      %v950 = vpop.f32.mrb[0].mxu0
      %951 = vmatprep.mubr.bf16.mxu0 0
      %952 = vmatmul.mubr.bf16.gmra.mrb[0].mxu0 %v446
      %v953 = vpop.f32.mrb[0].mxu0
      %v954 = vadd.f32 %v641, %v953
      %v955 = vpop.f32.mrb[0].mxu0
      %v956 = vpop.f32.mrb[0].mxu0
      %v957 = vadd.f32 %v644, %v956
      %v958 = vpop.f32.mrb[0].mxu0
      %959 = vmatprep.mubr.bf16.mxu0 0
      %960 = vmatmul.mubr.bf16.gmra.mrb[0].mxu0 %v449
      %v961 = vpop.f32.mrb[0].mxu0
      %v962 = vadd.f32 %v649, %v961
      %v963 = vpop.f32.mrb[0].mxu0
      %v964 = vpop.f32.mrb[0].mxu0
      %v965 = vadd.f32 %v652, %v964
      %v966 = vpop.f32.mrb[0].mxu0
      %967 = vmatprep.mubr.bf16.mxu0 0
      %968 = vmatmul.mubr.bf16.gmra.mrb[0].mxu0 %v452
      %v969 = vpop.f32.mrb[0].mxu0
      %v970 = vadd.f32 %v657, %v969
      %v971 = vpop.f32.mrb[0].mxu0
      %v972 = vpop.f32.mrb[0].mxu0
      %v973 = vadd.f32 %v660, %v972
      %v974 = vpop.f32.mrb[0].mxu0
      %975 = vmatprep.mubr.bf16.mxu0 0
      %976 = vmatmul.mubr.bf16.gmra.mrb[0].mxu0 %v455
      %v977 = vpop.f32.mrb[0].mxu0
      %v978 = vadd.f32 %v665, %v977
      %v979 = vpop.f32.mrb[0].mxu0
      %v980 = vpop.f32.mrb[0].mxu0
      %v981 = vadd.f32 %v668, %v980
      %v982 = vpop.f32.mrb[0].mxu0
      %983 = vmatprep.mubr.bf16.mxu0 0
      %984 = vmatmul.mubr.bf16.gmra.mrb[0].mxu0 %v458
      %v985 = vpop.f32.mrb[0].mxu0
      %v986 = vadd.f32 %v673, %v985
      %v987 = vpop.f32.mrb[0].mxu0
      %v988 = vpop.f32.mrb[0].mxu0
      %v989 = vadd.f32 %v676, %v988
      %v990 = vpop.f32.mrb[0].mxu0
      %991 = vmatprep.mubr.bf16.mxu0 0
      %992 = vmatmul.mubr.bf16.gmra.mrb[0].mxu0 %v461
      %v993 = vpop.f32.mrb[0].mxu0
      %v994 = vadd.f32 %v681, %v993
      %v995 = vpop.f32.mrb[0].mxu0
      %v996 = vpop.f32.mrb[0].mxu0
      %v997 = vadd.f32 %v684, %v996
      %v998 = vpop.f32.mrb[0].mxu0
      %999 = vmatprep.mubr.bf16.mxu0 0
      %1000 = vmatmul.mubr.bf16.gmra.mrb[0].mxu0 %v464
      %v1001 = vpop.f32.mrb[0].mxu0
      %v1002 = vadd.f32 %v689, %v1001
      %v1003 = vpop.f32.mrb[0].mxu0
      %v1004 = vpop.f32.mrb[0].mxu0
      %v1005 = vadd.f32 %v692, %v1004
      %v1006 = vpop.f32.mrb[0].mxu0
      %1007 = vmatprep.mubr.bf16.mxu0 0
      %1008 = vmatmul.mubr.bf16.gmra.mrb[0].mxu0 %v467
      %v1009 = vpop.f32.mrb[0].mxu0
      %v1010 = vadd.f32 %v697, %v1009
      %v1011 = vpop.f32.mrb[0].mxu0
      %v1012 = vpop.f32.mrb[0].mxu0
      %v1013 = vadd.f32 %v700, %v1012
      %v1014 = vpop.f32.mrb[0].mxu0
      %1015 = vmatprep.mubr.bf16.mxu0 0
      %1016 = vmatmul.mubr.bf16.gmra.mrb[0].mxu0 %v470
      %v1017 = vpop.f32.mrb[0].mxu0
      %v1018 = vadd.f32 %v705, %v1017
      %v1019 = vpop.f32.mrb[0].mxu0
      %v1020 = vpop.f32.mrb[0].mxu0
      %v1021 = vadd.f32 %v708, %v1020
      %v1022 = vpop.f32.mrb[0].mxu0
      %1023 = vmatprep.mubr.bf16.mxu0 0
      %1024 = vmatmul.mubr.bf16.gmra.mrb[0].mxu0 %v473
      %v1025 = vpop.f32.mrb[0].mxu0
      %v1026 = vadd.f32 %v713, %v1025
      %v1027 = vpop.f32.mrb[0].mxu0
      %v1028 = vpop.f32.mrb[0].mxu0
      %v1029 = vadd.f32 %v716, %v1028
      %v1030 = vpop.f32.mrb[0].mxu0
      %1031 = vmatprep.mubr.bf16.mxu0 0
      %1032 = vmatmul.mubr.bf16.gmra.mrb[0].mxu0 %v476
      %v1033 = vpop.f32.mrb[0].mxu0
      %v1034 = vadd.f32 %v721, %v1033
      %v1035 = vpop.f32.mrb[0].mxu0
      %v1036 = vpop.f32.mrb[0].mxu0
      %v1037 = vadd.f32 %v724, %v1036
      %v1038 = vpop.f32.mrb[0].mxu0
      %1039 = vmatprep.mubr.bf16.mxu0 0
      %1040 = vmatmul.mubr.bf16.gmra.mrb[0].mxu0 %v479
      %v1041 = vpop.f32.mrb[0].mxu0
      %v1042 = vadd.f32 %v729, %v1041
      %v1043 = vpop.f32.mrb[0].mxu0
      %v1044 = vpop.f32.mrb[0].mxu0
      %v1045 = vadd.f32 %v732, %v1044
      %v1046 = vpop.f32.mrb[0].mxu0
      %1047 = vmatprep.mubr.bf16.mxu0 0
      %1048 = vmatmul.mubr.bf16.gmra.mrb[0].mxu0 %v482
      %v1049 = vpop.f32.mrb[0].mxu0
      %v1050 = vadd.f32 %v737, %v1049
      %v1051 = vpop.f32.mrb[0].mxu0
      %v1052 = vpop.f32.mrb[0].mxu0
      %v1053 = vadd.f32 %v740, %v1052
      %v1054 = vpop.f32.mrb[0].mxu0
      %1055 = vmatprep.mubr.bf16.mxu0 0
      %1056 = vmatmul.mubr.bf16.gmra.mrb[0].mxu0 %v485
      %v1057 = vpop.f32.mrb[0].mxu0
      %v1058 = vadd.f32 %v745, %v1057
      %v1059 = vpop.f32.mrb[0].mxu0
      %v1060 = vpop.f32.mrb[0].mxu0
      %v1061 = vadd.f32 %v748, %v1060
      %v1062 = vpop.f32.mrb[0].mxu0
      %1063 = vmatprep.mubr.bf16.mxu0 0
      %1064 = vmatmul.mubr.bf16.gmra.mrb[0].mxu0 %v488
      %v1065 = vpop.f32.mrb[0].mxu0
      %v1066 = vadd.f32 %v753, %v1065
      %v1067 = vpop.f32.mrb[0].mxu0
      %v1068 = vpop.f32.mrb[0].mxu0
      %v1069 = vadd.f32 %v756, %v1068
      %v1070 = vpop.f32.mrb[0].mxu0
      %1071 = vmatprep.mubr.bf16.mxu0 0
      %1072 = vmatmul.mubr.bf16.gmra.mrb[0].mxu0 %v491
      %v1073 = vpop.f32.mrb[0].mxu0
      %v1074 = vadd.f32 %v761, %v1073
      %v1075 = vpop.f32.mrb[0].mxu0
      %v1076 = vpop.f32.mrb[0].mxu0
      %v1077 = vadd.f32 %v764, %v1076
      %v1078 = vpop.f32.mrb[0].mxu0
      %1079 = vmatprep.mubr.bf16.mxu0 0
      %1080 = vmatmul.mubr.bf16.gmra.mrb[0].mxu0 %v494
      %v1081 = vpop.f32.mrb[0].mxu0
      %v1082 = vadd.f32 %v769, %v1081
      %v1083 = vpop.f32.mrb[0].mxu0
      %v1084 = vpop.f32.mrb[0].mxu0
      %v1085 = vadd.f32 %v772, %v1084
      %v1086 = vpop.f32.mrb[0].mxu0
      %1087 = vmatprep.mubr.bf16.mxu0 0
      %1088 = vmatmul.mubr.bf16.gmra.mrb[0].mxu0 %v497
      %v1089 = vpop.f32.mrb[0].mxu0
      %v1090 = vadd.f32 %v777, %v1089
      %v1091 = vpop.f32.mrb[0].mxu0
      %v1092 = vpop.f32.mrb[0].mxu0
      %v1093 = vadd.f32 %v780, %v1092
      %v1094 = vpop.f32.mrb[0].mxu0
      %1095 = vmatprep.mubr.bf16.mxu0 0
      %1096 = vmatmul.mubr.bf16.gmra.mrb[0].mxu0 %v500
      %v1097 = vpop.f32.mrb[0].mxu0
      %v1098 = vadd.f32 %v785, %v1097
      %v1099 = vpop.f32.mrb[0].mxu0
      %v1100 = vpop.f32.mrb[0].mxu0
      %v1101 = vadd.f32 %v788, %v1100
      %v1102 = vpop.f32.mrb[0].mxu0
      %1103 = vmatprep.mubr.bf16.mxu0 0
      %1104 = vmatmul.mubr.bf16.gmra.mrb[0].mxu0 %v503
      %v1105 = vpop.f32.mrb[0].mxu0
      %v1106 = vadd.f32 %v793, %v1105
      %v1107 = vpop.f32.mrb[0].mxu0
      %v1108 = vpop.f32.mrb[0].mxu0
      %v1109 = vadd.f32 %v796, %v1108
      %v1110 = vpop.f32.mrb[0].mxu0
      %1111 = vmatprep.mubr.bf16.mxu0 0
      %1112 = vmatmul.mubr.bf16.gmra.mrb[0].mxu0 %v506
      %v1113 = vpop.f32.mrb[0].mxu0
      %v1114 = vadd.f32 %v801, %v1113
      %v1115 = vpop.f32.mrb[0].mxu0
      %v1116 = vpop.f32.mrb[0].mxu0
      %v1117 = vadd.f32 %v804, %v1116
      %v1118 = vpop.f32.mrb[0].mxu0
      %1119 = vdwg.mxu0
      %v1120 = vld [vmem:[%s169 + $0x20] sm:$0xf]
      %v1121 = vld [vmem:[%s169 + $0x24] sm:$0xf]
      %v1122 = vld [vmem:[%s169 + $0x28] sm:$0xf]
      %v1123 = vld [vmem:[%s169 + $0x2c] sm:$0xf]
      %v1124 = vld [vmem:[%s169 + $0x30] sm:$0xf]
      %v1125 = vld [vmem:[%s169 + $0x34] sm:$0xf]
      %v1126 = vld [vmem:[%s169 + $0x38] sm:$0xf]
      %v1127 = vld [vmem:[%s169 + $0x3c] sm:$0xf]
      %v1128 = vld [vmem:[%s169 + $0x40] sm:$0xf]
      %v1129 = vld [vmem:[%s169 + $0x44] sm:$0xf]
      %v1130 = vld [vmem:[%s169 + $0x48] sm:$0xf]
      %v1131 = vld [vmem:[%s169 + $0x4c] sm:$0xf]
      %v1132 = vld [vmem:[%s169 + $0x50] sm:$0xf]
      %v1133 = vld [vmem:[%s169 + $0x54] sm:$0xf]
      %v1134 = vld [vmem:[%s169 + $0x58] sm:$0xf]
      %v1135 = vld [vmem:[%s169 + $0x5c] sm:$0xf]
      %v1136 = vld [vmem:[%s169 + $0x60] sm:$0xf]
      %v1137 = vld [vmem:[%s169 + $0x64] sm:$0xf]
      %v1138 = vld [vmem:[%s169 + $0x68] sm:$0xf]
      %v1139 = vld [vmem:[%s169 + $0x6c] sm:$0xf]
      %v1140 = vld [vmem:[%s169 + $0x70] sm:$0xf]
      %v1141 = vld [vmem:[%s169 + $0x74] sm:$0xf]
      %v1142 = vld [vmem:[%s169 + $0x78] sm:$0xf]
      %v1143 = vld [vmem:[%s169 + $0x7c] sm:$0xf]
      %v1144 = vld [vmem:[%s169 + $0x80] sm:$0xf]
      %v1145 = vld [vmem:[%s169 + $0x84] sm:$0xf]
      %v1146 = vld [vmem:[%s169 + $0x88] sm:$0xf]
      %v1147 = vld [vmem:[%s169 + $0x8c] sm:$0xf]
      %v1148 = vld [vmem:[%s169 + $0x90] sm:$0xf]
      %v1149 = vld [vmem:[%s169 + $0x94] sm:$0xf]
      %v1150 = vld [vmem:[%s169 + $0x98] sm:$0xf]
      %v1151 = vld [vmem:[%s169 + $0x9c] sm:$0xf]
      %v1152 = vld [vmem:[%s169 + $0xa0] sm:$0xf]
      %v1153 = vld [vmem:[%s169 + $0xa4] sm:$0xf]
      %v1154 = vld [vmem:[%s169 + $0xa8] sm:$0xf]
      %v1155 = vld [vmem:[%s169 + $0xac] sm:$0xf]
      %v1156 = vld [vmem:[%s169 + $0xb0] sm:$0xf]
      %v1157 = vld [vmem:[%s169 + $0xb4] sm:$0xf]
      %v1158 = vld [vmem:[%s169 + $0xb8] sm:$0xf]
      %v1159 = vld [vmem:[%s169 + $0xbc] sm:$0xf]
      %v1160 = vld [vmem:[%s169 + $0xc0] sm:$0xf]
      %v1161 = vld [vmem:[%s169 + $0xc4] sm:$0xf]
      %v1162 = vld [vmem:[%s169 + $0xc8] sm:$0xf]
      %v1163 = vld [vmem:[%s169 + $0xcc] sm:$0xf]
      %v1164 = vld [vmem:[%s169 + $0xd0] sm:$0xf]
      %v1165 = vld [vmem:[%s169 + $0xd4] sm:$0xf]
      %v1166 = vld [vmem:[%s169 + $0xd8] sm:$0xf]
      %v1167 = vld [vmem:[%s169 + $0xdc] sm:$0xf]
      %v1168 = vld [vmem:[%s169 + $0xe0] sm:$0xf]
      %v1169 = vld [vmem:[%s169 + $0xe4] sm:$0xf]
      %v1170 = vld [vmem:[%s169 + $0xe8] sm:$0xf]
      %v1171 = vld [vmem:[%s169 + $0xec] sm:$0xf]
      %v1172 = vld [vmem:[%s169 + $0xf0] sm:$0xf]
      %v1173 = vld [vmem:[%s169 + $0xf4] sm:$0xf]
      %v1174 = vld [vmem:[%s169 + $0xf8] sm:$0xf]
      %v1175 = vld [vmem:[%s169 + $0xfc] sm:$0xf]
      %v1176 = vld [vmem:[%s169 + $0x100] sm:$0xf]
      %v1177 = vld [vmem:[%s169 + $0x104] sm:$0xf]
      %v1178 = vld [vmem:[%s169 + $0x108] sm:$0xf]
      %v1179 = vld [vmem:[%s169 + $0x10c] sm:$0xf]
      %v1180 = vld [vmem:[%s169 + $0x110] sm:$0xf]
      %v1181 = vld [vmem:[%s169 + $0x114] sm:$0xf]
      %v1182 = vld [vmem:[%s169 + $0x118] sm:$0xf]
      %v1183 = vld [vmem:[%s169 + $0x11c] sm:$0xf]
      %s1184 = scalar_lea.vmem %s1, 16
      %v1185 = vld [vmem:[%s1184] sm:$0xf]
      %v1186 = vld [vmem:[%s1184 + $0x4] sm:$0x3]
      %v1251 = vunpack.c.l.b16 %v1120
      %v1252 = vunpack.c.l.b16 %v1121
      %v1253 = vunpack.c.l.b16 %v1122
      %v1254 = vunpack.c.l.b16 %v1123
      %v1255 = vunpack.c.l.b16 %v1124
      %v1256 = vunpack.c.l.b16 %v1125
      %v1257 = vunpack.c.l.b16 %v1126
      %v1258 = vunpack.c.l.b16 %v1127
      %v1259 = vunpack.c.l.b16 %v1128
      %v1260 = vunpack.c.l.b16 %v1129
      %v1261 = vunpack.c.l.b16 %v1130
      %v1262 = vunpack.c.l.b16 %v1131
      %v1263 = vunpack.c.l.b16 %v1132
      %v1264 = vunpack.c.l.b16 %v1133
      %v1265 = vunpack.c.l.b16 %v1134
      %v1266 = vunpack.c.l.b16 %v1135
      %v1267 = vunpack.c.l.b16 %v1136
      %v1268 = vunpack.c.l.b16 %v1137
      %v1269 = vunpack.c.l.b16 %v1138
      %v1270 = vunpack.c.l.b16 %v1139
      %v1271 = vunpack.c.l.b16 %v1140
      %v1272 = vunpack.c.l.b16 %v1141
      %v1273 = vunpack.c.l.b16 %v1142
      %v1274 = vunpack.c.l.b16 %v1143
      %v1275 = vunpack.c.l.b16 %v1144
      %v1276 = vunpack.c.l.b16 %v1145
      %v1277 = vunpack.c.l.b16 %v1146
      %v1278 = vunpack.c.l.b16 %v1147
      %v1279 = vunpack.c.l.b16 %v1148
      %v1280 = vunpack.c.l.b16 %v1149
      %v1281 = vunpack.c.l.b16 %v1150
      %v1282 = vunpack.c.l.b16 %v1151
      %v1283 = vunpack.c.l.b16 %v1152
      %v1284 = vunpack.c.l.b16 %v1153
      %v1285 = vunpack.c.l.b16 %v1154
      %v1286 = vunpack.c.l.b16 %v1155
      %v1287 = vunpack.c.l.b16 %v1156
      %v1288 = vunpack.c.l.b16 %v1157
      %v1289 = vunpack.c.l.b16 %v1158
      %v1290 = vunpack.c.l.b16 %v1159
      %v1291 = vunpack.c.l.b16 %v1160
      %v1292 = vunpack.c.l.b16 %v1161
      %v1293 = vunpack.c.l.b16 %v1162
      %v1294 = vunpack.c.l.b16 %v1163
      %v1295 = vunpack.c.l.b16 %v1164
      %v1296 = vunpack.c.l.b16 %v1165
      %v1297 = vunpack.c.l.b16 %v1166
      %v1298 = vunpack.c.l.b16 %v1167
      %v1299 = vunpack.c.l.b16 %v1168
      %v1300 = vunpack.c.l.b16 %v1169
      %v1301 = vunpack.c.l.b16 %v1170
      %v1302 = vunpack.c.l.b16 %v1171
      %v1303 = vunpack.c.l.b16 %v1172
      %v1304 = vunpack.c.l.b16 %v1173
      %v1305 = vunpack.c.l.b16 %v1174
      %v1306 = vunpack.c.l.b16 %v1175
      %v1307 = vunpack.c.l.b16 %v1176
      %v1308 = vunpack.c.l.b16 %v1177
      %v1309 = vunpack.c.l.b16 %v1178
      %v1310 = vunpack.c.l.b16 %v1179
      %v1311 = vunpack.c.l.b16 %v1180
      %v1312 = vunpack.c.l.b16 %v1181
      %v1313 = vunpack.c.l.b16 %v1182
      %v1314 = vunpack.c.l.b16 %v1183
      %v1315 = vpack.c.b16 %v1252, %v1251
      %v1316 = vpack.c.b16 %v1254, %v1253
      %v1317 = vpack.c.b16 %v1256, %v1255
      %v1318 = vpack.c.b16 %v1258, %v1257
      %v1319 = vpack.c.b16 %v1260, %v1259
      %v1320 = vpack.c.b16 %v1262, %v1261
      %v1321 = vpack.c.b16 %v1264, %v1263
      %v1322 = vpack.c.b16 %v1266, %v1265
      %v1323 = vpack.c.b16 %v1268, %v1267
      %v1324 = vpack.c.b16 %v1270, %v1269
      %v1325 = vpack.c.b16 %v1272, %v1271
      %v1326 = vpack.c.b16 %v1274, %v1273
      %v1327 = vpack.c.b16 %v1276, %v1275
      %v1328 = vpack.c.b16 %v1278, %v1277
      %v1329 = vpack.c.b16 %v1280, %v1279
      %v1330 = vpack.c.b16 %v1282, %v1281
      %v1331 = vpack.c.b16 %v1284, %v1283
      %v1332 = vpack.c.b16 %v1286, %v1285
      %v1333 = vpack.c.b16 %v1288, %v1287
      %v1334 = vpack.c.b16 %v1290, %v1289
      %v1335 = vpack.c.b16 %v1292, %v1291
      %v1336 = vpack.c.b16 %v1294, %v1293
      %v1337 = vpack.c.b16 %v1296, %v1295
      %v1338 = vpack.c.b16 %v1298, %v1297
      %v1339 = vpack.c.b16 %v1300, %v1299
      %v1340 = vpack.c.b16 %v1302, %v1301
      %v1341 = vpack.c.b16 %v1304, %v1303
      %v1342 = vpack.c.b16 %v1306, %v1305
      %v1343 = vpack.c.b16 %v1308, %v1307
      %v1344 = vpack.c.b16 %v1310, %v1309
      %v1345 = vpack.c.b16 %v1312, %v1311
      %v1346 = vpack.c.b16 %v1314, %v1313
      %v1349 = vunpack.c.l.b16 %v1185
      %v1350 = vunpack.c.l.b16 %v1186
      %v1351 = vpack.c.b16 %v1350, %v1349
      %v1353 = vsel %vm417, %v1315, 0
      %v1356 = vsel %vm417, %v1316, 0
      %v1359 = vsel %vm417, %v1317, 0
      %v1362 = vsel %vm417, %v1318, 0
      %v1365 = vsel %vm417, %v1319, 0
      %v1368 = vsel %vm417, %v1320, 0
      %v1371 = vsel %vm417, %v1321, 0
      %v1374 = vsel %vm417, %v1322, 0
      %v1377 = vsel %vm417, %v1323, 0
      %v1380 = vsel %vm417, %v1324, 0
      %v1383 = vsel %vm417, %v1325, 0
      %v1386 = vsel %vm417, %v1326, 0
      %v1389 = vsel %vm417, %v1327, 0
      %v1392 = vsel %vm417, %v1328, 0
      %v1395 = vsel %vm417, %v1329, 0
      %v1398 = vsel %vm417, %v1330, 0
      %v1401 = vsel %vm417, %v1331, 0
      %v1404 = vsel %vm417, %v1332, 0
      %v1407 = vsel %vm417, %v1333, 0
      %v1410 = vsel %vm417, %v1334, 0
      %v1413 = vsel %vm417, %v1335, 0
      %v1416 = vsel %vm417, %v1336, 0
      %v1419 = vsel %vm417, %v1337, 0
      %v1422 = vsel %vm417, %v1338, 0
      %v1425 = vsel %vm417, %v1339, 0
      %v1428 = vsel %vm417, %v1340, 0
      %v1431 = vsel %vm417, %v1341, 0
      %v1434 = vsel %vm417, %v1342, 0
      %v1437 = vsel %vm417, %v1343, 0
      %v1440 = vsel %vm417, %v1344, 0
      %v1443 = vsel %vm417, %v1345, 0
      %v1446 = vsel %vm417, %v1346, 0
      %v1449 = vsel %vm514, %v1351, 0
      %1451 = vmatprep.subr.bf16.mxu0 0
      %1452 = vmatpush1.bf16.msra.mxu0 %v1449
      %1453 = vmatprep.subr.bf16.mxu0 0
      %1454 = vmatpush1.bf16.msra.mxu0 0
      %1455 = vmatprep.subr.bf16.mxu0 0
      %1456 = vmatpush1.bf16.msra.mxu0 0
      %1457 = vmatprep.subr.bf16.mxu0 0
      %1458 = vmatpush1.bf16.msra.mxu0 0
      %1459 = vmatprep.subr.bf16.mxu0 0
      %1460 = vmatpush1.bf16.msra.mxu0 0
      %1461 = vmatprep.subr.bf16.mxu0 0
      %1462 = vmatpush1.bf16.msra.mxu0 0
      %1463 = vmatprep.subr.bf16.mxu0 0
      %1464 = vmatpush1.bf16.msra.mxu0 0
      %1465 = vmatprep.subr.bf16.mxu0 0
      %1466 = vmatpush1.bf16.msra.mxu0 0
      %1467 = vmatprep.subr.bf16.mxu0 0
      %1468 = vmatpush1.bf16.msra.mxu0 0
      %1469 = vmatprep.subr.bf16.mxu0 0
      %1470 = vmatpush1.bf16.msra.mxu0 0
      %1471 = vmatprep.subr.bf16.mxu0 0
      %1472 = vmatpush1.bf16.msra.mxu0 0
      %1473 = vmatprep.subr.bf16.mxu0 0
      %1474 = vmatpush1.bf16.msra.mxu0 0
      %1475 = vmatprep.subr.bf16.mxu0 0
      %1476 = vmatpush1.bf16.msra.mxu0 0
      %1477 = vmatprep.subr.bf16.mxu0 0
      %1478 = vmatpush1.bf16.msra.mxu0 0
      %1479 = vmatprep.subr.bf16.mxu0 0
      %1480 = vmatpush1.bf16.msra.mxu0 0
      %1481 = vmatprep.subr.bf16.mxu0 0
      %1482 = vmatpush1.bf16.msra.mxu0 0
      %1483 = vmatprep.mubr.bf16.mxu0 0
      %1484 = vmatmul.mubr.bf16.gmra.mrb[0].mxu0 %v1353
      %v1485 = vpop.f32.mrb[0].mxu0
      %v1486 = vadd.f32 0.0, %v1485
      %v1487 = vpop.f32.mrb[0].mxu0
      %v1488 = vpop.f32.mrb[0].mxu0
      %v1489 = vadd.f32 0.0, %v1488
      %v1490 = vpop.f32.mrb[0].mxu0
      %1491 = vmatprep.mubr.bf16.mxu0 0
      %1492 = vmatmul.mubr.bf16.gmra.mrb[0].mxu0 %v1356
      %v1493 = vpop.f32.mrb[0].mxu0
      %v1494 = vadd.f32 0.0, %v1493
      %v1495 = vpop.f32.mrb[0].mxu0
      %v1496 = vpop.f32.mrb[0].mxu0
      %v1497 = vadd.f32 0.0, %v1496
      %v1498 = vpop.f32.mrb[0].mxu0
      %1499 = vmatprep.mubr.bf16.mxu0 0
      %1500 = vmatmul.mubr.bf16.gmra.mrb[0].mxu0 %v1359
      %v1501 = vpop.f32.mrb[0].mxu0
      %v1502 = vadd.f32 0.0, %v1501
      %v1503 = vpop.f32.mrb[0].mxu0
      %v1504 = vpop.f32.mrb[0].mxu0
      %v1505 = vadd.f32 0.0, %v1504
      %v1506 = vpop.f32.mrb[0].mxu0
      %1507 = vmatprep.mubr.bf16.mxu0 0
      %1508 = vmatmul.mubr.bf16.gmra.mrb[0].mxu0 %v1362
      %v1509 = vpop.f32.mrb[0].mxu0
      %v1510 = vadd.f32 0.0, %v1509
      %v1511 = vpop.f32.mrb[0].mxu0
      %v1512 = vpop.f32.mrb[0].mxu0
      %v1513 = vadd.f32 0.0, %v1512
      %v1514 = vpop.f32.mrb[0].mxu0
      %1515 = vmatprep.mubr.bf16.mxu0 0
      %1516 = vmatmul.mubr.bf16.gmra.mrb[0].mxu0 %v1365
      %v1517 = vpop.f32.mrb[0].mxu0
      %v1518 = vadd.f32 0.0, %v1517
      %v1519 = vpop.f32.mrb[0].mxu0
      %v1520 = vpop.f32.mrb[0].mxu0
      %v1521 = vadd.f32 0.0, %v1520
      %v1522 = vpop.f32.mrb[0].mxu0
      %1523 = vmatprep.mubr.bf16.mxu0 0
      %1524 = vmatmul.mubr.bf16.gmra.mrb[0].mxu0 %v1368
      %v1525 = vpop.f32.mrb[0].mxu0
      %v1526 = vadd.f32 0.0, %v1525
      %v1527 = vpop.f32.mrb[0].mxu0
      %v1528 = vpop.f32.mrb[0].mxu0
      %v1529 = vadd.f32 0.0, %v1528
      %v1530 = vpop.f32.mrb[0].mxu0
      %1531 = vmatprep.mubr.bf16.mxu0 0
      %1532 = vmatmul.mubr.bf16.gmra.mrb[0].mxu0 %v1371
      %v1533 = vpop.f32.mrb[0].mxu0
      %v1534 = vadd.f32 0.0, %v1533
      %v1535 = vpop.f32.mrb[0].mxu0
      %v1536 = vpop.f32.mrb[0].mxu0
      %v1537 = vadd.f32 0.0, %v1536
      %v1538 = vpop.f32.mrb[0].mxu0
      %1539 = vmatprep.mubr.bf16.mxu0 0
      %1540 = vmatmul.mubr.bf16.gmra.mrb[0].mxu0 %v1374
      %v1541 = vpop.f32.mrb[0].mxu0
      %v1542 = vadd.f32 0.0, %v1541
      %v1543 = vpop.f32.mrb[0].mxu0
      %v1544 = vpop.f32.mrb[0].mxu0
      %v1545 = vadd.f32 0.0, %v1544
      %v1546 = vpop.f32.mrb[0].mxu0
      %1547 = vmatprep.mubr.bf16.mxu0 0
      %1548 = vmatmul.mubr.bf16.gmra.mrb[0].mxu0 %v1377
      %v1549 = vpop.f32.mrb[0].mxu0
      %v1550 = vadd.f32 0.0, %v1549
      %v1551 = vpop.f32.mrb[0].mxu0
      %v1552 = vpop.f32.mrb[0].mxu0
      %v1553 = vadd.f32 0.0, %v1552
      %v1554 = vpop.f32.mrb[0].mxu0
      %1555 = vmatprep.mubr.bf16.mxu0 0
      %1556 = vmatmul.mubr.bf16.gmra.mrb[0].mxu0 %v1380
      %v1557 = vpop.f32.mrb[0].mxu0
      %v1558 = vadd.f32 0.0, %v1557
      %v1559 = vpop.f32.mrb[0].mxu0
      %v1560 = vpop.f32.mrb[0].mxu0
      %v1561 = vadd.f32 0.0, %v1560
      %v1562 = vpop.f32.mrb[0].mxu0
      %1563 = vmatprep.mubr.bf16.mxu0 0
      %1564 = vmatmul.mubr.bf16.gmra.mrb[0].mxu0 %v1383
      %v1565 = vpop.f32.mrb[0].mxu0
      %v1566 = vadd.f32 0.0, %v1565
      %v1567 = vpop.f32.mrb[0].mxu0
      %v1568 = vpop.f32.mrb[0].mxu0
      %v1569 = vadd.f32 0.0, %v1568
      %v1570 = vpop.f32.mrb[0].mxu0
      %1571 = vmatprep.mubr.bf16.mxu0 0
      %1572 = vmatmul.mubr.bf16.gmra.mrb[0].mxu0 %v1386
      %v1573 = vpop.f32.mrb[0].mxu0
      %v1574 = vadd.f32 0.0, %v1573
      %v1575 = vpop.f32.mrb[0].mxu0
      %v1576 = vpop.f32.mrb[0].mxu0
      %v1577 = vadd.f32 0.0, %v1576
      %v1578 = vpop.f32.mrb[0].mxu0
      %1579 = vmatprep.mubr.bf16.mxu0 0
      %1580 = vmatmul.mubr.bf16.gmra.mrb[0].mxu0 %v1389
      %v1581 = vpop.f32.mrb[0].mxu0
      %v1582 = vadd.f32 0.0, %v1581
      %v1583 = vpop.f32.mrb[0].mxu0
      %v1584 = vpop.f32.mrb[0].mxu0
      %v1585 = vadd.f32 0.0, %v1584
      %v1586 = vpop.f32.mrb[0].mxu0
      %1587 = vmatprep.mubr.bf16.mxu0 0
      %1588 = vmatmul.mubr.bf16.gmra.mrb[0].mxu0 %v1392
      %v1589 = vpop.f32.mrb[0].mxu0
      %v1590 = vadd.f32 0.0, %v1589
      %v1591 = vpop.f32.mrb[0].mxu0
      %v1592 = vpop.f32.mrb[0].mxu0
      %v1593 = vadd.f32 0.0, %v1592
      %v1594 = vpop.f32.mrb[0].mxu0
      %1595 = vmatprep.mubr.bf16.mxu0 0
      %1596 = vmatmul.mubr.bf16.gmra.mrb[0].mxu0 %v1395
      %v1597 = vpop.f32.mrb[0].mxu0
      %v1598 = vadd.f32 0.0, %v1597
      %v1599 = vpop.f32.mrb[0].mxu0
      %v1600 = vpop.f32.mrb[0].mxu0
      %v1601 = vadd.f32 0.0, %v1600
      %v1602 = vpop.f32.mrb[0].mxu0
      %1603 = vmatprep.mubr.bf16.mxu0 0
      %1604 = vmatmul.mubr.bf16.gmra.mrb[0].mxu0 %v1398
      %v1605 = vpop.f32.mrb[0].mxu0
      %v1606 = vadd.f32 0.0, %v1605
      %v1607 = vpop.f32.mrb[0].mxu0
      %v1608 = vpop.f32.mrb[0].mxu0
      %v1609 = vadd.f32 0.0, %v1608
      %v1610 = vpop.f32.mrb[0].mxu0
      %1611 = vmatprep.mubr.bf16.mxu0 0
      %1612 = vmatmul.mubr.bf16.gmra.mrb[0].mxu0 %v1401
      %v1613 = vpop.f32.mrb[0].mxu0
      %v1614 = vadd.f32 0.0, %v1613
      %v1615 = vpop.f32.mrb[0].mxu0
      %v1616 = vpop.f32.mrb[0].mxu0
      %v1617 = vadd.f32 0.0, %v1616
      %v1618 = vpop.f32.mrb[0].mxu0
      %1619 = vmatprep.mubr.bf16.mxu0 0
      %1620 = vmatmul.mubr.bf16.gmra.mrb[0].mxu0 %v1404
      %v1621 = vpop.f32.mrb[0].mxu0
      %v1622 = vadd.f32 0.0, %v1621
      %v1623 = vpop.f32.mrb[0].mxu0
      %v1624 = vpop.f32.mrb[0].mxu0
      %v1625 = vadd.f32 0.0, %v1624
      %v1626 = vpop.f32.mrb[0].mxu0
      %1627 = vmatprep.mubr.bf16.mxu0 0
      %1628 = vmatmul.mubr.bf16.gmra.mrb[0].mxu0 %v1407
      %v1629 = vpop.f32.mrb[0].mxu0
      %v1630 = vadd.f32 0.0, %v1629
      %v1631 = vpop.f32.mrb[0].mxu0
      %v1632 = vpop.f32.mrb[0].mxu0
      %v1633 = vadd.f32 0.0, %v1632
      %v1634 = vpop.f32.mrb[0].mxu0
      %1635 = vmatprep.mubr.bf16.mxu0 0
      %1636 = vmatmul.mubr.bf16.gmra.mrb[0].mxu0 %v1410
      %v1637 = vpop.f32.mrb[0].mxu0
      %v1638 = vadd.f32 0.0, %v1637
      %v1639 = vpop.f32.mrb[0].mxu0
      %v1640 = vpop.f32.mrb[0].mxu0
      %v1641 = vadd.f32 0.0, %v1640
      %v1642 = vpop.f32.mrb[0].mxu0
      %1643 = vmatprep.mubr.bf16.mxu0 0
      %1644 = vmatmul.mubr.bf16.gmra.mrb[0].mxu0 %v1413
      %v1645 = vpop.f32.mrb[0].mxu0
      %v1646 = vadd.f32 0.0, %v1645
      %v1647 = vpop.f32.mrb[0].mxu0
      %v1648 = vpop.f32.mrb[0].mxu0
      %v1649 = vadd.f32 0.0, %v1648
      %v1650 = vpop.f32.mrb[0].mxu0
      %1651 = vmatprep.mubr.bf16.mxu0 0
      %1652 = vmatmul.mubr.bf16.gmra.mrb[0].mxu0 %v1416
      %v1653 = vpop.f32.mrb[0].mxu0
      %v1654 = vadd.f32 0.0, %v1653
      %v1655 = vpop.f32.mrb[0].mxu0
      %v1656 = vpop.f32.mrb[0].mxu0
      %v1657 = vadd.f32 0.0, %v1656
      %v1658 = vpop.f32.mrb[0].mxu0
      %1659 = vmatprep.mubr.bf16.mxu0 0
      %1660 = vmatmul.mubr.bf16.gmra.mrb[0].mxu0 %v1419
      %v1661 = vpop.f32.mrb[0].mxu0
      %v1662 = vadd.f32 0.0, %v1661
      %v1663 = vpop.f32.mrb[0].mxu0
      %v1664 = vpop.f32.mrb[0].mxu0
      %v1665 = vadd.f32 0.0, %v1664
      %v1666 = vpop.f32.mrb[0].mxu0
      %1667 = vmatprep.mubr.bf16.mxu0 0
      %1668 = vmatmul.mubr.bf16.gmra.mrb[0].mxu0 %v1422
      %v1669 = vpop.f32.mrb[0].mxu0
      %v1670 = vadd.f32 0.0, %v1669
      %v1671 = vpop.f32.mrb[0].mxu0
      %v1672 = vpop.f32.mrb[0].mxu0
      %v1673 = vadd.f32 0.0, %v1672
      %v1674 = vpop.f32.mrb[0].mxu0
      %1675 = vmatprep.mubr.bf16.mxu0 0
      %1676 = vmatmul.mubr.bf16.gmra.mrb[0].mxu0 %v1425
      %v1677 = vpop.f32.mrb[0].mxu0
      %v1678 = vadd.f32 0.0, %v1677
      %v1679 = vpop.f32.mrb[0].mxu0
      %v1680 = vpop.f32.mrb[0].mxu0
      %v1681 = vadd.f32 0.0, %v1680
      %v1682 = vpop.f32.mrb[0].mxu0
      %1683 = vmatprep.mubr.bf16.mxu0 0
      %1684 = vmatmul.mubr.bf16.gmra.mrb[0].mxu0 %v1428
      %v1685 = vpop.f32.mrb[0].mxu0
      %v1686 = vadd.f32 0.0, %v1685
      %v1687 = vpop.f32.mrb[0].mxu0
      %v1688 = vpop.f32.mrb[0].mxu0
      %v1689 = vadd.f32 0.0, %v1688
      %v1690 = vpop.f32.mrb[0].mxu0
      %1691 = vmatprep.mubr.bf16.mxu0 0
      %1692 = vmatmul.mubr.bf16.gmra.mrb[0].mxu0 %v1431
      %v1693 = vpop.f32.mrb[0].mxu0
      %v1694 = vadd.f32 0.0, %v1693
      %v1695 = vpop.f32.mrb[0].mxu0
      %v1696 = vpop.f32.mrb[0].mxu0
      %v1697 = vadd.f32 0.0, %v1696
      %v1698 = vpop.f32.mrb[0].mxu0
      %1699 = vmatprep.mubr.bf16.mxu0 0
      %1700 = vmatmul.mubr.bf16.gmra.mrb[0].mxu0 %v1434
      %v1701 = vpop.f32.mrb[0].mxu0
      %v1702 = vadd.f32 0.0, %v1701
      %v1703 = vpop.f32.mrb[0].mxu0
      %v1704 = vpop.f32.mrb[0].mxu0
      %v1705 = vadd.f32 0.0, %v1704
      %v1706 = vpop.f32.mrb[0].mxu0
      %1707 = vmatprep.mubr.bf16.mxu0 0
      %1708 = vmatmul.mubr.bf16.gmra.mrb[0].mxu0 %v1437
      %v1709 = vpop.f32.mrb[0].mxu0
      %v1710 = vadd.f32 0.0, %v1709
      %v1711 = vpop.f32.mrb[0].mxu0
      %v1712 = vpop.f32.mrb[0].mxu0
      %v1713 = vadd.f32 0.0, %v1712
      %v1714 = vpop.f32.mrb[0].mxu0
      %1715 = vmatprep.mubr.bf16.mxu0 0
      %1716 = vmatmul.mubr.bf16.gmra.mrb[0].mxu0 %v1440
      %v1717 = vpop.f32.mrb[0].mxu0
      %v1718 = vadd.f32 0.0, %v1717
      %v1719 = vpop.f32.mrb[0].mxu0
      %v1720 = vpop.f32.mrb[0].mxu0
      %v1721 = vadd.f32 0.0, %v1720
      %v1722 = vpop.f32.mrb[0].mxu0
      %1723 = vmatprep.mubr.bf16.mxu0 0
      %1724 = vmatmul.mubr.bf16.gmra.mrb[0].mxu0 %v1443
      %v1725 = vpop.f32.mrb[0].mxu0
      %v1726 = vadd.f32 0.0, %v1725
      %v1727 = vpop.f32.mrb[0].mxu0
      %v1728 = vpop.f32.mrb[0].mxu0
      %v1729 = vadd.f32 0.0, %v1728
      %v1730 = vpop.f32.mrb[0].mxu0
      %1731 = vmatprep.mubr.bf16.mxu0 0
      %1732 = vmatmul.mubr.bf16.gmra.mrb[0].mxu0 %v1446
      %v1733 = vpop.f32.mrb[0].mxu0
      %v1734 = vadd.f32 0.0, %v1733
      %v1735 = vpop.f32.mrb[0].mxu0
      %v1736 = vpop.f32.mrb[0].mxu0
      %v1737 = vadd.f32 0.0, %v1736
      %v1738 = vpop.f32.mrb[0].mxu0
      %1739 = vdwg.mxu0
      %v1740 = vadd.f32 %v866, %v1486
      %v1741 = vadd.f32 %v869, %v1489
      %v1742 = vadd.f32 %v874, %v1494
      %v1743 = vadd.f32 %v877, %v1497
      %v1744 = vadd.f32 %v882, %v1502
      %v1745 = vadd.f32 %v885, %v1505
      %v1746 = vadd.f32 %v890, %v1510
      %v1747 = vadd.f32 %v893, %v1513
      %v1748 = vadd.f32 %v898, %v1518
      %v1749 = vadd.f32 %v901, %v1521
      %v1750 = vadd.f32 %v906, %v1526
      %v1751 = vadd.f32 %v909, %v1529
      %v1752 = vadd.f32 %v914, %v1534
      %v1753 = vadd.f32 %v917, %v1537
      %v1754 = vadd.f32 %v922, %v1542
      %v1755 = vadd.f32 %v925, %v1545
      %v1756 = vadd.f32 %v930, %v1550
      %v1757 = vadd.f32 %v933, %v1553
      %v1758 = vadd.f32 %v938, %v1558
      %v1759 = vadd.f32 %v941, %v1561
      %v1760 = vadd.f32 %v946, %v1566
      %v1761 = vadd.f32 %v949, %v1569
      %v1762 = vadd.f32 %v954, %v1574
      %v1763 = vadd.f32 %v957, %v1577
      %v1764 = vadd.f32 %v962, %v1582
      %v1765 = vadd.f32 %v965, %v1585
      %v1766 = vadd.f32 %v970, %v1590
      %v1767 = vadd.f32 %v973, %v1593
      %v1768 = vadd.f32 %v978, %v1598
      %v1769 = vadd.f32 %v981, %v1601
      %v1770 = vadd.f32 %v986, %v1606
      %v1771 = vadd.f32 %v989, %v1609
      %v1772 = vadd.f32 %v994, %v1614
      %v1773 = vadd.f32 %v997, %v1617
      %v1774 = vadd.f32 %v1002, %v1622
      %v1775 = vadd.f32 %v1005, %v1625
      %v1776 = vadd.f32 %v1010, %v1630
      %v1777 = vadd.f32 %v1013, %v1633
      %v1778 = vadd.f32 %v1018, %v1638
      %v1779 = vadd.f32 %v1021, %v1641
      %v1780 = vadd.f32 %v1026, %v1646
      %v1781 = vadd.f32 %v1029, %v1649
      %v1782 = vadd.f32 %v1034, %v1654
      %v1783 = vadd.f32 %v1037, %v1657
      %v1784 = vadd.f32 %v1042, %v1662
      %v1785 = vadd.f32 %v1045, %v1665
      %v1786 = vadd.f32 %v1050, %v1670
      %v1787 = vadd.f32 %v1053, %v1673
      %v1788 = vadd.f32 %v1058, %v1678
      %v1789 = vadd.f32 %v1061, %v1681
      %v1790 = vadd.f32 %v1066, %v1686
      %v1791 = vadd.f32 %v1069, %v1689
      %v1792 = vadd.f32 %v1074, %v1694
      %v1793 = vadd.f32 %v1077, %v1697
      %v1794 = vadd.f32 %v1082, %v1702
      %v1795 = vadd.f32 %v1085, %v1705
      %v1796 = vadd.f32 %v1090, %v1710
      %v1797 = vadd.f32 %v1093, %v1713
      %v1798 = vadd.f32 %v1098, %v1718
      %v1799 = vadd.f32 %v1101, %v1721
      %v1800 = vadd.f32 %v1106, %v1726
      %v1801 = vadd.f32 %v1109, %v1729
      %v1802 = vadd.f32 %v1114, %v1734
      %v1803 = vadd.f32 %v1117, %v1737
      %v1804 = vadd.f32 %v1740, %v1741
      %v1805 = vadd.f32 %v1804, %v1742
      %v1806 = vadd.f32 %v1805, %v1743
      %v1807 = vadd.f32 %v1806, %v1744
      %v1808 = vadd.f32 %v1807, %v1745
      %v1809 = vadd.f32 %v1808, %v1746
      %v1810 = vadd.f32 %v1809, %v1747
      %v1811 = vadd.f32 %v1810, %v1748
      %v1812 = vadd.f32 %v1811, %v1749
      %v1813 = vadd.f32 %v1812, %v1750
      %v1814 = vadd.f32 %v1813, %v1751
      %v1815 = vadd.f32 %v1814, %v1752
      %v1816 = vadd.f32 %v1815, %v1753
      %v1817 = vadd.f32 %v1816, %v1754
      %v1818 = vadd.f32 %v1817, %v1755
      %v1819 = vadd.f32 %v1818, %v1756
      %v1820 = vadd.f32 %v1819, %v1757
      %v1821 = vadd.f32 %v1820, %v1758
      %v1822 = vadd.f32 %v1821, %v1759
      %v1823 = vadd.f32 %v1822, %v1760
      %v1824 = vadd.f32 %v1823, %v1761
      %v1825 = vadd.f32 %v1824, %v1762
      %v1826 = vadd.f32 %v1825, %v1763
      %v1827 = vadd.f32 %v1826, %v1764
      %v1828 = vadd.f32 %v1827, %v1765
      %v1829 = vadd.f32 %v1828, %v1766
      %v1830 = vadd.f32 %v1829, %v1767
      %v1831 = vadd.f32 %v1830, %v1768
      %v1832 = vadd.f32 %v1831, %v1769
      %v1833 = vadd.f32 %v1832, %v1770
      %v1834 = vadd.f32 %v1833, %v1771
      %v1835 = vadd.f32 %v1834, %v1772
      %v1836 = vadd.f32 %v1835, %v1773
      %v1837 = vadd.f32 %v1836, %v1774
      %v1838 = vadd.f32 %v1837, %v1775
      %v1839 = vadd.f32 %v1838, %v1776
      %v1840 = vadd.f32 %v1839, %v1777
      %v1841 = vadd.f32 %v1840, %v1778
      %v1842 = vadd.f32 %v1841, %v1779
      %v1843 = vadd.f32 %v1842, %v1780
      %v1844 = vadd.f32 %v1843, %v1781
      %v1845 = vadd.f32 %v1844, %v1782
      %v1846 = vadd.f32 %v1845, %v1783
      %v1847 = vadd.f32 %v1846, %v1784
      %v1848 = vadd.f32 %v1847, %v1785
      %v1849 = vadd.f32 %v1848, %v1786
      %v1850 = vadd.f32 %v1849, %v1787
      %v1851 = vadd.f32 %v1850, %v1788
      %v1852 = vadd.f32 %v1851, %v1789
      %v1853 = vadd.f32 %v1852, %v1790
      %v1854 = vadd.f32 %v1853, %v1791
      %v1855 = vadd.f32 %v1854, %v1792
      %v1856 = vadd.f32 %v1855, %v1793
      %v1857 = vadd.f32 %v1856, %v1794
      %v1858 = vadd.f32 %v1857, %v1795
      %v1859 = vadd.f32 %v1858, %v1796
      %v1860 = vadd.f32 %v1859, %v1797
      %v1861 = vadd.f32 %v1860, %v1798
      %v1862 = vadd.f32 %v1861, %v1799
      %v1863 = vadd.f32 %v1862, %v1800
      %v1864 = vadd.f32 %v1863, %v1801
      %v1865 = vadd.f32 %v1864, %v1802
      %v1866 = vadd.f32 %v1865, %v1803
      %v1867 = vrot.slane %v1866, 4
      %v1868 = vadd.f32 %v1866, %v1867
      %v1869 = vrot.slane %v1868, 2
      %v1870 = vadd.f32 %v1868, %v1869
      %v1871 = vrot.slane %v1870, 1
      %v1872 = vadd.f32 %v1870, %v1871
      %v1873 = vmul.f32 %v1872, 0.001953125
      %v1874 = vsub.f32 %v1740, %v1873
      %v1875 = vsub.f32 %v1741, %v1873
      %v1876 = vsub.f32 %v1742, %v1873
      %v1877 = vsub.f32 %v1743, %v1873
      %v1878 = vsub.f32 %v1744, %v1873
      %v1879 = vsub.f32 %v1745, %v1873
      %v1880 = vsub.f32 %v1746, %v1873
      %v1881 = vsub.f32 %v1747, %v1873
      %v1882 = vsub.f32 %v1748, %v1873
      %v1883 = vsub.f32 %v1749, %v1873
      %v1884 = vsub.f32 %v1750, %v1873
      %v1885 = vsub.f32 %v1751, %v1873
      %v1886 = vsub.f32 %v1752, %v1873
      %v1887 = vsub.f32 %v1753, %v1873
      %v1888 = vsub.f32 %v1754, %v1873
      %v1889 = vsub.f32 %v1755, %v1873
      %v1890 = vsub.f32 %v1756, %v1873
      %v1891 = vsub.f32 %v1757, %v1873
      %v1892 = vsub.f32 %v1758, %v1873
      %v1893 = vsub.f32 %v1759, %v1873
      %v1894 = vsub.f32 %v1760, %v1873
      %v1895 = vsub.f32 %v1761, %v1873
      %v1896 = vsub.f32 %v1762, %v1873
      %v1897 = vsub.f32 %v1763, %v1873
      %v1898 = vsub.f32 %v1764, %v1873
      %v1899 = vsub.f32 %v1765, %v1873
      %v1900 = vsub.f32 %v1766, %v1873
      %v1901 = vsub.f32 %v1767, %v1873
      %v1902 = vsub.f32 %v1768, %v1873
      %v1903 = vsub.f32 %v1769, %v1873
      %v1904 = vsub.f32 %v1770, %v1873
      %v1905 = vsub.f32 %v1771, %v1873
      %v1906 = vsub.f32 %v1772, %v1873
      %v1907 = vsub.f32 %v1773, %v1873
      %v1908 = vsub.f32 %v1774, %v1873
      %v1909 = vsub.f32 %v1775, %v1873
      %v1910 = vsub.f32 %v1776, %v1873
      %v1911 = vsub.f32 %v1777, %v1873
      %v1912 = vsub.f32 %v1778, %v1873
      %v1913 = vsub.f32 %v1779, %v1873
      %v1914 = vsub.f32 %v1780, %v1873
      %v1915 = vsub.f32 %v1781, %v1873
      %v1916 = vsub.f32 %v1782, %v1873
      %v1917 = vsub.f32 %v1783, %v1873
      %v1918 = vsub.f32 %v1784, %v1873
      %v1919 = vsub.f32 %v1785, %v1873
      %v1920 = vsub.f32 %v1786, %v1873
      %v1921 = vsub.f32 %v1787, %v1873
      %v1922 = vsub.f32 %v1788, %v1873
      %v1923 = vsub.f32 %v1789, %v1873
      %v1924 = vsub.f32 %v1790, %v1873
      %v1925 = vsub.f32 %v1791, %v1873
      %v1926 = vsub.f32 %v1792, %v1873
      %v1927 = vsub.f32 %v1793, %v1873
      %v1928 = vsub.f32 %v1794, %v1873
      %v1929 = vsub.f32 %v1795, %v1873
      %v1930 = vsub.f32 %v1796, %v1873
      %v1931 = vsub.f32 %v1797, %v1873
      %v1932 = vsub.f32 %v1798, %v1873
      %v1933 = vsub.f32 %v1799, %v1873
      %v1934 = vsub.f32 %v1800, %v1873
      %v1935 = vsub.f32 %v1801, %v1873
      %v1936 = vsub.f32 %v1802, %v1873
      %v1937 = vsub.f32 %v1803, %v1873
      %v1938 = vmul.f32 %v1874, %v1874
      %v1939 = vmul.f32 %v1875, %v1875
      %v1940 = vmul.f32 %v1876, %v1876
      %v1941 = vmul.f32 %v1877, %v1877
      %v1942 = vmul.f32 %v1878, %v1878
      %v1943 = vmul.f32 %v1879, %v1879
      %v1944 = vmul.f32 %v1880, %v1880
      %v1945 = vmul.f32 %v1881, %v1881
      %v1946 = vmul.f32 %v1882, %v1882
      %v1947 = vmul.f32 %v1883, %v1883
      %v1948 = vmul.f32 %v1884, %v1884
      %v1949 = vmul.f32 %v1885, %v1885
      %v1950 = vmul.f32 %v1886, %v1886
      %v1951 = vmul.f32 %v1887, %v1887
      %v1952 = vmul.f32 %v1888, %v1888
      %v1953 = vmul.f32 %v1889, %v1889
      %v1954 = vmul.f32 %v1890, %v1890
      %v1955 = vmul.f32 %v1891, %v1891
      %v1956 = vmul.f32 %v1892, %v1892
      %v1957 = vmul.f32 %v1893, %v1893
      %v1958 = vmul.f32 %v1894, %v1894
      %v1959 = vmul.f32 %v1895, %v1895
      %v1960 = vmul.f32 %v1896, %v1896
      %v1961 = vmul.f32 %v1897, %v1897
      %v1962 = vmul.f32 %v1898, %v1898
      %v1963 = vmul.f32 %v1899, %v1899
      %v1964 = vmul.f32 %v1900, %v1900
      %v1965 = vmul.f32 %v1901, %v1901
      %v1966 = vmul.f32 %v1902, %v1902
      %v1967 = vmul.f32 %v1903, %v1903
      %v1968 = vmul.f32 %v1904, %v1904
      %v1969 = vmul.f32 %v1905, %v1905
      %v1970 = vmul.f32 %v1906, %v1906
      %v1971 = vmul.f32 %v1907, %v1907
      %v1972 = vmul.f32 %v1908, %v1908
      %v1973 = vmul.f32 %v1909, %v1909
      %v1974 = vmul.f32 %v1910, %v1910
      %v1975 = vmul.f32 %v1911, %v1911
      %v1976 = vmul.f32 %v1912, %v1912
      %v1977 = vmul.f32 %v1913, %v1913
      %v1978 = vmul.f32 %v1914, %v1914
      %v1979 = vmul.f32 %v1915, %v1915
      %v1980 = vmul.f32 %v1916, %v1916
      %v1981 = vmul.f32 %v1917, %v1917
      %v1982 = vmul.f32 %v1918, %v1918
      %v1983 = vmul.f32 %v1919, %v1919
      %v1984 = vmul.f32 %v1920, %v1920
      %v1985 = vmul.f32 %v1921, %v1921
      %v1986 = vmul.f32 %v1922, %v1922
      %v1987 = vmul.f32 %v1923, %v1923
      %v1988 = vmul.f32 %v1924, %v1924
      %v1989 = vmul.f32 %v1925, %v1925
      %v1990 = vmul.f32 %v1926, %v1926
      %v1991 = vmul.f32 %v1927, %v1927
      %v1992 = vmul.f32 %v1928, %v1928
      %v1993 = vmul.f32 %v1929, %v1929
      %v1994 = vmul.f32 %v1930, %v1930
      %v1995 = vmul.f32 %v1931, %v1931
      %v1996 = vmul.f32 %v1932, %v1932
      %v1997 = vmul.f32 %v1933, %v1933
      %v1998 = vmul.f32 %v1934, %v1934
      %v1999 = vmul.f32 %v1935, %v1935
      %v2000 = vmul.f32 %v1936, %v1936
      %v2001 = vmul.f32 %v1937, %v1937
      %v2002 = vadd.f32 %v1938, %v1939
      %v2003 = vadd.f32 %v2002, %v1940
      %v2004 = vadd.f32 %v2003, %v1941
      %v2005 = vadd.f32 %v2004, %v1942
      %v2006 = vadd.f32 %v2005, %v1943
      %v2007 = vadd.f32 %v2006, %v1944
      %v2008 = vadd.f32 %v2007, %v1945
      %v2009 = vadd.f32 %v2008, %v1946
      %v2010 = vadd.f32 %v2009, %v1947
      %v2011 = vadd.f32 %v2010, %v1948
      %v2012 = vadd.f32 %v2011, %v1949
      %v2013 = vadd.f32 %v2012, %v1950
      %v2014 = vadd.f32 %v2013, %v1951
      %v2015 = vadd.f32 %v2014, %v1952
      %v2016 = vadd.f32 %v2015, %v1953
      %v2017 = vadd.f32 %v2016, %v1954
      %v2018 = vadd.f32 %v2017, %v1955
      %v2019 = vadd.f32 %v2018, %v1956
      %v2020 = vadd.f32 %v2019, %v1957
      %v2021 = vadd.f32 %v2020, %v1958
      %v2022 = vadd.f32 %v2021, %v1959
      %v2023 = vadd.f32 %v2022, %v1960
      %v2024 = vadd.f32 %v2023, %v1961
      %v2025 = vadd.f32 %v2024, %v1962
      %v2026 = vadd.f32 %v2025, %v1963
      %v2027 = vadd.f32 %v2026, %v1964
      %v2028 = vadd.f32 %v2027, %v1965
      %v2029 = vadd.f32 %v2028, %v1966
      %v2030 = vadd.f32 %v2029, %v1967
      %v2031 = vadd.f32 %v2030, %v1968
      %v2032 = vadd.f32 %v2031, %v1969
      %v2033 = vadd.f32 %v2032, %v1970
      %v2034 = vadd.f32 %v2033, %v1971
      %v2035 = vadd.f32 %v2034, %v1972
      %v2036 = vadd.f32 %v2035, %v1973
      %v2037 = vadd.f32 %v2036, %v1974
      %v2038 = vadd.f32 %v2037, %v1975
      %v2039 = vadd.f32 %v2038, %v1976
      %v2040 = vadd.f32 %v2039, %v1977
      %v2041 = vadd.f32 %v2040, %v1978
      %v2042 = vadd.f32 %v2041, %v1979
      %v2043 = vadd.f32 %v2042, %v1980
      %v2044 = vadd.f32 %v2043, %v1981
      %v2045 = vadd.f32 %v2044, %v1982
      %v2046 = vadd.f32 %v2045, %v1983
      %v2047 = vadd.f32 %v2046, %v1984
      %v2048 = vadd.f32 %v2047, %v1985
      %v2049 = vadd.f32 %v2048, %v1986
      %v2050 = vadd.f32 %v2049, %v1987
      %v2051 = vadd.f32 %v2050, %v1988
      %v2052 = vadd.f32 %v2051, %v1989
      %v2053 = vadd.f32 %v2052, %v1990
      %v2054 = vadd.f32 %v2053, %v1991
      %v2055 = vadd.f32 %v2054, %v1992
      %v2056 = vadd.f32 %v2055, %v1993
      %v2057 = vadd.f32 %v2056, %v1994
      %v2058 = vadd.f32 %v2057, %v1995
      %v2059 = vadd.f32 %v2058, %v1996
      %v2060 = vadd.f32 %v2059, %v1997
      %v2061 = vadd.f32 %v2060, %v1998
      %v2062 = vadd.f32 %v2061, %v1999
      %v2063 = vadd.f32 %v2062, %v2000
      %v2064 = vadd.f32 %v2063, %v2001
      %v2065 = vrot.slane %v2064, 4
      %v2066 = vadd.f32 %v2064, %v2065
      %v2067 = vrot.slane %v2066, 2
      %v2068 = vadd.f32 %v2066, %v2067
      %v2069 = vrot.slane %v2068, 1
      %v2070 = vadd.f32 %v2068, %v2069
      %vm2071 = vcmask 1040384
      %v2072 = vsel %vm2071, %v1872, %v2070
      %2073 = vst [vmem:[%s177] sm:$0x3] %v2072
      %p2074 = scmp.lt.s32.totalorder %s17, 1
      %s2075 = scalar_select %p2074, %s17, 1
      %p2076 = scmp.lt.s32.totalorder %s18, 1
      %s2077 = scalar_select %p2076, %s18, 1
      %s2078 = smul.addr %s2075, 2
      %s2079 = sadd.s32 %s2077, %s2078
      %s2080 = smul.addr %s2079, 2
      %s2081 = scalar_lea.vmem %s2, %s2080
      // Predicated region
      $region29: #{upsamp_block_forward.2} parent=27 // pred_check
        %p2082 = pneg %p94
      $region30: #{upsamp_block_forward.2} parent=27 // pred_check_branch
        %2084 = sbr.rel (%p2082) target = $region32
      $region31: #{upsamp_block_forward.2} parent=27 // pred_region
        _
      $region32: #{upsamp_block_forward.2} parent=27 // pred_fallthru
        _
    $region28: #{upsamp_block_forward.2} parent=5 // pred_fallthru
      _
    %p2085 = scmp.le.s32.totalorder 2, %s8
    // Predicated region
    $region33: #{upsamp_block_forward.2} parent=5 // pred_check
      %p2086 = pneg %p2085
    $region34: #{upsamp_block_forward.2} parent=5 // pred_check_branch
      %2088 = sbr.rel (%p2086) target = $region36
    $region35: #{upsamp_block_forward.2} parent=5 // pred_region
      %s2089 = ssub.s32 %s8, 2
      // Predicated region
      $region37: #{upsamp_block_forward.2} parent=35 // pred_check
        %p2090 = pneg %p100
      $region38: #{upsamp_block_forward.2} parent=35 // pred_check_branch
        %2092 = sbr.rel (%p2090) target = $region40
      $region39: #{upsamp_block_forward.2} parent=35 // pred_region
        %p2093 = scmp.lt.s32.totalorder %s19, 1
        %s2094 = scalar_select %p2093, %s19, 1
        %p2095 = scmp.lt.s32.totalorder %s20, 1
        %s2096 = scalar_select %p2095, %s20, 1
        %s2097 = smul.addr %s2094, 2
        %s2098 = sadd.s32 %s2096, %s2097
        %s2099 = smul.addr %s2098, 2
        %s2100 = scalar_lea.vmem %s2, %s2099
      $region40: #{upsamp_block_forward.2} parent=35 // pred_fallthru
        _
    $region36: #{upsamp_block_forward.2} parent=5 // pred_fallthru
      _
  $region6: #{upsamp_block_forward.2} parent=0 // loop_footer
    %s12 = sadd.s32 1, %s8
  $region7: #{upsamp_block_forward.2} parent=0 // loop_footer_branch
    %7 = sbr.rel target = $region3
  $region8: #{upsamp_block_forward.2} parent=0 // loop_exit
    _

// kernel: upsamp_block_forward.3
$region0: #{upsamp_block_forward.3}
  #allocation0 [shape = 'u32[]', space=smem, size = 0x4, offset = 0x4, fixed_abs, tag = 'smem constant byte address 0x4 - core index']
  #allocation1 [shape = 'u32[144,128]{1,0:T(1,128)}', space=vmem, size = 0x12000, scoped, tag = 'internal scratch']
  %s0 = inlined_call_operand.vmem [shape: bf16[2,2,576,12], index: 0, kind: input, shape index: {}]
  %s1 = inlined_call_operand.vmem [shape: bf16[3,12,128], index: 1, kind: input, shape index: {}]
  %s2 = inlined_call_operand.vmem [shape: f32[1,128], index: 2, kind: input, shape index: {}]
  %s3 = inlined_call_operand.vmem [shape: f32[1,128], index: 3, kind: input, shape index: {}]
  %s4 = inlined_call_operand.vmem [shape: f32[2048,128], index: 4, kind: output, shape index: {}]
  %s5 = sld [smem:[#allocation0]]
  $region49: #{upsamp_block_forward.3} parent=0
    _
  %s7 = ssub.s32 1, %s5
  %s8 = scalar_select 0, %s7, %s5
  loop: start=0, step=1, limit=6
  $region2: #{upsamp_block_forward.3} parent=0 // loop_pre_header
    _
  $region3: #{upsamp_block_forward.3} parent=0 // loop_header
    %s10 = sphi 0, %s14
    %p11 = scmp.ge.s32.totalorder %s10, 6
    %s17 = sphi 0, %s29
    %s18 = sphi 0, %s25
    %s19 = sphi 0, %s17
    %s20 = sphi 0, %s18
    %s21 = sphi 0, %s19
    %s22 = sphi 0, %s20
    %s34 = sphi 0, %s36
    %s37 = sphi 0, %s34
    %s38 = sphi 0, %s37
    %s54 = sphi 0, %s38
    %s58 = sphi 0, %s58
    %s60 = sphi 0, %s58
    %s61 = sphi 0, %s60
    %s75 = sphi 0, %s61
    %s79 = sphi 0, %s79
    %s81 = sphi 0, %s79
    %s82 = sphi 0, %s81
    %s96 = sphi 0, %s82
    %s100 = sphi 0, %s100
    %s102 = sphi 0, %s100
    %s103 = sphi 0, %s102
    %s117 = sphi 0, %s103
    %s127 = sphi 0, %s129
    %s130 = sphi 0, %s127
    %s131 = sphi 0, %s130
    %s147 = sphi 0, %s131
  $region4: #{upsamp_block_forward.3} parent=0 // loop_header_branch
    %13 = sbr.rel (%p11) target = $region8
  $region5: #{upsamp_block_forward.3} parent=0 // loop_body
    %s15 = ssub.s32 %s10, 1
    %s16 = ssub.s32 %s10, 2
    %s23 = sadd.s32 1, %s18
    %p24 = scmp.ge.s32.totalorder %s23, 2
    %s25 = scalar_select %p24, 0, %s23
    %s26 = sadd.s32 1, %s17
    %s27 = scalar_select %p24, %s26, %s17
    %p28 = scmp.ge.s32.totalorder %s27, 2
    %s29 = scalar_select %p28, 0, %s27
    %s30 = ssub.s32 %s17, %s29
    %s31 = ssub.s32 %s18, %s25
    %s32 = sor.u32 %s30, %s31
    %p33 = scmp.eq.s32.totalorder %s32, 0
    %s35 = sadd.s32 %s34, 1
    %s36 = scalar_select %p33, %s34, %s35
    %p39 = pneg %p33
    %p40 = scmp.eq.s32.totalorder %s10, 3
    %p41 = por %p39, %p40
    %p42 = scmp.ne.s32.totalorder %s34, %s37
    %p43 = scmp.eq.s32.totalorder %s10, 0
    %p44 = por %p42, %p43
    %p45 = scmp.ne.s32.totalorder %s34, %s37
    %p46 = scmp.eq.s32.totalorder %s15, 3
    %p47 = por %p45, %p46
    %p48 = scmp.ne.s32.totalorder %s37, %s38
    %p49 = scmp.eq.s32.totalorder %s15, 0
    %p50 = por %p48, %p49
    %p51 = scmp.ne.s32.totalorder %s37, %s38
    %p52 = scmp.eq.s32.totalorder %s16, 3
    %p53 = por %p51, %p52
    %p55 = scmp.ne.s32.totalorder %s38, %s54
    %p56 = scmp.eq.s32.totalorder %s16, 0
    %p57 = por %p55, %p56
    %s59 = sadd.s32 %s58, 1
    %p62 = scmp.eq.s32.totalorder %s10, 3
    %p63 = scmp.ne.s32.totalorder %s58, %s60
    %p64 = scmp.eq.s32.totalorder %s10, 0
    %p65 = por %p63, %p64
    %p66 = scmp.ne.s32.totalorder %s58, %s60
    %p67 = scmp.eq.s32.totalorder %s15, 3
    %p68 = por %p66, %p67
    %p69 = scmp.ne.s32.totalorder %s60, %s61
    %p70 = scmp.eq.s32.totalorder %s15, 0
    %p71 = por %p69, %p70
    %p72 = scmp.ne.s32.totalorder %s60, %s61
    %p73 = scmp.eq.s32.totalorder %s16, 3
    %p74 = por %p72, %p73
    %p76 = scmp.ne.s32.totalorder %s61, %s75
    %p77 = scmp.eq.s32.totalorder %s16, 0
    %p78 = por %p76, %p77
    %s80 = sadd.s32 %s79, 1
    %p83 = scmp.eq.s32.totalorder %s10, 3
    %p84 = scmp.ne.s32.totalorder %s79, %s81
    %p85 = scmp.eq.s32.totalorder %s10, 0
    %p86 = por %p84, %p85
    %p87 = scmp.ne.s32.totalorder %s79, %s81
    %p88 = scmp.eq.s32.totalorder %s15, 3
    %p89 = por %p87, %p88
    %p90 = scmp.ne.s32.totalorder %s81, %s82
    %p91 = scmp.eq.s32.totalorder %s15, 0
    %p92 = por %p90, %p91
    %p93 = scmp.ne.s32.totalorder %s81, %s82
    %p94 = scmp.eq.s32.totalorder %s16, 3
    %p95 = por %p93, %p94
    %p97 = scmp.ne.s32.totalorder %s82, %s96
    %p98 = scmp.eq.s32.totalorder %s16, 0
    %p99 = por %p97, %p98
    %s101 = sadd.s32 %s100, 1
    %p104 = scmp.eq.s32.totalorder %s10, 3
    %p105 = scmp.ne.s32.totalorder %s100, %s102
    %p106 = scmp.eq.s32.totalorder %s10, 0
    %p107 = por %p105, %p106
    %p108 = scmp.ne.s32.totalorder %s100, %s102
    %p109 = scmp.eq.s32.totalorder %s15, 3
    %p110 = por %p108, %p109
    %p111 = scmp.ne.s32.totalorder %s102, %s103
    %p112 = scmp.eq.s32.totalorder %s15, 0
    %p113 = por %p111, %p112
    %p114 = scmp.ne.s32.totalorder %s102, %s103
    %p115 = scmp.eq.s32.totalorder %s16, 3
    %p116 = por %p114, %p115
    %p118 = scmp.ne.s32.totalorder %s103, %s117
    %p119 = scmp.eq.s32.totalorder %s16, 0
    %p120 = por %p118, %p119
    %s121 = smul.u32 %s17, 2
    %s122 = sadd.s32 %s121, %s18
    %s123 = smul.u32 %s29, 2
    %s124 = sadd.s32 %s123, %s25
    %s125 = ssub.s32 %s122, %s124
    %p126 = scmp.eq.s32.totalorder %s125, 0
    %s128 = sadd.s32 %s127, 1
    %s129 = scalar_select %p126, %s127, %s128
    %p132 = pneg %p126
    %p133 = scmp.eq.s32.totalorder %s10, 3
    %p134 = por %p132, %p133
    %p135 = scmp.ne.s32.totalorder %s127, %s130
    %p136 = scmp.eq.s32.totalorder %s10, 0
    %p137 = por %p135, %p136
    %p138 = scmp.ne.s32.totalorder %s127, %s130
    %p139 = scmp.eq.s32.totalorder %s15, 3
    %p140 = por %p138, %p139
    %p141 = scmp.ne.s32.totalorder %s130, %s131
    %p142 = scmp.eq.s32.totalorder %s15, 0
    %p143 = por %p141, %p142
    %p144 = scmp.ne.s32.totalorder %s130, %s131
    %p145 = scmp.eq.s32.totalorder %s16, 3
    %p146 = por %p144, %p145
    %p148 = scmp.ne.s32.totalorder %s131, %s147
    %p149 = scmp.eq.s32.totalorder %s16, 0
    %p150 = por %p148, %p149
    %p151 = scmp.le.s32.totalorder 1, %s10
    %p152 = scmp.lt.s32.totalorder %s10, 5
    %p153 = pnand %p151, %p152
    %p154 = pneg %p153
    // Predicated region
    $region9: #{upsamp_block_forward.3} parent=5 // pred_check
      _
    $region10: #{upsamp_block_forward.3} parent=5 // pred_check_branch
      %156 = sbr.rel (%p153) target = $region12
    $region11: #{upsamp_block_forward.3} parent=5 // pred_region
      %s157 = ssub.s32 %s10, 1
      // Predicated region
      $region13: #{upsamp_block_forward.3} parent=11 // pred_check
        %p158 = pneg %p71
      $region14: #{upsamp_block_forward.3} parent=11 // pred_check_branch
        %160 = sbr.rel (%p158) target = $region16
      $region15: #{upsamp_block_forward.3} parent=11 // pred_region
        _
      $region16: #{upsamp_block_forward.3} parent=11 // pred_fallthru
        _
      // Predicated region
      $region17: #{upsamp_block_forward.3} parent=11 // pred_check
        %p161 = pneg %p92
      $region18: #{upsamp_block_forward.3} parent=11 // pred_check_branch
        %163 = sbr.rel (%p161) target = $region20
      $region19: #{upsamp_block_forward.3} parent=11 // pred_region
        _
      $region20: #{upsamp_block_forward.3} parent=11 // pred_fallthru
        _
      // Predicated region
      $region21: #{upsamp_block_forward.3} parent=11 // pred_check
        %p164 = pneg %p113
      $region22: #{upsamp_block_forward.3} parent=11 // pred_check_branch
        %166 = sbr.rel (%p164) target = $region24
      $region23: #{upsamp_block_forward.3} parent=11 // pred_region
        _
      $region24: #{upsamp_block_forward.3} parent=11 // pred_fallthru
        _
    $region12: #{upsamp_block_forward.3} parent=5 // pred_fallthru
      _
    %p167 = scmp.lt.s32.totalorder %s10, 4
    // Predicated region
    $region25: #{upsamp_block_forward.3} parent=5 // pred_check
      %p168 = pneg %p167
    $region26: #{upsamp_block_forward.3} parent=5 // pred_check_branch
      %170 = sbr.rel (%p168) target = $region28
    $region27: #{upsamp_block_forward.3} parent=5 // pred_region
      // Predicated region
      $region29: #{upsamp_block_forward.3} parent=27 // pred_check
        %p171 = pneg %p44
      $region30: #{upsamp_block_forward.3} parent=27 // pred_check_branch
        %173 = sbr.rel (%p171) target = $region32
      $region31: #{upsamp_block_forward.3} parent=27 // pred_region
        %p174 = scmp.lt.s32.totalorder %s17, 1
        %s175 = scalar_select %p174, %s17, 1
        %p176 = scmp.lt.s32.totalorder %s18, 1
        %s177 = scalar_select %p176, %s18, 1
        %s178 = smul.addr %s177, 72
        %s179 = smul.addr %s175, 144
        %s180 = sadd.s32 %s178, %s179
        %s181 = smul.addr %s180, 4
        %s182 = scalar_lea.vmem %s0, %s181
      $region32: #{upsamp_block_forward.3} parent=27 // pred_fallthru
        _
    $region28: #{upsamp_block_forward.3} parent=5 // pred_fallthru
      _
    %p183 = scmp.le.s32.totalorder 1, %s10
    %p184 = scmp.lt.s32.totalorder %s10, 5
    %p185 = pnand %p183, %p184
    %p186 = pneg %p185
    // Predicated region
    $region33: #{upsamp_block_forward.3} parent=5 // pred_check
      _
    $region34: #{upsamp_block_forward.3} parent=5 // pred_check_branch
      %188 = sbr.rel (%p185) target = $region36
    $region35: #{upsamp_block_forward.3} parent=5 // pred_region
      %s189 = ssub.s32 %s10, 1
      %p190 = scmp.lt.s32.totalorder %s19, 1
      %s191 = scalar_select %p190, %s19, 1
      %p192 = scmp.lt.s32.totalorder %s20, 1
      %s193 = scalar_select %p192, %s20, 1
      %s194 = smul.addr %s193, 72
      %s195 = smul.addr %s191, 144
      %s196 = sadd.s32 %s194, %s195
      %s197 = smul.addr %s196, 4
      %s198 = scalar_lea.vmem %s0, %s197
      %p199 = pneg %p50
      %p200 = pneg %p47
      %p201 = pneg %p71
      %p202 = pneg %p68
      %p203 = pneg %p92
      %p204 = pneg %p89
      %p205 = pneg %p113
      %p206 = pneg %p110
      %p207 = pneg %p143
      %p208 = pneg %p140
      %s209 = smul.u32 %s19, 2
      %s210 = sadd.s32 %s209, %s20
      %s211 = smul.u32 64, %s210
      %p212 = scmp.lt.s32.totalorder %s211, 255
      %s213 = scalar_select %p212, %s211, 255
      %s214 = smul.addr %s213, 8
      %s215 = scalar_lea.vmem %s4, %s214
      %p216 = scmp.lt.s32.totalorder %s19, 1
      %s217 = scalar_select %p216, %s19, 1
      %p218 = scmp.lt.s32.totalorder %s20, 1
      %s219 = scalar_select %p218, %s20, 1
      %s220 = smul.addr %s219, 72
      %s221 = smul.addr %s217, 144
      %s222 = sadd.s32 %s220, %s221
      %s223 = smul.addr %s222, 4
      %s224 = scalar_lea.vmem %s0, %s223
      %s225 = smul.u32 %s19, 2
      %s226 = sadd.s32 %s225, %s20
      %s227 = smul.u32 64, %s226
      %p228 = scmp.lt.s32.totalorder %s227, 255
      %s229 = scalar_select %p228, %s227, 255
      %s230 = smul.addr %s229, 8
      %s231 = scalar_lea.vmem %s4, %s230
      %s232 = smul.u32 %s19, 2
      %s233 = sadd.s32 %s232, %s20
      %s234 = smul.u32 64, %s233
      %v236 = vld [vmem:[%s224] sm:$0xf]
      %v237 = vld [vmem:[%s224 + $0x4] sm:$0xf]
      %v238 = vld [vmem:[%s224 + $0x8] sm:$0xf]
      %v239 = vld [vmem:[%s224 + $0xc] sm:$0xf]
      %v240 = vld [vmem:[%s224 + $0x10] sm:$0xf]
      %v241 = vld [vmem:[%s224 + $0x14] sm:$0xf]
      %v242 = vld [vmem:[%s224 + $0x18] sm:$0xf]
      %v243 = vld [vmem:[%s224 + $0x1c] sm:$0xf]
      %v244 = vld [vmem:[%s224 + $0x20] sm:$0xf]
      %v245 = vld [vmem:[%s224 + $0x24] sm:$0xf]
      %v246 = vld [vmem:[%s224 + $0x28] sm:$0xf]
      %v247 = vld [vmem:[%s224 + $0x2c] sm:$0xf]
      %v248 = vld [vmem:[%s224 + $0x30] sm:$0xf]
      %v249 = vld [vmem:[%s224 + $0x34] sm:$0xf]
      %v250 = vld [vmem:[%s224 + $0x38] sm:$0xf]
      %v251 = vld [vmem:[%s224 + $0x3c] sm:$0xf]
      %v252 = vld [vmem:[%s224 + $0x40] sm:$0xf]
      %v253 = vld [vmem:[%s224 + $0x44] sm:$0xf]
      %v254 = vld [vmem:[%s224 + $0x48] sm:$0xf]
      %v255 = vld [vmem:[%s224 + $0x4c] sm:$0xf]
      %v256 = vld [vmem:[%s224 + $0x50] sm:$0xf]
      %v257 = vld [vmem:[%s224 + $0x54] sm:$0xf]
      %v258 = vld [vmem:[%s224 + $0x58] sm:$0xf]
      %v259 = vld [vmem:[%s224 + $0x5c] sm:$0xf]
      %v260 = vld [vmem:[%s224 + $0x60] sm:$0xf]
      %v261 = vld [vmem:[%s224 + $0x64] sm:$0xf]
      %v262 = vld [vmem:[%s224 + $0x68] sm:$0xf]
      %v263 = vld [vmem:[%s224 + $0x6c] sm:$0xf]
      %v264 = vld [vmem:[%s224 + $0x70] sm:$0xf]
      %v265 = vld [vmem:[%s224 + $0x74] sm:$0xf]
      %v266 = vld [vmem:[%s224 + $0x78] sm:$0xf]
      %v267 = vld [vmem:[%s224 + $0x7c] sm:$0xf]
      %v268 = vld [vmem:[%s224 + $0x80] sm:$0xf]
      %v269 = vld [vmem:[%s224 + $0x84] sm:$0xf]
      %v270 = vld [vmem:[%s224 + $0x88] sm:$0xf]
      %v271 = vld [vmem:[%s224 + $0x8c] sm:$0xf]
      %v272 = vld [vmem:[%s224 + $0x90] sm:$0xf]
      %v273 = vld [vmem:[%s224 + $0x94] sm:$0xf]
      %v274 = vld [vmem:[%s224 + $0x98] sm:$0xf]
      %v275 = vld [vmem:[%s224 + $0x9c] sm:$0xf]
      %v276 = vld [vmem:[%s224 + $0xa0] sm:$0xf]
      %v277 = vld [vmem:[%s224 + $0xa4] sm:$0xf]
      %v278 = vld [vmem:[%s224 + $0xa8] sm:$0xf]
      %v279 = vld [vmem:[%s224 + $0xac] sm:$0xf]
      %v280 = vld [vmem:[%s224 + $0xb0] sm:$0xf]
      %v281 = vld [vmem:[%s224 + $0xb4] sm:$0xf]
      %v282 = vld [vmem:[%s224 + $0xb8] sm:$0xf]
      %v283 = vld [vmem:[%s224 + $0xbc] sm:$0xf]
      %v284 = vld [vmem:[%s224 + $0xc0] sm:$0xf]
      %v285 = vld [vmem:[%s224 + $0xc4] sm:$0xf]
      %v286 = vld [vmem:[%s224 + $0xc8] sm:$0xf]
      %v287 = vld [vmem:[%s224 + $0xcc] sm:$0xf]
      %v288 = vld [vmem:[%s224 + $0xd0] sm:$0xf]
      %v289 = vld [vmem:[%s224 + $0xd4] sm:$0xf]
      %v290 = vld [vmem:[%s224 + $0xd8] sm:$0xf]
      %v291 = vld [vmem:[%s224 + $0xdc] sm:$0xf]
      %v292 = vld [vmem:[%s224 + $0xe0] sm:$0xf]
      %v293 = vld [vmem:[%s224 + $0xe4] sm:$0xf]
      %v294 = vld [vmem:[%s224 + $0xe8] sm:$0xf]
      %v295 = vld [vmem:[%s224 + $0xec] sm:$0xf]
      %v296 = vld [vmem:[%s224 + $0xf0] sm:$0xf]
      %v297 = vld [vmem:[%s224 + $0xf4] sm:$0xf]
      %v298 = vld [vmem:[%s224 + $0xf8] sm:$0xf]
      %v299 = vld [vmem:[%s224 + $0xfc] sm:$0xf]
      %v300 = vld [vmem:[%s1] sm:$0xf]
      %v301 = vld [vmem:[%s1 + $0x4] sm:$0x3]
      %v302 = vld [vmem:[%s224 + $0x100] sm:$0xf]
      %v303 = vld [vmem:[%s224 + $0x104] sm:$0xf]
      %v304 = vld [vmem:[%s224 + $0x108] sm:$0xf]
      %v305 = vld [vmem:[%s224 + $0x10c] sm:$0xf]
      %s306 = scalar_lea.vmem %s1, 8
      %v307 = vld [vmem:[%s306] sm:$0xf]
      %v308 = vld [vmem:[%s306 + $0x4] sm:$0x3]
      %v373 = vunpack.c.l.b16 %v240
      %v374 = vunpack.c.l.b16 %v241
      %v375 = vunpack.c.l.b16 %v242
      %v376 = vunpack.c.l.b16 %v243
      %v377 = vunpack.c.l.b16 %v244
      %v378 = vunpack.c.l.b16 %v245
      %v379 = vunpack.c.l.b16 %v246
      %v380 = vunpack.c.l.b16 %v247
      %v381 = vunpack.c.l.b16 %v248
      %v382 = vunpack.c.l.b16 %v249
      %v383 = vunpack.c.l.b16 %v250
      %v384 = vunpack.c.l.b16 %v251
      %v385 = vunpack.c.l.b16 %v252
      %v386 = vunpack.c.l.b16 %v253
      %v387 = vunpack.c.l.b16 %v254
      %v388 = vunpack.c.l.b16 %v255
      %v389 = vunpack.c.l.b16 %v256
      %v390 = vunpack.c.l.b16 %v257
      %v391 = vunpack.c.l.b16 %v258
      %v392 = vunpack.c.l.b16 %v259
      %v393 = vunpack.c.l.b16 %v260
      %v394 = vunpack.c.l.b16 %v261
      %v395 = vunpack.c.l.b16 %v262
      %v396 = vunpack.c.l.b16 %v263
      %v397 = vunpack.c.l.b16 %v264
      %v398 = vunpack.c.l.b16 %v265
      %v399 = vunpack.c.l.b16 %v266
      %v400 = vunpack.c.l.b16 %v267
      %v401 = vunpack.c.l.b16 %v268
      %v402 = vunpack.c.l.b16 %v269
      %v403 = vunpack.c.l.b16 %v270
      %v404 = vunpack.c.l.b16 %v271
      %v405 = vunpack.c.l.b16 %v272
      %v406 = vunpack.c.l.b16 %v273
      %v407 = vunpack.c.l.b16 %v274
      %v408 = vunpack.c.l.b16 %v275
      %v409 = vunpack.c.l.b16 %v276
      %v410 = vunpack.c.l.b16 %v277
      %v411 = vunpack.c.l.b16 %v278
      %v412 = vunpack.c.l.b16 %v279
      %v413 = vunpack.c.l.b16 %v280
      %v414 = vunpack.c.l.b16 %v281
      %v415 = vunpack.c.l.b16 %v282
      %v416 = vunpack.c.l.b16 %v283
      %v417 = vunpack.c.l.b16 %v284
      %v418 = vunpack.c.l.b16 %v285
      %v419 = vunpack.c.l.b16 %v286
      %v420 = vunpack.c.l.b16 %v287
      %v421 = vunpack.c.l.b16 %v288
      %v422 = vunpack.c.l.b16 %v289
      %v423 = vunpack.c.l.b16 %v290
      %v424 = vunpack.c.l.b16 %v291
      %v425 = vunpack.c.l.b16 %v292
      %v426 = vunpack.c.l.b16 %v293
      %v427 = vunpack.c.l.b16 %v294
      %v428 = vunpack.c.l.b16 %v295
      %v429 = vunpack.c.l.b16 %v296
      %v430 = vunpack.c.l.b16 %v297
      %v431 = vunpack.c.l.b16 %v298
      %v432 = vunpack.c.l.b16 %v299
      %v433 = vunpack.c.l.b16 %v302
      %v434 = vunpack.c.l.b16 %v303
      %v435 = vunpack.c.l.b16 %v304
      %v436 = vunpack.c.l.b16 %v305
      %v437 = vpack.c.b16 %v374, %v373
      %v438 = vpack.c.b16 %v376, %v375
      %v439 = vpack.c.b16 %v378, %v377
      %v440 = vpack.c.b16 %v380, %v379
      %v441 = vpack.c.b16 %v382, %v381
      %v442 = vpack.c.b16 %v384, %v383
      %v443 = vpack.c.b16 %v386, %v385
      %v444 = vpack.c.b16 %v388, %v387
      %v445 = vpack.c.b16 %v390, %v389
      %v446 = vpack.c.b16 %v392, %v391
      %v447 = vpack.c.b16 %v394, %v393
      %v448 = vpack.c.b16 %v396, %v395
      %v449 = vpack.c.b16 %v398, %v397
      %v450 = vpack.c.b16 %v400, %v399
      %v451 = vpack.c.b16 %v402, %v401
      %v452 = vpack.c.b16 %v404, %v403
      %v453 = vpack.c.b16 %v406, %v405
      %v454 = vpack.c.b16 %v408, %v407
      %v455 = vpack.c.b16 %v410, %v409
      %v456 = vpack.c.b16 %v412, %v411
      %v457 = vpack.c.b16 %v414, %v413
      %v458 = vpack.c.b16 %v416, %v415
      %v459 = vpack.c.b16 %v418, %v417
      %v460 = vpack.c.b16 %v420, %v419
      %v461 = vpack.c.b16 %v422, %v421
      %v462 = vpack.c.b16 %v424, %v423
      %v463 = vpack.c.b16 %v426, %v425
      %v464 = vpack.c.b16 %v428, %v427
      %v465 = vpack.c.b16 %v430, %v429
      %v466 = vpack.c.b16 %v432, %v431
      %v467 = vpack.c.b16 %v434, %v433
      %v468 = vpack.c.b16 %v436, %v435
      %v471 = vunpack.c.l.b16 %v307
      %v472 = vunpack.c.l.b16 %v308
      %v473 = vpack.c.b16 %v472, %v471
      %vm474 = vcmask 97280
      %v476 = vsel %vm474, %v437, 0
      %v479 = vsel %vm474, %v438, 0
      %v482 = vsel %vm474, %v439, 0
      %v485 = vsel %vm474, %v440, 0
      %v488 = vsel %vm474, %v441, 0
      %v491 = vsel %vm474, %v442, 0
      %v494 = vsel %vm474, %v443, 0
      %v497 = vsel %vm474, %v444, 0
      %v500 = vsel %vm474, %v445, 0
      %v503 = vsel %vm474, %v446, 0
      %v506 = vsel %vm474, %v447, 0
      %v509 = vsel %vm474, %v448, 0
      %v512 = vsel %vm474, %v449, 0
      %v515 = vsel %vm474, %v450, 0
      %v518 = vsel %vm474, %v451, 0
      %v521 = vsel %vm474, %v452, 0
      %v524 = vsel %vm474, %v453, 0
      %v527 = vsel %vm474, %v454, 0
      %v530 = vsel %vm474, %v455, 0
      %v533 = vsel %vm474, %v456, 0
      %v536 = vsel %vm474, %v457, 0
      %v539 = vsel %vm474, %v458, 0
      %v542 = vsel %vm474, %v459, 0
      %v545 = vsel %vm474, %v460, 0
      %v548 = vsel %vm474, %v461, 0
      %v551 = vsel %vm474, %v462, 0
      %v554 = vsel %vm474, %v463, 0
      %v557 = vsel %vm474, %v464, 0
      %v560 = vsel %vm474, %v465, 0
      %v563 = vsel %vm474, %v466, 0
      %v566 = vsel %vm474, %v467, 0
      %v569 = vsel %vm474, %v468, 0
      %vm571 = vcmask 1045504
      %v573 = vsel %vm571, %v473, 0
      %575 = vmatprep.subr.bf16.mxu0 0
      %576 = vmatpush1.bf16.msra.mxu0 %v573
      %577 = vmatprep.subr.bf16.mxu0 0
      %578 = vmatpush1.bf16.msra.mxu0 0
      %579 = vmatprep.subr.bf16.mxu0 0
      %580 = vmatpush1.bf16.msra.mxu0 0
      %581 = vmatprep.subr.bf16.mxu0 0
      %582 = vmatpush1.bf16.msra.mxu0 0
      %583 = vmatprep.subr.bf16.mxu0 0
      %584 = vmatpush1.bf16.msra.mxu0 0
      %585 = vmatprep.subr.bf16.mxu0 0
      %586 = vmatpush1.bf16.msra.mxu0 0
      %587 = vmatprep.subr.bf16.mxu0 0
      %588 = vmatpush1.bf16.msra.mxu0 0
      %589 = vmatprep.subr.bf16.mxu0 0
      %590 = vmatpush1.bf16.msra.mxu0 0
      %591 = vmatprep.subr.bf16.mxu0 0
      %592 = vmatpush1.bf16.msra.mxu0 0
      %593 = vmatprep.subr.bf16.mxu0 0
      %594 = vmatpush1.bf16.msra.mxu0 0
      %595 = vmatprep.subr.bf16.mxu0 0
      %596 = vmatpush1.bf16.msra.mxu0 0
      %597 = vmatprep.subr.bf16.mxu0 0
      %598 = vmatpush1.bf16.msra.mxu0 0
      %599 = vmatprep.subr.bf16.mxu0 0
      %600 = vmatpush1.bf16.msra.mxu0 0
      %601 = vmatprep.subr.bf16.mxu0 0
      %602 = vmatpush1.bf16.msra.mxu0 0
      %603 = vmatprep.subr.bf16.mxu0 0
      %604 = vmatpush1.bf16.msra.mxu0 0
      %605 = vmatprep.subr.bf16.mxu0 0
      %606 = vmatpush1.bf16.msra.mxu0 0
      %607 = vmatprep.mubr.bf16.mxu0 0
      %608 = vmatmul.mubr.bf16.gmra.mrb[0].mxu0 %v476
      %v609 = vpop.f32.mrb[0].mxu0
      %v610 = vadd.f32 0.0, %v609
      %v611 = vpop.f32.mrb[0].mxu0
      %v612 = vpop.f32.mrb[0].mxu0
      %v613 = vadd.f32 0.0, %v612
      %v614 = vpop.f32.mrb[0].mxu0
      %615 = vmatprep.mubr.bf16.mxu0 0
      %616 = vmatmul.mubr.bf16.gmra.mrb[0].mxu0 %v479
      %v617 = vpop.f32.mrb[0].mxu0
      %v618 = vadd.f32 0.0, %v617
      %v619 = vpop.f32.mrb[0].mxu0
      %v620 = vpop.f32.mrb[0].mxu0
      %v621 = vadd.f32 0.0, %v620
      %v622 = vpop.f32.mrb[0].mxu0
      %623 = vmatprep.mubr.bf16.mxu0 0
      %624 = vmatmul.mubr.bf16.gmra.mrb[0].mxu0 %v482
      %v625 = vpop.f32.mrb[0].mxu0
      %v626 = vadd.f32 0.0, %v625
      %v627 = vpop.f32.mrb[0].mxu0
      %v628 = vpop.f32.mrb[0].mxu0
      %v629 = vadd.f32 0.0, %v628
      %v630 = vpop.f32.mrb[0].mxu0
      %631 = vmatprep.mubr.bf16.mxu0 0
      %632 = vmatmul.mubr.bf16.gmra.mrb[0].mxu0 %v485
      %v633 = vpop.f32.mrb[0].mxu0
      %v634 = vadd.f32 0.0, %v633
      %v635 = vpop.f32.mrb[0].mxu0
      %v636 = vpop.f32.mrb[0].mxu0
      %v637 = vadd.f32 0.0, %v636
      %v638 = vpop.f32.mrb[0].mxu0
      %639 = vmatprep.mubr.bf16.mxu0 0
      %640 = vmatmul.mubr.bf16.gmra.mrb[0].mxu0 %v488
      %v641 = vpop.f32.mrb[0].mxu0
      %v642 = vadd.f32 0.0, %v641
      %v643 = vpop.f32.mrb[0].mxu0
      %v644 = vpop.f32.mrb[0].mxu0
      %v645 = vadd.f32 0.0, %v644
      %v646 = vpop.f32.mrb[0].mxu0
      %647 = vmatprep.mubr.bf16.mxu0 0
      %648 = vmatmul.mubr.bf16.gmra.mrb[0].mxu0 %v491
      %v649 = vpop.f32.mrb[0].mxu0
      %v650 = vadd.f32 0.0, %v649
      %v651 = vpop.f32.mrb[0].mxu0
      %v652 = vpop.f32.mrb[0].mxu0
      %v653 = vadd.f32 0.0, %v652
      %v654 = vpop.f32.mrb[0].mxu0
      %655 = vmatprep.mubr.bf16.mxu0 0
      %656 = vmatmul.mubr.bf16.gmra.mrb[0].mxu0 %v494
      %v657 = vpop.f32.mrb[0].mxu0
      %v658 = vadd.f32 0.0, %v657
      %v659 = vpop.f32.mrb[0].mxu0
      %v660 = vpop.f32.mrb[0].mxu0
      %v661 = vadd.f32 0.0, %v660
      %v662 = vpop.f32.mrb[0].mxu0
      %663 = vmatprep.mubr.bf16.mxu0 0
      %664 = vmatmul.mubr.bf16.gmra.mrb[0].mxu0 %v497
      %v665 = vpop.f32.mrb[0].mxu0
      %v666 = vadd.f32 0.0, %v665
      %v667 = vpop.f32.mrb[0].mxu0
      %v668 = vpop.f32.mrb[0].mxu0
      %v669 = vadd.f32 0.0, %v668
      %v670 = vpop.f32.mrb[0].mxu0
      %671 = vmatprep.mubr.bf16.mxu0 0
      %672 = vmatmul.mubr.bf16.gmra.mrb[0].mxu0 %v500
      %v673 = vpop.f32.mrb[0].mxu0
      %v674 = vadd.f32 0.0, %v673
      %v675 = vpop.f32.mrb[0].mxu0
      %v676 = vpop.f32.mrb[0].mxu0
      %v677 = vadd.f32 0.0, %v676
      %v678 = vpop.f32.mrb[0].mxu0
      %679 = vmatprep.mubr.bf16.mxu0 0
      %680 = vmatmul.mubr.bf16.gmra.mrb[0].mxu0 %v503
      %v681 = vpop.f32.mrb[0].mxu0
      %v682 = vadd.f32 0.0, %v681
      %v683 = vpop.f32.mrb[0].mxu0
      %v684 = vpop.f32.mrb[0].mxu0
      %v685 = vadd.f32 0.0, %v684
      %v686 = vpop.f32.mrb[0].mxu0
      %687 = vmatprep.mubr.bf16.mxu0 0
      %688 = vmatmul.mubr.bf16.gmra.mrb[0].mxu0 %v506
      %v689 = vpop.f32.mrb[0].mxu0
      %v690 = vadd.f32 0.0, %v689
      %v691 = vpop.f32.mrb[0].mxu0
      %v692 = vpop.f32.mrb[0].mxu0
      %v693 = vadd.f32 0.0, %v692
      %v694 = vpop.f32.mrb[0].mxu0
      %695 = vmatprep.mubr.bf16.mxu0 0
      %696 = vmatmul.mubr.bf16.gmra.mrb[0].mxu0 %v509
      %v697 = vpop.f32.mrb[0].mxu0
      %v698 = vadd.f32 0.0, %v697
      %v699 = vpop.f32.mrb[0].mxu0
      %v700 = vpop.f32.mrb[0].mxu0
      %v701 = vadd.f32 0.0, %v700
      %v702 = vpop.f32.mrb[0].mxu0
      %703 = vmatprep.mubr.bf16.mxu0 0
      %704 = vmatmul.mubr.bf16.gmra.mrb[0].mxu0 %v512
      %v705 = vpop.f32.mrb[0].mxu0
      %v706 = vadd.f32 0.0, %v705
      %v707 = vpop.f32.mrb[0].mxu0
      %v708 = vpop.f32.mrb[0].mxu0
      %v709 = vadd.f32 0.0, %v708
      %v710 = vpop.f32.mrb[0].mxu0
      %711 = vmatprep.mubr.bf16.mxu0 0
      %712 = vmatmul.mubr.bf16.gmra.mrb[0].mxu0 %v515
      %v713 = vpop.f32.mrb[0].mxu0
      %v714 = vadd.f32 0.0, %v713
      %v715 = vpop.f32.mrb[0].mxu0
      %v716 = vpop.f32.mrb[0].mxu0
      %v717 = vadd.f32 0.0, %v716
      %v718 = vpop.f32.mrb[0].mxu0
      %719 = vmatprep.mubr.bf16.mxu0 0
      %720 = vmatmul.mubr.bf16.gmra.mrb[0].mxu0 %v518
      %v721 = vpop.f32.mrb[0].mxu0
      %v722 = vadd.f32 0.0, %v721
      %v723 = vpop.f32.mrb[0].mxu0
      %v724 = vpop.f32.mrb[0].mxu0
      %v725 = vadd.f32 0.0, %v724
      %v726 = vpop.f32.mrb[0].mxu0
      %727 = vmatprep.mubr.bf16.mxu0 0
      %728 = vmatmul.mubr.bf16.gmra.mrb[0].mxu0 %v521
      %v729 = vpop.f32.mrb[0].mxu0
      %v730 = vadd.f32 0.0, %v729
      %v731 = vpop.f32.mrb[0].mxu0
      %v732 = vpop.f32.mrb[0].mxu0
      %v733 = vadd.f32 0.0, %v732
      %v734 = vpop.f32.mrb[0].mxu0
      %735 = vmatprep.mubr.bf16.mxu0 0
      %736 = vmatmul.mubr.bf16.gmra.mrb[0].mxu0 %v524
      %v737 = vpop.f32.mrb[0].mxu0
      %v738 = vadd.f32 0.0, %v737
      %v739 = vpop.f32.mrb[0].mxu0
      %v740 = vpop.f32.mrb[0].mxu0
      %v741 = vadd.f32 0.0, %v740
      %v742 = vpop.f32.mrb[0].mxu0
      %743 = vmatprep.mubr.bf16.mxu0 0
      %744 = vmatmul.mubr.bf16.gmra.mrb[0].mxu0 %v527
      %v745 = vpop.f32.mrb[0].mxu0
      %v746 = vadd.f32 0.0, %v745
      %v747 = vpop.f32.mrb[0].mxu0
      %v748 = vpop.f32.mrb[0].mxu0
      %v749 = vadd.f32 0.0, %v748
      %v750 = vpop.f32.mrb[0].mxu0
      %751 = vmatprep.mubr.bf16.mxu0 0
      %752 = vmatmul.mubr.bf16.gmra.mrb[0].mxu0 %v530
      %v753 = vpop.f32.mrb[0].mxu0
      %v754 = vadd.f32 0.0, %v753
      %v755 = vpop.f32.mrb[0].mxu0
      %v756 = vpop.f32.mrb[0].mxu0
      %v757 = vadd.f32 0.0, %v756
      %v758 = vpop.f32.mrb[0].mxu0
      %759 = vmatprep.mubr.bf16.mxu0 0
      %760 = vmatmul.mubr.bf16.gmra.mrb[0].mxu0 %v533
      %v761 = vpop.f32.mrb[0].mxu0
      %v762 = vadd.f32 0.0, %v761
      %v763 = vpop.f32.mrb[0].mxu0
      %v764 = vpop.f32.mrb[0].mxu0
      %v765 = vadd.f32 0.0, %v764
      %v766 = vpop.f32.mrb[0].mxu0
      %767 = vmatprep.mubr.bf16.mxu0 0
      %768 = vmatmul.mubr.bf16.gmra.mrb[0].mxu0 %v536
      %v769 = vpop.f32.mrb[0].mxu0
      %v770 = vadd.f32 0.0, %v769
      %v771 = vpop.f32.mrb[0].mxu0
      %v772 = vpop.f32.mrb[0].mxu0
      %v773 = vadd.f32 0.0, %v772
      %v774 = vpop.f32.mrb[0].mxu0
      %775 = vmatprep.mubr.bf16.mxu0 0
      %776 = vmatmul.mubr.bf16.gmra.mrb[0].mxu0 %v539
      %v777 = vpop.f32.mrb[0].mxu0
      %v778 = vadd.f32 0.0, %v777
      %v779 = vpop.f32.mrb[0].mxu0
      %v780 = vpop.f32.mrb[0].mxu0
      %v781 = vadd.f32 0.0, %v780
      %v782 = vpop.f32.mrb[0].mxu0
      %783 = vmatprep.mubr.bf16.mxu0 0
      %784 = vmatmul.mubr.bf16.gmra.mrb[0].mxu0 %v542
      %v785 = vpop.f32.mrb[0].mxu0
      %v786 = vadd.f32 0.0, %v785
      %v787 = vpop.f32.mrb[0].mxu0
      %v788 = vpop.f32.mrb[0].mxu0
      %v789 = vadd.f32 0.0, %v788
      %v790 = vpop.f32.mrb[0].mxu0
      %791 = vmatprep.mubr.bf16.mxu0 0
      %792 = vmatmul.mubr.bf16.gmra.mrb[0].mxu0 %v545
      %v793 = vpop.f32.mrb[0].mxu0
      %v794 = vadd.f32 0.0, %v793
      %v795 = vpop.f32.mrb[0].mxu0
      %v796 = vpop.f32.mrb[0].mxu0
      %v797 = vadd.f32 0.0, %v796
      %v798 = vpop.f32.mrb[0].mxu0
      %799 = vmatprep.mubr.bf16.mxu0 0
      %800 = vmatmul.mubr.bf16.gmra.mrb[0].mxu0 %v548
      %v801 = vpop.f32.mrb[0].mxu0
      %v802 = vadd.f32 0.0, %v801
      %v803 = vpop.f32.mrb[0].mxu0
      %v804 = vpop.f32.mrb[0].mxu0
      %v805 = vadd.f32 0.0, %v804
      %v806 = vpop.f32.mrb[0].mxu0
      %807 = vmatprep.mubr.bf16.mxu0 0
      %808 = vmatmul.mubr.bf16.gmra.mrb[0].mxu0 %v551
      %v809 = vpop.f32.mrb[0].mxu0
      %v810 = vadd.f32 0.0, %v809
      %v811 = vpop.f32.mrb[0].mxu0
      %v812 = vpop.f32.mrb[0].mxu0
      %v813 = vadd.f32 0.0, %v812
      %v814 = vpop.f32.mrb[0].mxu0
      %815 = vmatprep.mubr.bf16.mxu0 0
      %816 = vmatmul.mubr.bf16.gmra.mrb[0].mxu0 %v554
      %v817 = vpop.f32.mrb[0].mxu0
      %v818 = vadd.f32 0.0, %v817
      %v819 = vpop.f32.mrb[0].mxu0
      %v820 = vpop.f32.mrb[0].mxu0
      %v821 = vadd.f32 0.0, %v820
      %v822 = vpop.f32.mrb[0].mxu0
      %823 = vmatprep.mubr.bf16.mxu0 0
      %824 = vmatmul.mubr.bf16.gmra.mrb[0].mxu0 %v557
      %v825 = vpop.f32.mrb[0].mxu0
      %v826 = vadd.f32 0.0, %v825
      %v827 = vpop.f32.mrb[0].mxu0
      %v828 = vpop.f32.mrb[0].mxu0
      %v829 = vadd.f32 0.0, %v828
      %v830 = vpop.f32.mrb[0].mxu0
      %831 = vmatprep.mubr.bf16.mxu0 0
      %832 = vmatmul.mubr.bf16.gmra.mrb[0].mxu0 %v560
      %v833 = vpop.f32.mrb[0].mxu0
      %v834 = vadd.f32 0.0, %v833
      %v835 = vpop.f32.mrb[0].mxu0
      %v836 = vpop.f32.mrb[0].mxu0
      %v837 = vadd.f32 0.0, %v836
      %v838 = vpop.f32.mrb[0].mxu0
      %839 = vmatprep.mubr.bf16.mxu0 0
      %840 = vmatmul.mubr.bf16.gmra.mrb[0].mxu0 %v563
      %v841 = vpop.f32.mrb[0].mxu0
      %v842 = vadd.f32 0.0, %v841
      %v843 = vpop.f32.mrb[0].mxu0
      %v844 = vpop.f32.mrb[0].mxu0
      %v845 = vadd.f32 0.0, %v844
      %v846 = vpop.f32.mrb[0].mxu0
      %847 = vmatprep.mubr.bf16.mxu0 0
      %848 = vmatmul.mubr.bf16.gmra.mrb[0].mxu0 %v566
      %v849 = vpop.f32.mrb[0].mxu0
      %v850 = vadd.f32 0.0, %v849
      %v851 = vpop.f32.mrb[0].mxu0
      %v852 = vpop.f32.mrb[0].mxu0
      %v853 = vadd.f32 0.0, %v852
      %v854 = vpop.f32.mrb[0].mxu0
      %855 = vmatprep.mubr.bf16.mxu0 0
      %856 = vmatmul.mubr.bf16.gmra.mrb[0].mxu0 %v569
      %v857 = vpop.f32.mrb[0].mxu0
      %v858 = vadd.f32 0.0, %v857
      %v859 = vpop.f32.mrb[0].mxu0
      %v860 = vpop.f32.mrb[0].mxu0
      %v861 = vadd.f32 0.0, %v860
      %v862 = vpop.f32.mrb[0].mxu0
      %863 = vdwg.mxu0
      %v868 = vunpack.c.l.b16 %v236
      %v869 = vunpack.c.l.b16 %v237
      %v870 = vunpack.c.l.b16 %v238
      %v871 = vunpack.c.l.b16 %v239
      %v872 = vpack.c.b16 %v869, %v868
      %v873 = vpack.c.b16 %v871, %v870
      %v876 = vunpack.c.l.b16 %v300
      %v877 = vunpack.c.l.b16 %v301
      %v878 = vpack.c.b16 %v877, %v876
      %v880 = vsel %vm474, %v872, 0
      %v883 = vsel %vm474, %v873, 0
      %v886 = vsel %vm571, %v878, 0
      %888 = vmatprep.subr.bf16.mxu0 0
      %889 = vmatpush1.bf16.msra.mxu0 %v886
      %890 = vmatprep.subr.bf16.mxu0 0
      %891 = vmatpush1.bf16.msra.mxu0 0
      %892 = vmatprep.subr.bf16.mxu0 0
      %893 = vmatpush1.bf16.msra.mxu0 0
      %894 = vmatprep.subr.bf16.mxu0 0
      %895 = vmatpush1.bf16.msra.mxu0 0
      %896 = vmatprep.subr.bf16.mxu0 0
      %897 = vmatpush1.bf16.msra.mxu0 0
      %898 = vmatprep.subr.bf16.mxu0 0
      %899 = vmatpush1.bf16.msra.mxu0 0
      %900 = vmatprep.subr.bf16.mxu0 0
      %901 = vmatpush1.bf16.msra.mxu0 0
      %902 = vmatprep.subr.bf16.mxu0 0
      %903 = vmatpush1.bf16.msra.mxu0 0
      %904 = vmatprep.subr.bf16.mxu0 0
      %905 = vmatpush1.bf16.msra.mxu0 0
      %906 = vmatprep.subr.bf16.mxu0 0
      %907 = vmatpush1.bf16.msra.mxu0 0
      %908 = vmatprep.subr.bf16.mxu0 0
      %909 = vmatpush1.bf16.msra.mxu0 0
      %910 = vmatprep.subr.bf16.mxu0 0
      %911 = vmatpush1.bf16.msra.mxu0 0
      %912 = vmatprep.subr.bf16.mxu0 0
      %913 = vmatpush1.bf16.msra.mxu0 0
      %914 = vmatprep.subr.bf16.mxu0 0
      %915 = vmatpush1.bf16.msra.mxu0 0
      %916 = vmatprep.subr.bf16.mxu0 0
      %917 = vmatpush1.bf16.msra.mxu0 0
      %918 = vmatprep.subr.bf16.mxu0 0
      %919 = vmatpush1.bf16.msra.mxu0 0
      %920 = vmatprep.mubr.bf16.mxu0 0
      %921 = vmatmul.mubr.bf16.gmra.mrb[0].mxu0 %v880
      %v922 = vpop.f32.mrb[0].mxu0
      %v923 = vadd.f32 %v610, %v922
      %v924 = vpop.f32.mrb[0].mxu0
      %v925 = vpop.f32.mrb[0].mxu0
      %v926 = vadd.f32 %v613, %v925
      %v927 = vpop.f32.mrb[0].mxu0
      %928 = vmatprep.mubr.bf16.mxu0 0
      %929 = vmatmul.mubr.bf16.gmra.mrb[0].mxu0 %v883
      %v930 = vpop.f32.mrb[0].mxu0
      %v931 = vadd.f32 %v618, %v930
      %v932 = vpop.f32.mrb[0].mxu0
      %v933 = vpop.f32.mrb[0].mxu0
      %v934 = vadd.f32 %v621, %v933
      %v935 = vpop.f32.mrb[0].mxu0
      %936 = vmatprep.mubr.bf16.mxu0 0
      %937 = vmatmul.mubr.bf16.gmra.mrb[0].mxu0 %v476
      %v938 = vpop.f32.mrb[0].mxu0
      %v939 = vadd.f32 %v626, %v938
      %v940 = vpop.f32.mrb[0].mxu0
      %v941 = vpop.f32.mrb[0].mxu0
      %v942 = vadd.f32 %v629, %v941
      %v943 = vpop.f32.mrb[0].mxu0
      %944 = vmatprep.mubr.bf16.mxu0 0
      %945 = vmatmul.mubr.bf16.gmra.mrb[0].mxu0 %v479
      %v946 = vpop.f32.mrb[0].mxu0
      %v947 = vadd.f32 %v634, %v946
      %v948 = vpop.f32.mrb[0].mxu0
      %v949 = vpop.f32.mrb[0].mxu0
      %v950 = vadd.f32 %v637, %v949
      %v951 = vpop.f32.mrb[0].mxu0
      %952 = vmatprep.mubr.bf16.mxu0 0
      %953 = vmatmul.mubr.bf16.gmra.mrb[0].mxu0 %v482
      %v954 = vpop.f32.mrb[0].mxu0
      %v955 = vadd.f32 %v642, %v954
      %v956 = vpop.f32.mrb[0].mxu0
      %v957 = vpop.f32.mrb[0].mxu0
      %v958 = vadd.f32 %v645, %v957
      %v959 = vpop.f32.mrb[0].mxu0
      %960 = vmatprep.mubr.bf16.mxu0 0
      %961 = vmatmul.mubr.bf16.gmra.mrb[0].mxu0 %v485
      %v962 = vpop.f32.mrb[0].mxu0
      %v963 = vadd.f32 %v650, %v962
      %v964 = vpop.f32.mrb[0].mxu0
      %v965 = vpop.f32.mrb[0].mxu0
      %v966 = vadd.f32 %v653, %v965
      %v967 = vpop.f32.mrb[0].mxu0
      %968 = vmatprep.mubr.bf16.mxu0 0
      %969 = vmatmul.mubr.bf16.gmra.mrb[0].mxu0 %v488
      %v970 = vpop.f32.mrb[0].mxu0
      %v971 = vadd.f32 %v658, %v970
      %v972 = vpop.f32.mrb[0].mxu0
      %v973 = vpop.f32.mrb[0].mxu0
      %v974 = vadd.f32 %v661, %v973
      %v975 = vpop.f32.mrb[0].mxu0
      %976 = vmatprep.mubr.bf16.mxu0 0
      %977 = vmatmul.mubr.bf16.gmra.mrb[0].mxu0 %v491
      %v978 = vpop.f32.mrb[0].mxu0
      %v979 = vadd.f32 %v666, %v978
      %v980 = vpop.f32.mrb[0].mxu0
      %v981 = vpop.f32.mrb[0].mxu0
      %v982 = vadd.f32 %v669, %v981
      %v983 = vpop.f32.mrb[0].mxu0
      %984 = vmatprep.mubr.bf16.mxu0 0
      %985 = vmatmul.mubr.bf16.gmra.mrb[0].mxu0 %v494
      %v986 = vpop.f32.mrb[0].mxu0
      %v987 = vadd.f32 %v674, %v986
      %v988 = vpop.f32.mrb[0].mxu0
      %v989 = vpop.f32.mrb[0].mxu0
      %v990 = vadd.f32 %v677, %v989
      %v991 = vpop.f32.mrb[0].mxu0
      %992 = vmatprep.mubr.bf16.mxu0 0
      %993 = vmatmul.mubr.bf16.gmra.mrb[0].mxu0 %v497
      %v994 = vpop.f32.mrb[0].mxu0
      %v995 = vadd.f32 %v682, %v994
      %v996 = vpop.f32.mrb[0].mxu0
      %v997 = vpop.f32.mrb[0].mxu0
      %v998 = vadd.f32 %v685, %v997
      %v999 = vpop.f32.mrb[0].mxu0
      %1000 = vmatprep.mubr.bf16.mxu0 0
      %1001 = vmatmul.mubr.bf16.gmra.mrb[0].mxu0 %v500
      %v1002 = vpop.f32.mrb[0].mxu0
      %v1003 = vadd.f32 %v690, %v1002
      %v1004 = vpop.f32.mrb[0].mxu0
      %v1005 = vpop.f32.mrb[0].mxu0
      %v1006 = vadd.f32 %v693, %v1005
      %v1007 = vpop.f32.mrb[0].mxu0
      %1008 = vmatprep.mubr.bf16.mxu0 0
      %1009 = vmatmul.mubr.bf16.gmra.mrb[0].mxu0 %v503
      %v1010 = vpop.f32.mrb[0].mxu0
      %v1011 = vadd.f32 %v698, %v1010
      %v1012 = vpop.f32.mrb[0].mxu0
      %v1013 = vpop.f32.mrb[0].mxu0
      %v1014 = vadd.f32 %v701, %v1013
      %v1015 = vpop.f32.mrb[0].mxu0
      %1016 = vmatprep.mubr.bf16.mxu0 0
      %1017 = vmatmul.mubr.bf16.gmra.mrb[0].mxu0 %v506
      %v1018 = vpop.f32.mrb[0].mxu0
      %v1019 = vadd.f32 %v706, %v1018
      %v1020 = vpop.f32.mrb[0].mxu0
      %v1021 = vpop.f32.mrb[0].mxu0
      %v1022 = vadd.f32 %v709, %v1021
      %v1023 = vpop.f32.mrb[0].mxu0
      %1024 = vmatprep.mubr.bf16.mxu0 0
      %1025 = vmatmul.mubr.bf16.gmra.mrb[0].mxu0 %v509
      %v1026 = vpop.f32.mrb[0].mxu0
      %v1027 = vadd.f32 %v714, %v1026
      %v1028 = vpop.f32.mrb[0].mxu0
      %v1029 = vpop.f32.mrb[0].mxu0
      %v1030 = vadd.f32 %v717, %v1029
      %v1031 = vpop.f32.mrb[0].mxu0
      %1032 = vmatprep.mubr.bf16.mxu0 0
      %1033 = vmatmul.mubr.bf16.gmra.mrb[0].mxu0 %v512
      %v1034 = vpop.f32.mrb[0].mxu0
      %v1035 = vadd.f32 %v722, %v1034
      %v1036 = vpop.f32.mrb[0].mxu0
      %v1037 = vpop.f32.mrb[0].mxu0
      %v1038 = vadd.f32 %v725, %v1037
      %v1039 = vpop.f32.mrb[0].mxu0
      %1040 = vmatprep.mubr.bf16.mxu0 0
      %1041 = vmatmul.mubr.bf16.gmra.mrb[0].mxu0 %v515
      %v1042 = vpop.f32.mrb[0].mxu0
      %v1043 = vadd.f32 %v730, %v1042
      %v1044 = vpop.f32.mrb[0].mxu0
      %v1045 = vpop.f32.mrb[0].mxu0
      %v1046 = vadd.f32 %v733, %v1045
      %v1047 = vpop.f32.mrb[0].mxu0
      %1048 = vmatprep.mubr.bf16.mxu0 0
      %1049 = vmatmul.mubr.bf16.gmra.mrb[0].mxu0 %v518
      %v1050 = vpop.f32.mrb[0].mxu0
      %v1051 = vadd.f32 %v738, %v1050
      %v1052 = vpop.f32.mrb[0].mxu0
      %v1053 = vpop.f32.mrb[0].mxu0
      %v1054 = vadd.f32 %v741, %v1053
      %v1055 = vpop.f32.mrb[0].mxu0
      %1056 = vmatprep.mubr.bf16.mxu0 0
      %1057 = vmatmul.mubr.bf16.gmra.mrb[0].mxu0 %v521
      %v1058 = vpop.f32.mrb[0].mxu0
      %v1059 = vadd.f32 %v746, %v1058
      %v1060 = vpop.f32.mrb[0].mxu0
      %v1061 = vpop.f32.mrb[0].mxu0
      %v1062 = vadd.f32 %v749, %v1061
      %v1063 = vpop.f32.mrb[0].mxu0
      %1064 = vmatprep.mubr.bf16.mxu0 0
      %1065 = vmatmul.mubr.bf16.gmra.mrb[0].mxu0 %v524
      %v1066 = vpop.f32.mrb[0].mxu0
      %v1067 = vadd.f32 %v754, %v1066
      %v1068 = vpop.f32.mrb[0].mxu0
      %v1069 = vpop.f32.mrb[0].mxu0
      %v1070 = vadd.f32 %v757, %v1069
      %v1071 = vpop.f32.mrb[0].mxu0
      %1072 = vmatprep.mubr.bf16.mxu0 0
      %1073 = vmatmul.mubr.bf16.gmra.mrb[0].mxu0 %v527
      %v1074 = vpop.f32.mrb[0].mxu0
      %v1075 = vadd.f32 %v762, %v1074
      %v1076 = vpop.f32.mrb[0].mxu0
      %v1077 = vpop.f32.mrb[0].mxu0
      %v1078 = vadd.f32 %v765, %v1077
      %v1079 = vpop.f32.mrb[0].mxu0
      %1080 = vmatprep.mubr.bf16.mxu0 0
      %1081 = vmatmul.mubr.bf16.gmra.mrb[0].mxu0 %v530
      %v1082 = vpop.f32.mrb[0].mxu0
      %v1083 = vadd.f32 %v770, %v1082
      %v1084 = vpop.f32.mrb[0].mxu0
      %v1085 = vpop.f32.mrb[0].mxu0
      %v1086 = vadd.f32 %v773, %v1085
      %v1087 = vpop.f32.mrb[0].mxu0
      %1088 = vmatprep.mubr.bf16.mxu0 0
      %1089 = vmatmul.mubr.bf16.gmra.mrb[0].mxu0 %v533
      %v1090 = vpop.f32.mrb[0].mxu0
      %v1091 = vadd.f32 %v778, %v1090
      %v1092 = vpop.f32.mrb[0].mxu0
      %v1093 = vpop.f32.mrb[0].mxu0
      %v1094 = vadd.f32 %v781, %v1093
      %v1095 = vpop.f32.mrb[0].mxu0
      %1096 = vmatprep.mubr.bf16.mxu0 0
      %1097 = vmatmul.mubr.bf16.gmra.mrb[0].mxu0 %v536
      %v1098 = vpop.f32.mrb[0].mxu0
      %v1099 = vadd.f32 %v786, %v1098
      %v1100 = vpop.f32.mrb[0].mxu0
      %v1101 = vpop.f32.mrb[0].mxu0
      %v1102 = vadd.f32 %v789, %v1101
      %v1103 = vpop.f32.mrb[0].mxu0
      %1104 = vmatprep.mubr.bf16.mxu0 0
      %1105 = vmatmul.mubr.bf16.gmra.mrb[0].mxu0 %v539
      %v1106 = vpop.f32.mrb[0].mxu0
      %v1107 = vadd.f32 %v794, %v1106
      %v1108 = vpop.f32.mrb[0].mxu0
      %v1109 = vpop.f32.mrb[0].mxu0
      %v1110 = vadd.f32 %v797, %v1109
      %v1111 = vpop.f32.mrb[0].mxu0
      %1112 = vmatprep.mubr.bf16.mxu0 0
      %1113 = vmatmul.mubr.bf16.gmra.mrb[0].mxu0 %v542
      %v1114 = vpop.f32.mrb[0].mxu0
      %v1115 = vadd.f32 %v802, %v1114
      %v1116 = vpop.f32.mrb[0].mxu0
      %v1117 = vpop.f32.mrb[0].mxu0
      %v1118 = vadd.f32 %v805, %v1117
      %v1119 = vpop.f32.mrb[0].mxu0
      %1120 = vmatprep.mubr.bf16.mxu0 0
      %1121 = vmatmul.mubr.bf16.gmra.mrb[0].mxu0 %v545
      %v1122 = vpop.f32.mrb[0].mxu0
      %v1123 = vadd.f32 %v810, %v1122
      %v1124 = vpop.f32.mrb[0].mxu0
      %v1125 = vpop.f32.mrb[0].mxu0
      %v1126 = vadd.f32 %v813, %v1125
      %v1127 = vpop.f32.mrb[0].mxu0
      %1128 = vmatprep.mubr.bf16.mxu0 0
      %1129 = vmatmul.mubr.bf16.gmra.mrb[0].mxu0 %v548
      %v1130 = vpop.f32.mrb[0].mxu0
      %v1131 = vadd.f32 %v818, %v1130
      %v1132 = vpop.f32.mrb[0].mxu0
      %v1133 = vpop.f32.mrb[0].mxu0
      %v1134 = vadd.f32 %v821, %v1133
      %v1135 = vpop.f32.mrb[0].mxu0
      %1136 = vmatprep.mubr.bf16.mxu0 0
      %1137 = vmatmul.mubr.bf16.gmra.mrb[0].mxu0 %v551
      %v1138 = vpop.f32.mrb[0].mxu0
      %v1139 = vadd.f32 %v826, %v1138
      %v1140 = vpop.f32.mrb[0].mxu0
      %v1141 = vpop.f32.mrb[0].mxu0
      %v1142 = vadd.f32 %v829, %v1141
      %v1143 = vpop.f32.mrb[0].mxu0
      %1144 = vmatprep.mubr.bf16.mxu0 0
      %1145 = vmatmul.mubr.bf16.gmra.mrb[0].mxu0 %v554
      %v1146 = vpop.f32.mrb[0].mxu0
      %v1147 = vadd.f32 %v834, %v1146
      %v1148 = vpop.f32.mrb[0].mxu0
      %v1149 = vpop.f32.mrb[0].mxu0
      %v1150 = vadd.f32 %v837, %v1149
      %v1151 = vpop.f32.mrb[0].mxu0
      %1152 = vmatprep.mubr.bf16.mxu0 0
      %1153 = vmatmul.mubr.bf16.gmra.mrb[0].mxu0 %v557
      %v1154 = vpop.f32.mrb[0].mxu0
      %v1155 = vadd.f32 %v842, %v1154
      %v1156 = vpop.f32.mrb[0].mxu0
      %v1157 = vpop.f32.mrb[0].mxu0
      %v1158 = vadd.f32 %v845, %v1157
      %v1159 = vpop.f32.mrb[0].mxu0
      %1160 = vmatprep.mubr.bf16.mxu0 0
      %1161 = vmatmul.mubr.bf16.gmra.mrb[0].mxu0 %v560
      %v1162 = vpop.f32.mrb[0].mxu0
      %v1163 = vadd.f32 %v850, %v1162
      %v1164 = vpop.f32.mrb[0].mxu0
      %v1165 = vpop.f32.mrb[0].mxu0
      %v1166 = vadd.f32 %v853, %v1165
      %v1167 = vpop.f32.mrb[0].mxu0
      %1168 = vmatprep.mubr.bf16.mxu0 0
      %1169 = vmatmul.mubr.bf16.gmra.mrb[0].mxu0 %v563
      %v1170 = vpop.f32.mrb[0].mxu0
      %v1171 = vadd.f32 %v858, %v1170
      %v1172 = vpop.f32.mrb[0].mxu0
      %v1173 = vpop.f32.mrb[0].mxu0
      %v1174 = vadd.f32 %v861, %v1173
      %v1175 = vpop.f32.mrb[0].mxu0
      %1176 = vdwg.mxu0
      %v1177 = vld [vmem:[%s224 + $0x20] sm:$0xf]
      %v1178 = vld [vmem:[%s224 + $0x24] sm:$0xf]
      %v1179 = vld [vmem:[%s224 + $0x28] sm:$0xf]
      %v1180 = vld [vmem:[%s224 + $0x2c] sm:$0xf]
      %v1181 = vld [vmem:[%s224 + $0x30] sm:$0xf]
      %v1182 = vld [vmem:[%s224 + $0x34] sm:$0xf]
      %v1183 = vld [vmem:[%s224 + $0x38] sm:$0xf]
      %v1184 = vld [vmem:[%s224 + $0x3c] sm:$0xf]
      %v1185 = vld [vmem:[%s224 + $0x40] sm:$0xf]
      %v1186 = vld [vmem:[%s224 + $0x44] sm:$0xf]
      %v1187 = vld [vmem:[%s224 + $0x48] sm:$0xf]
      %v1188 = vld [vmem:[%s224 + $0x4c] sm:$0xf]
      %v1189 = vld [vmem:[%s224 + $0x50] sm:$0xf]
      %v1190 = vld [vmem:[%s224 + $0x54] sm:$0xf]
      %v1191 = vld [vmem:[%s224 + $0x58] sm:$0xf]
      %v1192 = vld [vmem:[%s224 + $0x5c] sm:$0xf]
      %v1193 = vld [vmem:[%s224 + $0x60] sm:$0xf]
      %v1194 = vld [vmem:[%s224 + $0x64] sm:$0xf]
      %v1195 = vld [vmem:[%s224 + $0x68] sm:$0xf]
      %v1196 = vld [vmem:[%s224 + $0x6c] sm:$0xf]
      %v1197 = vld [vmem:[%s224 + $0x70] sm:$0xf]
      %v1198 = vld [vmem:[%s224 + $0x74] sm:$0xf]
      %v1199 = vld [vmem:[%s224 + $0x78] sm:$0xf]
      %v1200 = vld [vmem:[%s224 + $0x7c] sm:$0xf]
      %v1201 = vld [vmem:[%s224 + $0x80] sm:$0xf]
      %v1202 = vld [vmem:[%s224 + $0x84] sm:$0xf]
      %v1203 = vld [vmem:[%s224 + $0x88] sm:$0xf]
      %v1204 = vld [vmem:[%s224 + $0x8c] sm:$0xf]
      %v1205 = vld [vmem:[%s224 + $0x90] sm:$0xf]
      %v1206 = vld [vmem:[%s224 + $0x94] sm:$0xf]
      %v1207 = vld [vmem:[%s224 + $0x98] sm:$0xf]
      %v1208 = vld [vmem:[%s224 + $0x9c] sm:$0xf]
      %v1209 = vld [vmem:[%s224 + $0xa0] sm:$0xf]
      %v1210 = vld [vmem:[%s224 + $0xa4] sm:$0xf]
      %v1211 = vld [vmem:[%s224 + $0xa8] sm:$0xf]
      %v1212 = vld [vmem:[%s224 + $0xac] sm:$0xf]
      %v1213 = vld [vmem:[%s224 + $0xb0] sm:$0xf]
      %v1214 = vld [vmem:[%s224 + $0xb4] sm:$0xf]
      %v1215 = vld [vmem:[%s224 + $0xb8] sm:$0xf]
      %v1216 = vld [vmem:[%s224 + $0xbc] sm:$0xf]
      %v1217 = vld [vmem:[%s224 + $0xc0] sm:$0xf]
      %v1218 = vld [vmem:[%s224 + $0xc4] sm:$0xf]
      %v1219 = vld [vmem:[%s224 + $0xc8] sm:$0xf]
      %v1220 = vld [vmem:[%s224 + $0xcc] sm:$0xf]
      %v1221 = vld [vmem:[%s224 + $0xd0] sm:$0xf]
      %v1222 = vld [vmem:[%s224 + $0xd4] sm:$0xf]
      %v1223 = vld [vmem:[%s224 + $0xd8] sm:$0xf]
      %v1224 = vld [vmem:[%s224 + $0xdc] sm:$0xf]
      %v1225 = vld [vmem:[%s224 + $0xe0] sm:$0xf]
      %v1226 = vld [vmem:[%s224 + $0xe4] sm:$0xf]
      %v1227 = vld [vmem:[%s224 + $0xe8] sm:$0xf]
      %v1228 = vld [vmem:[%s224 + $0xec] sm:$0xf]
      %v1229 = vld [vmem:[%s224 + $0xf0] sm:$0xf]
      %v1230 = vld [vmem:[%s224 + $0xf4] sm:$0xf]
      %v1231 = vld [vmem:[%s224 + $0xf8] sm:$0xf]
      %v1232 = vld [vmem:[%s224 + $0xfc] sm:$0xf]
      %v1233 = vld [vmem:[%s224 + $0x100] sm:$0xf]
      %v1234 = vld [vmem:[%s224 + $0x104] sm:$0xf]
      %v1235 = vld [vmem:[%s224 + $0x108] sm:$0xf]
      %v1236 = vld [vmem:[%s224 + $0x10c] sm:$0xf]
      %v1237 = vld [vmem:[%s224 + $0x110] sm:$0xf]
      %v1238 = vld [vmem:[%s224 + $0x114] sm:$0xf]
      %v1239 = vld [vmem:[%s224 + $0x118] sm:$0xf]
      %v1240 = vld [vmem:[%s224 + $0x11c] sm:$0xf]
      %s1241 = scalar_lea.vmem %s1, 16
      %v1242 = vld [vmem:[%s1241] sm:$0xf]
      %v1243 = vld [vmem:[%s1241 + $0x4] sm:$0x3]
      %v1308 = vunpack.c.l.b16 %v1177
      %v1309 = vunpack.c.l.b16 %v1178
      %v1310 = vunpack.c.l.b16 %v1179
      %v1311 = vunpack.c.l.b16 %v1180
      %v1312 = vunpack.c.l.b16 %v1181
      %v1313 = vunpack.c.l.b16 %v1182
      %v1314 = vunpack.c.l.b16 %v1183
      %v1315 = vunpack.c.l.b16 %v1184
      %v1316 = vunpack.c.l.b16 %v1185
      %v1317 = vunpack.c.l.b16 %v1186
      %v1318 = vunpack.c.l.b16 %v1187
      %v1319 = vunpack.c.l.b16 %v1188
      %v1320 = vunpack.c.l.b16 %v1189
      %v1321 = vunpack.c.l.b16 %v1190
      %v1322 = vunpack.c.l.b16 %v1191
      %v1323 = vunpack.c.l.b16 %v1192
      %v1324 = vunpack.c.l.b16 %v1193
      %v1325 = vunpack.c.l.b16 %v1194
      %v1326 = vunpack.c.l.b16 %v1195
      %v1327 = vunpack.c.l.b16 %v1196
      %v1328 = vunpack.c.l.b16 %v1197
      %v1329 = vunpack.c.l.b16 %v1198
      %v1330 = vunpack.c.l.b16 %v1199
      %v1331 = vunpack.c.l.b16 %v1200
      %v1332 = vunpack.c.l.b16 %v1201
      %v1333 = vunpack.c.l.b16 %v1202
      %v1334 = vunpack.c.l.b16 %v1203
      %v1335 = vunpack.c.l.b16 %v1204
      %v1336 = vunpack.c.l.b16 %v1205
      %v1337 = vunpack.c.l.b16 %v1206
      %v1338 = vunpack.c.l.b16 %v1207
      %v1339 = vunpack.c.l.b16 %v1208
      %v1340 = vunpack.c.l.b16 %v1209
      %v1341 = vunpack.c.l.b16 %v1210
      %v1342 = vunpack.c.l.b16 %v1211
      %v1343 = vunpack.c.l.b16 %v1212
      %v1344 = vunpack.c.l.b16 %v1213
      %v1345 = vunpack.c.l.b16 %v1214
      %v1346 = vunpack.c.l.b16 %v1215
      %v1347 = vunpack.c.l.b16 %v1216
      %v1348 = vunpack.c.l.b16 %v1217
      %v1349 = vunpack.c.l.b16 %v1218
      %v1350 = vunpack.c.l.b16 %v1219
      %v1351 = vunpack.c.l.b16 %v1220
      %v1352 = vunpack.c.l.b16 %v1221
      %v1353 = vunpack.c.l.b16 %v1222
      %v1354 = vunpack.c.l.b16 %v1223
      %v1355 = vunpack.c.l.b16 %v1224
      %v1356 = vunpack.c.l.b16 %v1225
      %v1357 = vunpack.c.l.b16 %v1226
      %v1358 = vunpack.c.l.b16 %v1227
      %v1359 = vunpack.c.l.b16 %v1228
      %v1360 = vunpack.c.l.b16 %v1229
      %v1361 = vunpack.c.l.b16 %v1230
      %v1362 = vunpack.c.l.b16 %v1231
      %v1363 = vunpack.c.l.b16 %v1232
      %v1364 = vunpack.c.l.b16 %v1233
      %v1365 = vunpack.c.l.b16 %v1234
      %v1366 = vunpack.c.l.b16 %v1235
      %v1367 = vunpack.c.l.b16 %v1236
      %v1368 = vunpack.c.l.b16 %v1237
      %v1369 = vunpack.c.l.b16 %v1238
      %v1370 = vunpack.c.l.b16 %v1239
      %v1371 = vunpack.c.l.b16 %v1240
      %v1372 = vpack.c.b16 %v1309, %v1308
      %v1373 = vpack.c.b16 %v1311, %v1310
      %v1374 = vpack.c.b16 %v1313, %v1312
      %v1375 = vpack.c.b16 %v1315, %v1314
      %v1376 = vpack.c.b16 %v1317, %v1316
      %v1377 = vpack.c.b16 %v1319, %v1318
      %v1378 = vpack.c.b16 %v1321, %v1320
      %v1379 = vpack.c.b16 %v1323, %v1322
      %v1380 = vpack.c.b16 %v1325, %v1324
      %v1381 = vpack.c.b16 %v1327, %v1326
      %v1382 = vpack.c.b16 %v1329, %v1328
      %v1383 = vpack.c.b16 %v1331, %v1330
      %v1384 = vpack.c.b16 %v1333, %v1332
      %v1385 = vpack.c.b16 %v1335, %v1334
      %v1386 = vpack.c.b16 %v1337, %v1336
      %v1387 = vpack.c.b16 %v1339, %v1338
      %v1388 = vpack.c.b16 %v1341, %v1340
      %v1389 = vpack.c.b16 %v1343, %v1342
      %v1390 = vpack.c.b16 %v1345, %v1344
      %v1391 = vpack.c.b16 %v1347, %v1346
      %v1392 = vpack.c.b16 %v1349, %v1348
      %v1393 = vpack.c.b16 %v1351, %v1350
      %v1394 = vpack.c.b16 %v1353, %v1352
      %v1395 = vpack.c.b16 %v1355, %v1354
      %v1396 = vpack.c.b16 %v1357, %v1356
      %v1397 = vpack.c.b16 %v1359, %v1358
      %v1398 = vpack.c.b16 %v1361, %v1360
      %v1399 = vpack.c.b16 %v1363, %v1362
      %v1400 = vpack.c.b16 %v1365, %v1364
      %v1401 = vpack.c.b16 %v1367, %v1366
      %v1402 = vpack.c.b16 %v1369, %v1368
      %v1403 = vpack.c.b16 %v1371, %v1370
      %v1406 = vunpack.c.l.b16 %v1242
      %v1407 = vunpack.c.l.b16 %v1243
      %v1408 = vpack.c.b16 %v1407, %v1406
      %v1410 = vsel %vm474, %v1372, 0
      %v1413 = vsel %vm474, %v1373, 0
      %v1416 = vsel %vm474, %v1374, 0
      %v1419 = vsel %vm474, %v1375, 0
      %v1422 = vsel %vm474, %v1376, 0
      %v1425 = vsel %vm474, %v1377, 0
      %v1428 = vsel %vm474, %v1378, 0
      %v1431 = vsel %vm474, %v1379, 0
      %v1434 = vsel %vm474, %v1380, 0
      %v1437 = vsel %vm474, %v1381, 0
      %v1440 = vsel %vm474, %v1382, 0
      %v1443 = vsel %vm474, %v1383, 0
      %v1446 = vsel %vm474, %v1384, 0
      %v1449 = vsel %vm474, %v1385, 0
      %v1452 = vsel %vm474, %v1386, 0
      %v1455 = vsel %vm474, %v1387, 0
      %v1458 = vsel %vm474, %v1388, 0
      %v1461 = vsel %vm474, %v1389, 0
      %v1464 = vsel %vm474, %v1390, 0
      %v1467 = vsel %vm474, %v1391, 0
      %v1470 = vsel %vm474, %v1392, 0
      %v1473 = vsel %vm474, %v1393, 0
      %v1476 = vsel %vm474, %v1394, 0
      %v1479 = vsel %vm474, %v1395, 0
      %v1482 = vsel %vm474, %v1396, 0
      %v1485 = vsel %vm474, %v1397, 0
      %v1488 = vsel %vm474, %v1398, 0
      %v1491 = vsel %vm474, %v1399, 0
      %v1494 = vsel %vm474, %v1400, 0
      %v1497 = vsel %vm474, %v1401, 0
      %v1500 = vsel %vm474, %v1402, 0
      %v1503 = vsel %vm474, %v1403, 0
      %v1506 = vsel %vm571, %v1408, 0
      %1508 = vmatprep.subr.bf16.mxu0 0
      %1509 = vmatpush1.bf16.msra.mxu0 %v1506
      %1510 = vmatprep.subr.bf16.mxu0 0
      %1511 = vmatpush1.bf16.msra.mxu0 0
      %1512 = vmatprep.subr.bf16.mxu0 0
      %1513 = vmatpush1.bf16.msra.mxu0 0
      %1514 = vmatprep.subr.bf16.mxu0 0
      %1515 = vmatpush1.bf16.msra.mxu0 0
      %1516 = vmatprep.subr.bf16.mxu0 0
      %1517 = vmatpush1.bf16.msra.mxu0 0
      %1518 = vmatprep.subr.bf16.mxu0 0
      %1519 = vmatpush1.bf16.msra.mxu0 0
      %1520 = vmatprep.subr.bf16.mxu0 0
      %1521 = vmatpush1.bf16.msra.mxu0 0
      %1522 = vmatprep.subr.bf16.mxu0 0
      %1523 = vmatpush1.bf16.msra.mxu0 0
      %1524 = vmatprep.subr.bf16.mxu0 0
      %1525 = vmatpush1.bf16.msra.mxu0 0
      %1526 = vmatprep.subr.bf16.mxu0 0
      %1527 = vmatpush1.bf16.msra.mxu0 0
      %1528 = vmatprep.subr.bf16.mxu0 0
      %1529 = vmatpush1.bf16.msra.mxu0 0
      %1530 = vmatprep.subr.bf16.mxu0 0
      %1531 = vmatpush1.bf16.msra.mxu0 0
      %1532 = vmatprep.subr.bf16.mxu0 0
      %1533 = vmatpush1.bf16.msra.mxu0 0
      %1534 = vmatprep.subr.bf16.mxu0 0
      %1535 = vmatpush1.bf16.msra.mxu0 0
      %1536 = vmatprep.subr.bf16.mxu0 0
      %1537 = vmatpush1.bf16.msra.mxu0 0
      %1538 = vmatprep.subr.bf16.mxu0 0
      %1539 = vmatpush1.bf16.msra.mxu0 0
      %1540 = vmatprep.mubr.bf16.mxu0 0
      %1541 = vmatmul.mubr.bf16.gmra.mrb[0].mxu0 %v1410
      %v1542 = vpop.f32.mrb[0].mxu0
      %v1543 = vadd.f32 0.0, %v1542
      %v1544 = vpop.f32.mrb[0].mxu0
      %v1545 = vpop.f32.mrb[0].mxu0
      %v1546 = vadd.f32 0.0, %v1545
      %v1547 = vpop.f32.mrb[0].mxu0
      %1548 = vmatprep.mubr.bf16.mxu0 0
      %1549 = vmatmul.mubr.bf16.gmra.mrb[0].mxu0 %v1413
      %v1550 = vpop.f32.mrb[0].mxu0
      %v1551 = vadd.f32 0.0, %v1550
      %v1552 = vpop.f32.mrb[0].mxu0
      %v1553 = vpop.f32.mrb[0].mxu0
      %v1554 = vadd.f32 0.0, %v1553
      %v1555 = vpop.f32.mrb[0].mxu0
      %1556 = vmatprep.mubr.bf16.mxu0 0
      %1557 = vmatmul.mubr.bf16.gmra.mrb[0].mxu0 %v1416
      %v1558 = vpop.f32.mrb[0].mxu0
      %v1559 = vadd.f32 0.0, %v1558
      %v1560 = vpop.f32.mrb[0].mxu0
      %v1561 = vpop.f32.mrb[0].mxu0
      %v1562 = vadd.f32 0.0, %v1561
      %v1563 = vpop.f32.mrb[0].mxu0
      %1564 = vmatprep.mubr.bf16.mxu0 0
      %1565 = vmatmul.mubr.bf16.gmra.mrb[0].mxu0 %v1419
      %v1566 = vpop.f32.mrb[0].mxu0
      %v1567 = vadd.f32 0.0, %v1566
      %v1568 = vpop.f32.mrb[0].mxu0
      %v1569 = vpop.f32.mrb[0].mxu0
      %v1570 = vadd.f32 0.0, %v1569
      %v1571 = vpop.f32.mrb[0].mxu0
      %1572 = vmatprep.mubr.bf16.mxu0 0
      %1573 = vmatmul.mubr.bf16.gmra.mrb[0].mxu0 %v1422
      %v1574 = vpop.f32.mrb[0].mxu0
      %v1575 = vadd.f32 0.0, %v1574
      %v1576 = vpop.f32.mrb[0].mxu0
      %v1577 = vpop.f32.mrb[0].mxu0
      %v1578 = vadd.f32 0.0, %v1577
      %v1579 = vpop.f32.mrb[0].mxu0
      %1580 = vmatprep.mubr.bf16.mxu0 0
      %1581 = vmatmul.mubr.bf16.gmra.mrb[0].mxu0 %v1425
      %v1582 = vpop.f32.mrb[0].mxu0
      %v1583 = vadd.f32 0.0, %v1582
      %v1584 = vpop.f32.mrb[0].mxu0
      %v1585 = vpop.f32.mrb[0].mxu0
      %v1586 = vadd.f32 0.0, %v1585
      %v1587 = vpop.f32.mrb[0].mxu0
      %1588 = vmatprep.mubr.bf16.mxu0 0
      %1589 = vmatmul.mubr.bf16.gmra.mrb[0].mxu0 %v1428
      %v1590 = vpop.f32.mrb[0].mxu0
      %v1591 = vadd.f32 0.0, %v1590
      %v1592 = vpop.f32.mrb[0].mxu0
      %v1593 = vpop.f32.mrb[0].mxu0
      %v1594 = vadd.f32 0.0, %v1593
      %v1595 = vpop.f32.mrb[0].mxu0
      %1596 = vmatprep.mubr.bf16.mxu0 0
      %1597 = vmatmul.mubr.bf16.gmra.mrb[0].mxu0 %v1431
      %v1598 = vpop.f32.mrb[0].mxu0
      %v1599 = vadd.f32 0.0, %v1598
      %v1600 = vpop.f32.mrb[0].mxu0
      %v1601 = vpop.f32.mrb[0].mxu0
      %v1602 = vadd.f32 0.0, %v1601
      %v1603 = vpop.f32.mrb[0].mxu0
      %1604 = vmatprep.mubr.bf16.mxu0 0
      %1605 = vmatmul.mubr.bf16.gmra.mrb[0].mxu0 %v1434
      %v1606 = vpop.f32.mrb[0].mxu0
      %v1607 = vadd.f32 0.0, %v1606
      %v1608 = vpop.f32.mrb[0].mxu0
      %v1609 = vpop.f32.mrb[0].mxu0
      %v1610 = vadd.f32 0.0, %v1609
      %v1611 = vpop.f32.mrb[0].mxu0
      %1612 = vmatprep.mubr.bf16.mxu0 0
      %1613 = vmatmul.mubr.bf16.gmra.mrb[0].mxu0 %v1437
      %v1614 = vpop.f32.mrb[0].mxu0
      %v1615 = vadd.f32 0.0, %v1614
      %v1616 = vpop.f32.mrb[0].mxu0
      %v1617 = vpop.f32.mrb[0].mxu0
      %v1618 = vadd.f32 0.0, %v1617
      %v1619 = vpop.f32.mrb[0].mxu0
      %1620 = vmatprep.mubr.bf16.mxu0 0
      %1621 = vmatmul.mubr.bf16.gmra.mrb[0].mxu0 %v1440
      %v1622 = vpop.f32.mrb[0].mxu0
      %v1623 = vadd.f32 0.0, %v1622
      %v1624 = vpop.f32.mrb[0].mxu0
      %v1625 = vpop.f32.mrb[0].mxu0
      %v1626 = vadd.f32 0.0, %v1625
      %v1627 = vpop.f32.mrb[0].mxu0
      %1628 = vmatprep.mubr.bf16.mxu0 0
      %1629 = vmatmul.mubr.bf16.gmra.mrb[0].mxu0 %v1443
      %v1630 = vpop.f32.mrb[0].mxu0
      %v1631 = vadd.f32 0.0, %v1630
      %v1632 = vpop.f32.mrb[0].mxu0
      %v1633 = vpop.f32.mrb[0].mxu0
      %v1634 = vadd.f32 0.0, %v1633
      %v1635 = vpop.f32.mrb[0].mxu0
      %1636 = vmatprep.mubr.bf16.mxu0 0
      %1637 = vmatmul.mubr.bf16.gmra.mrb[0].mxu0 %v1446
      %v1638 = vpop.f32.mrb[0].mxu0
      %v1639 = vadd.f32 0.0, %v1638
      %v1640 = vpop.f32.mrb[0].mxu0
      %v1641 = vpop.f32.mrb[0].mxu0
      %v1642 = vadd.f32 0.0, %v1641
      %v1643 = vpop.f32.mrb[0].mxu0
      %1644 = vmatprep.mubr.bf16.mxu0 0
      %1645 = vmatmul.mubr.bf16.gmra.mrb[0].mxu0 %v1449
      %v1646 = vpop.f32.mrb[0].mxu0
      %v1647 = vadd.f32 0.0, %v1646
      %v1648 = vpop.f32.mrb[0].mxu0
      %v1649 = vpop.f32.mrb[0].mxu0
      %v1650 = vadd.f32 0.0, %v1649
      %v1651 = vpop.f32.mrb[0].mxu0
      %1652 = vmatprep.mubr.bf16.mxu0 0
      %1653 = vmatmul.mubr.bf16.gmra.mrb[0].mxu0 %v1452
      %v1654 = vpop.f32.mrb[0].mxu0
      %v1655 = vadd.f32 0.0, %v1654
      %v1656 = vpop.f32.mrb[0].mxu0
      %v1657 = vpop.f32.mrb[0].mxu0
      %v1658 = vadd.f32 0.0, %v1657
      %v1659 = vpop.f32.mrb[0].mxu0
      %1660 = vmatprep.mubr.bf16.mxu0 0
      %1661 = vmatmul.mubr.bf16.gmra.mrb[0].mxu0 %v1455
      %v1662 = vpop.f32.mrb[0].mxu0
      %v1663 = vadd.f32 0.0, %v1662
      %v1664 = vpop.f32.mrb[0].mxu0
      %v1665 = vpop.f32.mrb[0].mxu0
      %v1666 = vadd.f32 0.0, %v1665
      %v1667 = vpop.f32.mrb[0].mxu0
      %1668 = vmatprep.mubr.bf16.mxu0 0
      %1669 = vmatmul.mubr.bf16.gmra.mrb[0].mxu0 %v1458
      %v1670 = vpop.f32.mrb[0].mxu0
      %v1671 = vadd.f32 0.0, %v1670
      %v1672 = vpop.f32.mrb[0].mxu0
      %v1673 = vpop.f32.mrb[0].mxu0
      %v1674 = vadd.f32 0.0, %v1673
      %v1675 = vpop.f32.mrb[0].mxu0
      %1676 = vmatprep.mubr.bf16.mxu0 0
      %1677 = vmatmul.mubr.bf16.gmra.mrb[0].mxu0 %v1461
      %v1678 = vpop.f32.mrb[0].mxu0
      %v1679 = vadd.f32 0.0, %v1678
      %v1680 = vpop.f32.mrb[0].mxu0
      %v1681 = vpop.f32.mrb[0].mxu0
      %v1682 = vadd.f32 0.0, %v1681
      %v1683 = vpop.f32.mrb[0].mxu0
      %1684 = vmatprep.mubr.bf16.mxu0 0
      %1685 = vmatmul.mubr.bf16.gmra.mrb[0].mxu0 %v1464
      %v1686 = vpop.f32.mrb[0].mxu0
      %v1687 = vadd.f32 0.0, %v1686
      %v1688 = vpop.f32.mrb[0].mxu0
      %v1689 = vpop.f32.mrb[0].mxu0
      %v1690 = vadd.f32 0.0, %v1689
      %v1691 = vpop.f32.mrb[0].mxu0
      %1692 = vmatprep.mubr.bf16.mxu0 0
      %1693 = vmatmul.mubr.bf16.gmra.mrb[0].mxu0 %v1467
      %v1694 = vpop.f32.mrb[0].mxu0
      %v1695 = vadd.f32 0.0, %v1694
      %v1696 = vpop.f32.mrb[0].mxu0
      %v1697 = vpop.f32.mrb[0].mxu0
      %v1698 = vadd.f32 0.0, %v1697
      %v1699 = vpop.f32.mrb[0].mxu0
      %1700 = vmatprep.mubr.bf16.mxu0 0
      %1701 = vmatmul.mubr.bf16.gmra.mrb[0].mxu0 %v1470
      %v1702 = vpop.f32.mrb[0].mxu0
      %v1703 = vadd.f32 0.0, %v1702
      %v1704 = vpop.f32.mrb[0].mxu0
      %v1705 = vpop.f32.mrb[0].mxu0
      %v1706 = vadd.f32 0.0, %v1705
      %v1707 = vpop.f32.mrb[0].mxu0
      %1708 = vmatprep.mubr.bf16.mxu0 0
      %1709 = vmatmul.mubr.bf16.gmra.mrb[0].mxu0 %v1473
      %v1710 = vpop.f32.mrb[0].mxu0
      %v1711 = vadd.f32 0.0, %v1710
      %v1712 = vpop.f32.mrb[0].mxu0
      %v1713 = vpop.f32.mrb[0].mxu0
      %v1714 = vadd.f32 0.0, %v1713
      %v1715 = vpop.f32.mrb[0].mxu0
      %1716 = vmatprep.mubr.bf16.mxu0 0
      %1717 = vmatmul.mubr.bf16.gmra.mrb[0].mxu0 %v1476
      %v1718 = vpop.f32.mrb[0].mxu0
      %v1719 = vadd.f32 0.0, %v1718
      %v1720 = vpop.f32.mrb[0].mxu0
      %v1721 = vpop.f32.mrb[0].mxu0
      %v1722 = vadd.f32 0.0, %v1721
      %v1723 = vpop.f32.mrb[0].mxu0
      %1724 = vmatprep.mubr.bf16.mxu0 0
      %1725 = vmatmul.mubr.bf16.gmra.mrb[0].mxu0 %v1479
      %v1726 = vpop.f32.mrb[0].mxu0
      %v1727 = vadd.f32 0.0, %v1726
      %v1728 = vpop.f32.mrb[0].mxu0
      %v1729 = vpop.f32.mrb[0].mxu0
      %v1730 = vadd.f32 0.0, %v1729
      %v1731 = vpop.f32.mrb[0].mxu0
      %1732 = vmatprep.mubr.bf16.mxu0 0
      %1733 = vmatmul.mubr.bf16.gmra.mrb[0].mxu0 %v1482
      %v1734 = vpop.f32.mrb[0].mxu0
      %v1735 = vadd.f32 0.0, %v1734
      %v1736 = vpop.f32.mrb[0].mxu0
      %v1737 = vpop.f32.mrb[0].mxu0
      %v1738 = vadd.f32 0.0, %v1737
      %v1739 = vpop.f32.mrb[0].mxu0
      %1740 = vmatprep.mubr.bf16.mxu0 0
      %1741 = vmatmul.mubr.bf16.gmra.mrb[0].mxu0 %v1485
      %v1742 = vpop.f32.mrb[0].mxu0
      %v1743 = vadd.f32 0.0, %v1742
      %v1744 = vpop.f32.mrb[0].mxu0
      %v1745 = vpop.f32.mrb[0].mxu0
      %v1746 = vadd.f32 0.0, %v1745
      %v1747 = vpop.f32.mrb[0].mxu0
      %1748 = vmatprep.mubr.bf16.mxu0 0
      %1749 = vmatmul.mubr.bf16.gmra.mrb[0].mxu0 %v1488
      %v1750 = vpop.f32.mrb[0].mxu0
      %v1751 = vadd.f32 0.0, %v1750
      %v1752 = vpop.f32.mrb[0].mxu0
      %v1753 = vpop.f32.mrb[0].mxu0
      %v1754 = vadd.f32 0.0, %v1753
      %v1755 = vpop.f32.mrb[0].mxu0
      %1756 = vmatprep.mubr.bf16.mxu0 0
      %1757 = vmatmul.mubr.bf16.gmra.mrb[0].mxu0 %v1491
      %v1758 = vpop.f32.mrb[0].mxu0
      %v1759 = vadd.f32 0.0, %v1758
      %v1760 = vpop.f32.mrb[0].mxu0
      %v1761 = vpop.f32.mrb[0].mxu0
      %v1762 = vadd.f32 0.0, %v1761
      %v1763 = vpop.f32.mrb[0].mxu0
      %1764 = vmatprep.mubr.bf16.mxu0 0
      %1765 = vmatmul.mubr.bf16.gmra.mrb[0].mxu0 %v1494
      %v1766 = vpop.f32.mrb[0].mxu0
      %v1767 = vadd.f32 0.0, %v1766
      %v1768 = vpop.f32.mrb[0].mxu0
      %v1769 = vpop.f32.mrb[0].mxu0
      %v1770 = vadd.f32 0.0, %v1769
      %v1771 = vpop.f32.mrb[0].mxu0
      %1772 = vmatprep.mubr.bf16.mxu0 0
      %1773 = vmatmul.mubr.bf16.gmra.mrb[0].mxu0 %v1497
      %v1774 = vpop.f32.mrb[0].mxu0
      %v1775 = vadd.f32 0.0, %v1774
      %v1776 = vpop.f32.mrb[0].mxu0
      %v1777 = vpop.f32.mrb[0].mxu0
      %v1778 = vadd.f32 0.0, %v1777
      %v1779 = vpop.f32.mrb[0].mxu0
      %1780 = vmatprep.mubr.bf16.mxu0 0
      %1781 = vmatmul.mubr.bf16.gmra.mrb[0].mxu0 %v1500
      %v1782 = vpop.f32.mrb[0].mxu0
      %v1783 = vadd.f32 0.0, %v1782
      %v1784 = vpop.f32.mrb[0].mxu0
      %v1785 = vpop.f32.mrb[0].mxu0
      %v1786 = vadd.f32 0.0, %v1785
      %v1787 = vpop.f32.mrb[0].mxu0
      %1788 = vmatprep.mubr.bf16.mxu0 0
      %1789 = vmatmul.mubr.bf16.gmra.mrb[0].mxu0 %v1503
      %v1790 = vpop.f32.mrb[0].mxu0
      %v1791 = vadd.f32 0.0, %v1790
      %v1792 = vpop.f32.mrb[0].mxu0
      %v1793 = vpop.f32.mrb[0].mxu0
      %v1794 = vadd.f32 0.0, %v1793
      %v1795 = vpop.f32.mrb[0].mxu0
      %1796 = vdwg.mxu0
      %v1797 = vadd.f32 %v923, %v1543
      %v1798 = vadd.f32 %v926, %v1546
      %v1799 = vadd.f32 %v931, %v1551
      %v1800 = vadd.f32 %v934, %v1554
      %v1801 = vadd.f32 %v939, %v1559
      %v1802 = vadd.f32 %v942, %v1562
      %v1803 = vadd.f32 %v947, %v1567
      %v1804 = vadd.f32 %v950, %v1570
      %v1805 = vadd.f32 %v955, %v1575
      %v1806 = vadd.f32 %v958, %v1578
      %v1807 = vadd.f32 %v963, %v1583
      %v1808 = vadd.f32 %v966, %v1586
      %v1809 = vadd.f32 %v971, %v1591
      %v1810 = vadd.f32 %v974, %v1594
      %v1811 = vadd.f32 %v979, %v1599
      %v1812 = vadd.f32 %v982, %v1602
      %v1813 = vadd.f32 %v987, %v1607
      %v1814 = vadd.f32 %v990, %v1610
      %v1815 = vadd.f32 %v995, %v1615
      %v1816 = vadd.f32 %v998, %v1618
      %v1817 = vadd.f32 %v1003, %v1623
      %v1818 = vadd.f32 %v1006, %v1626
      %v1819 = vadd.f32 %v1011, %v1631
      %v1820 = vadd.f32 %v1014, %v1634
      %v1821 = vadd.f32 %v1019, %v1639
      %v1822 = vadd.f32 %v1022, %v1642
      %v1823 = vadd.f32 %v1027, %v1647
      %v1824 = vadd.f32 %v1030, %v1650
      %v1825 = vadd.f32 %v1035, %v1655
      %v1826 = vadd.f32 %v1038, %v1658
      %v1827 = vadd.f32 %v1043, %v1663
      %v1828 = vadd.f32 %v1046, %v1666
      %v1829 = vadd.f32 %v1051, %v1671
      %v1830 = vadd.f32 %v1054, %v1674
      %v1831 = vadd.f32 %v1059, %v1679
      %v1832 = vadd.f32 %v1062, %v1682
      %v1833 = vadd.f32 %v1067, %v1687
      %v1834 = vadd.f32 %v1070, %v1690
      %v1835 = vadd.f32 %v1075, %v1695
      %v1836 = vadd.f32 %v1078, %v1698
      %v1837 = vadd.f32 %v1083, %v1703
      %v1838 = vadd.f32 %v1086, %v1706
      %v1839 = vadd.f32 %v1091, %v1711
      %v1840 = vadd.f32 %v1094, %v1714
      %v1841 = vadd.f32 %v1099, %v1719
      %v1842 = vadd.f32 %v1102, %v1722
      %v1843 = vadd.f32 %v1107, %v1727
      %v1844 = vadd.f32 %v1110, %v1730
      %v1845 = vadd.f32 %v1115, %v1735
      %v1846 = vadd.f32 %v1118, %v1738
      %v1847 = vadd.f32 %v1123, %v1743
      %v1848 = vadd.f32 %v1126, %v1746
      %v1849 = vadd.f32 %v1131, %v1751
      %v1850 = vadd.f32 %v1134, %v1754
      %v1851 = vadd.f32 %v1139, %v1759
      %v1852 = vadd.f32 %v1142, %v1762
      %v1853 = vadd.f32 %v1147, %v1767
      %v1854 = vadd.f32 %v1150, %v1770
      %v1855 = vadd.f32 %v1155, %v1775
      %v1856 = vadd.f32 %v1158, %v1778
      %v1857 = vadd.f32 %v1163, %v1783
      %v1858 = vadd.f32 %v1166, %v1786
      %v1859 = vadd.f32 %v1171, %v1791
      %v1860 = vadd.f32 %v1174, %v1794
      %v1861 = vld [vmem:[%s2] sm:$0x1]
      %v1863 = vlaneseq
      %v1864 = vshrl.u32 %v1863, 7
      %v1865 = vsub.s32 0, %v1864
      %v1866 = vrot.slane %v1861, %v1865
      %v1868 = vmul.f32 %v1797, %v1866
      %v1869 = vmul.f32 %v1798, %v1866
      %v1870 = vmul.f32 %v1799, %v1866
      %v1871 = vmul.f32 %v1800, %v1866
      %v1872 = vmul.f32 %v1801, %v1866
      %v1873 = vmul.f32 %v1802, %v1866
      %v1874 = vmul.f32 %v1803, %v1866
      %v1875 = vmul.f32 %v1804, %v1866
      %v1876 = vmul.f32 %v1805, %v1866
      %v1877 = vmul.f32 %v1806, %v1866
      %v1878 = vmul.f32 %v1807, %v1866
      %v1879 = vmul.f32 %v1808, %v1866
      %v1880 = vmul.f32 %v1809, %v1866
      %v1881 = vmul.f32 %v1810, %v1866
      %v1882 = vmul.f32 %v1811, %v1866
      %v1883 = vmul.f32 %v1812, %v1866
      %v1884 = vmul.f32 %v1813, %v1866
      %v1885 = vmul.f32 %v1814, %v1866
      %v1886 = vmul.f32 %v1815, %v1866
      %v1887 = vmul.f32 %v1816, %v1866
      %v1888 = vmul.f32 %v1817, %v1866
      %v1889 = vmul.f32 %v1818, %v1866
      %v1890 = vmul.f32 %v1819, %v1866
      %v1891 = vmul.f32 %v1820, %v1866
      %v1892 = vmul.f32 %v1821, %v1866
      %v1893 = vmul.f32 %v1822, %v1866
      %v1894 = vmul.f32 %v1823, %v1866
      %v1895 = vmul.f32 %v1824, %v1866
      %v1896 = vmul.f32 %v1825, %v1866
      %v1897 = vmul.f32 %v1826, %v1866
      %v1898 = vmul.f32 %v1827, %v1866
      %v1899 = vmul.f32 %v1828, %v1866
      %v1900 = vmul.f32 %v1829, %v1866
      %v1901 = vmul.f32 %v1830, %v1866
      %v1902 = vmul.f32 %v1831, %v1866
      %v1903 = vmul.f32 %v1832, %v1866
      %v1904 = vmul.f32 %v1833, %v1866
      %v1905 = vmul.f32 %v1834, %v1866
      %v1906 = vmul.f32 %v1835, %v1866
      %v1907 = vmul.f32 %v1836, %v1866
      %v1908 = vmul.f32 %v1837, %v1866
      %v1909 = vmul.f32 %v1838, %v1866
      %v1910 = vmul.f32 %v1839, %v1866
      %v1911 = vmul.f32 %v1840, %v1866
      %v1912 = vmul.f32 %v1841, %v1866
      %v1913 = vmul.f32 %v1842, %v1866
      %v1914 = vmul.f32 %v1843, %v1866
      %v1915 = vmul.f32 %v1844, %v1866
      %v1916 = vmul.f32 %v1845, %v1866
      %v1917 = vmul.f32 %v1846, %v1866
      %v1918 = vmul.f32 %v1847, %v1866
      %v1919 = vmul.f32 %v1848, %v1866
      %v1920 = vmul.f32 %v1849, %v1866
      %v1921 = vmul.f32 %v1850, %v1866
      %v1922 = vmul.f32 %v1851, %v1866
      %v1923 = vmul.f32 %v1852, %v1866
      %v1924 = vmul.f32 %v1853, %v1866
      %v1925 = vmul.f32 %v1854, %v1866
      %v1926 = vmul.f32 %v1855, %v1866
      %v1927 = vmul.f32 %v1856, %v1866
      %v1928 = vmul.f32 %v1857, %v1866
      %v1929 = vmul.f32 %v1858, %v1866
      %v1930 = vmul.f32 %v1859, %v1866
      %v1931 = vmul.f32 %v1860, %v1866
      %v1932 = vld [vmem:[%s3] sm:$0x1]
      %v1934 = vlaneseq
      %v1935 = vshrl.u32 %v1934, 7
      %v1936 = vsub.s32 0, %v1935
      %v1937 = vrot.slane %v1932, %v1936
      %v1939 = vadd.f32 %v1868, %v1937
      %v1940 = vadd.f32 %v1869, %v1937
      %v1941 = vadd.f32 %v1870, %v1937
      %v1942 = vadd.f32 %v1871, %v1937
      %v1943 = vadd.f32 %v1872, %v1937
      %v1944 = vadd.f32 %v1873, %v1937
      %v1945 = vadd.f32 %v1874, %v1937
      %v1946 = vadd.f32 %v1875, %v1937
      %v1947 = vadd.f32 %v1876, %v1937
      %v1948 = vadd.f32 %v1877, %v1937
      %v1949 = vadd.f32 %v1878, %v1937
      %v1950 = vadd.f32 %v1879, %v1937
      %v1951 = vadd.f32 %v1880, %v1937
      %v1952 = vadd.f32 %v1881, %v1937
      %v1953 = vadd.f32 %v1882, %v1937
      %v1954 = vadd.f32 %v1883, %v1937
      %v1955 = vadd.f32 %v1884, %v1937
      %v1956 = vadd.f32 %v1885, %v1937
      %v1957 = vadd.f32 %v1886, %v1937
      %v1958 = vadd.f32 %v1887, %v1937
      %v1959 = vadd.f32 %v1888, %v1937
      %v1960 = vadd.f32 %v1889, %v1937
      %v1961 = vadd.f32 %v1890, %v1937
      %v1962 = vadd.f32 %v1891, %v1937
      %v1963 = vadd.f32 %v1892, %v1937
      %v1964 = vadd.f32 %v1893, %v1937
      %v1965 = vadd.f32 %v1894, %v1937
      %v1966 = vadd.f32 %v1895, %v1937
      %v1967 = vadd.f32 %v1896, %v1937
      %v1968 = vadd.f32 %v1897, %v1937
      %v1969 = vadd.f32 %v1898, %v1937
      %v1970 = vadd.f32 %v1899, %v1937
      %v1971 = vadd.f32 %v1900, %v1937
      %v1972 = vadd.f32 %v1901, %v1937
      %v1973 = vadd.f32 %v1902, %v1937
      %v1974 = vadd.f32 %v1903, %v1937
      %v1975 = vadd.f32 %v1904, %v1937
      %v1976 = vadd.f32 %v1905, %v1937
      %v1977 = vadd.f32 %v1906, %v1937
      %v1978 = vadd.f32 %v1907, %v1937
      %v1979 = vadd.f32 %v1908, %v1937
      %v1980 = vadd.f32 %v1909, %v1937
      %v1981 = vadd.f32 %v1910, %v1937
      %v1982 = vadd.f32 %v1911, %v1937
      %v1983 = vadd.f32 %v1912, %v1937
      %v1984 = vadd.f32 %v1913, %v1937
      %v1985 = vadd.f32 %v1914, %v1937
      %v1986 = vadd.f32 %v1915, %v1937
      %v1987 = vadd.f32 %v1916, %v1937
      %v1988 = vadd.f32 %v1917, %v1937
      %v1989 = vadd.f32 %v1918, %v1937
      %v1990 = vadd.f32 %v1919, %v1937
      %v1991 = vadd.f32 %v1920, %v1937
      %v1992 = vadd.f32 %v1921, %v1937
      %v1993 = vadd.f32 %v1922, %v1937
      %v1994 = vadd.f32 %v1923, %v1937
      %v1995 = vadd.f32 %v1924, %v1937
      %v1996 = vadd.f32 %v1925, %v1937
      %v1997 = vadd.f32 %v1926, %v1937
      %v1998 = vadd.f32 %v1927, %v1937
      %v1999 = vadd.f32 %v1928, %v1937
      %v2000 = vadd.f32 %v1929, %v1937
      %v2001 = vadd.f32 %v1930, %v1937
      %v2002 = vadd.f32 %v1931, %v1937
      %v2003 = vmax.f32 %v1939, 0.0
      %v2004 = vmax.f32 %v1940, 0.0
      %v2005 = vmax.f32 %v1941, 0.0
      %v2006 = vmax.f32 %v1942, 0.0
      %v2007 = vmax.f32 %v1943, 0.0
      %v2008 = vmax.f32 %v1944, 0.0
      %v2009 = vmax.f32 %v1945, 0.0
      %v2010 = vmax.f32 %v1946, 0.0
      %v2011 = vmax.f32 %v1947, 0.0
      %v2012 = vmax.f32 %v1948, 0.0
      %v2013 = vmax.f32 %v1949, 0.0
      %v2014 = vmax.f32 %v1950, 0.0
      %v2015 = vmax.f32 %v1951, 0.0
      %v2016 = vmax.f32 %v1952, 0.0
      %v2017 = vmax.f32 %v1953, 0.0
      %v2018 = vmax.f32 %v1954, 0.0
      %v2019 = vmax.f32 %v1955, 0.0
      %v2020 = vmax.f32 %v1956, 0.0
      %v2021 = vmax.f32 %v1957, 0.0
      %v2022 = vmax.f32 %v1958, 0.0
      %v2023 = vmax.f32 %v1959, 0.0
      %v2024 = vmax.f32 %v1960, 0.0
      %v2025 = vmax.f32 %v1961, 0.0
      %v2026 = vmax.f32 %v1962, 0.0
      %v2027 = vmax.f32 %v1963, 0.0
      %v2028 = vmax.f32 %v1964, 0.0
      %v2029 = vmax.f32 %v1965, 0.0
      %v2030 = vmax.f32 %v1966, 0.0
      %v2031 = vmax.f32 %v1967, 0.0
      %v2032 = vmax.f32 %v1968, 0.0
      %v2033 = vmax.f32 %v1969, 0.0
      %v2034 = vmax.f32 %v1970, 0.0
      %v2035 = vmax.f32 %v1971, 0.0
      %v2036 = vmax.f32 %v1972, 0.0
      %v2037 = vmax.f32 %v1973, 0.0
      %v2038 = vmax.f32 %v1974, 0.0
      %v2039 = vmax.f32 %v1975, 0.0
      %v2040 = vmax.f32 %v1976, 0.0
      %v2041 = vmax.f32 %v1977, 0.0
      %v2042 = vmax.f32 %v1978, 0.0
      %v2043 = vmax.f32 %v1979, 0.0
      %v2044 = vmax.f32 %v1980, 0.0
      %v2045 = vmax.f32 %v1981, 0.0
      %v2046 = vmax.f32 %v1982, 0.0
      %v2047 = vmax.f32 %v1983, 0.0
      %v2048 = vmax.f32 %v1984, 0.0
      %v2049 = vmax.f32 %v1985, 0.0
      %v2050 = vmax.f32 %v1986, 0.0
      %v2051 = vmax.f32 %v1987, 0.0
      %v2052 = vmax.f32 %v1988, 0.0
      %v2053 = vmax.f32 %v1989, 0.0
      %v2054 = vmax.f32 %v1990, 0.0
      %v2055 = vmax.f32 %v1991, 0.0
      %v2056 = vmax.f32 %v1992, 0.0
      %v2057 = vmax.f32 %v1993, 0.0
      %v2058 = vmax.f32 %v1994, 0.0
      %v2059 = vmax.f32 %v1995, 0.0
      %v2060 = vmax.f32 %v1996, 0.0
      %v2061 = vmax.f32 %v1997, 0.0
      %v2062 = vmax.f32 %v1998, 0.0
      %v2063 = vmax.f32 %v1999, 0.0
      %v2064 = vmax.f32 %v2000, 0.0
      %v2065 = vmax.f32 %v2001, 0.0
      %v2066 = vmax.f32 %v2002, 0.0
      %2067 = vst [vmem:[%s231] sm:$0xff] %v2003
      %2068 = vst [vmem:[%s231 + $0x8] sm:$0xff] %v2004
      %2069 = vst [vmem:[%s231 + $0x10] sm:$0xff] %v2005
      %2070 = vst [vmem:[%s231 + $0x18] sm:$0xff] %v2006
      %2071 = vst [vmem:[%s231 + $0x20] sm:$0xff] %v2007
      %2072 = vst [vmem:[%s231 + $0x28] sm:$0xff] %v2008
      %2073 = vst [vmem:[%s231 + $0x30] sm:$0xff] %v2009
      %2074 = vst [vmem:[%s231 + $0x38] sm:$0xff] %v2010
      %2075 = vst [vmem:[%s231 + $0x40] sm:$0xff] %v2011
      %2076 = vst [vmem:[%s231 + $0x48] sm:$0xff] %v2012
      %2077 = vst [vmem:[%s231 + $0x50] sm:$0xff] %v2013
      %2078 = vst [vmem:[%s231 + $0x58] sm:$0xff] %v2014
      %2079 = vst [vmem:[%s231 + $0x60] sm:$0xff] %v2015
      %2080 = vst [vmem:[%s231 + $0x68] sm:$0xff] %v2016
      %2081 = vst [vmem:[%s231 + $0x70] sm:$0xff] %v2017
      %2082 = vst [vmem:[%s231 + $0x78] sm:$0xff] %v2018
      %2083 = vst [vmem:[%s231 + $0x80] sm:$0xff] %v2019
      %2084 = vst [vmem:[%s231 + $0x88] sm:$0xff] %v2020
      %2085 = vst [vmem:[%s231 + $0x90] sm:$0xff] %v2021
      %2086 = vst [vmem:[%s231 + $0x98] sm:$0xff] %v2022
      %2087 = vst [vmem:[%s231 + $0xa0] sm:$0xff] %v2023
      %2088 = vst [vmem:[%s231 + $0xa8] sm:$0xff] %v2024
      %2089 = vst [vmem:[%s231 + $0xb0] sm:$0xff] %v2025
      %2090 = vst [vmem:[%s231 + $0xb8] sm:$0xff] %v2026
      %2091 = vst [vmem:[%s231 + $0xc0] sm:$0xff] %v2027
      %2092 = vst [vmem:[%s231 + $0xc8] sm:$0xff] %v2028
      %2093 = vst [vmem:[%s231 + $0xd0] sm:$0xff] %v2029
      %2094 = vst [vmem:[%s231 + $0xd8] sm:$0xff] %v2030
      %2095 = vst [vmem:[%s231 + $0xe0] sm:$0xff] %v2031
      %2096 = vst [vmem:[%s231 + $0xe8] sm:$0xff] %v2032
      %2097 = vst [vmem:[%s231 + $0xf0] sm:$0xff] %v2033
      %2098 = vst [vmem:[%s231 + $0xf8] sm:$0xff] %v2034
      %2099 = vst [vmem:[%s231 + $0x100] sm:$0xff] %v2035
      %2100 = vst [vmem:[%s231 + $0x108] sm:$0xff] %v2036
      %2101 = vst [vmem:[%s231 + $0x110] sm:$0xff] %v2037
      %2102 = vst [vmem:[%s231 + $0x118] sm:$0xff] %v2038
      %2103 = vst [vmem:[%s231 + $0x120] sm:$0xff] %v2039
      %2104 = vst [vmem:[%s231 + $0x128] sm:$0xff] %v2040
      %2105 = vst [vmem:[%s231 + $0x130] sm:$0xff] %v2041
      %2106 = vst [vmem:[%s231 + $0x138] sm:$0xff] %v2042
      %2107 = vst [vmem:[%s231 + $0x140] sm:$0xff] %v2043
      %2108 = vst [vmem:[%s231 + $0x148] sm:$0xff] %v2044
      %2109 = vst [vmem:[%s231 + $0x150] sm:$0xff] %v2045
      %2110 = vst [vmem:[%s231 + $0x158] sm:$0xff] %v2046
      %2111 = vst [vmem:[%s231 + $0x160] sm:$0xff] %v2047
      %2112 = vst [vmem:[%s231 + $0x168] sm:$0xff] %v2048
      %2113 = vst [vmem:[%s231 + $0x170] sm:$0xff] %v2049
      %2114 = vst [vmem:[%s231 + $0x178] sm:$0xff] %v2050
      %2115 = vst [vmem:[%s231 + $0x180] sm:$0xff] %v2051
      %2116 = vst [vmem:[%s231 + $0x188] sm:$0xff] %v2052
      %2117 = vst [vmem:[%s231 + $0x190] sm:$0xff] %v2053
      %2118 = vst [vmem:[%s231 + $0x198] sm:$0xff] %v2054
      %2119 = vst [vmem:[%s231 + $0x1a0] sm:$0xff] %v2055
      %2120 = vst [vmem:[%s231 + $0x1a8] sm:$0xff] %v2056
      %2121 = vst [vmem:[%s231 + $0x1b0] sm:$0xff] %v2057
      %2122 = vst [vmem:[%s231 + $0x1b8] sm:$0xff] %v2058
      %2123 = vst [vmem:[%s231 + $0x1c0] sm:$0xff] %v2059
      %2124 = vst [vmem:[%s231 + $0x1c8] sm:$0xff] %v2060
      %2125 = vst [vmem:[%s231 + $0x1d0] sm:$0xff] %v2061
      %2126 = vst [vmem:[%s231 + $0x1d8] sm:$0xff] %v2062
      %2127 = vst [vmem:[%s231 + $0x1e0] sm:$0xff] %v2063
      %2128 = vst [vmem:[%s231 + $0x1e8] sm:$0xff] %v2064
      %2129 = vst [vmem:[%s231 + $0x1f0] sm:$0xff] %v2065
      %2130 = vst [vmem:[%s231 + $0x1f8] sm:$0xff] %v2066
      %s2131 = smul.u32 %s19, 2
      %s2132 = sadd.s32 %s2131, %s20
      %s2133 = smul.u32 64, %s2132
      %p2134 = scmp.lt.s32.totalorder %s2133, 255
      %s2135 = scalar_select %p2134, %s2133, 255
      %s2136 = smul.addr %s2135, 8
      %s2137 = scalar_lea.vmem %s4, %s2136
      // Predicated region
      $region37: #{upsamp_block_forward.3} parent=35 // pred_check
        %p2138 = pneg %p140
      $region38: #{upsamp_block_forward.3} parent=35 // pred_check_branch
        %2140 = sbr.rel (%p2138) target = $region40
      $region39: #{upsamp_block_forward.3} parent=35 // pred_region
        %s2141 = smul.u32 %s19, 2
        %s2142 = sadd.s32 %s2141, %s20
        %s2143 = smul.u32 64, %s2142
      $region40: #{upsamp_block_forward.3} parent=35 // pred_fallthru
        _
    $region36: #{upsamp_block_forward.3} parent=5 // pred_fallthru
      _
    %p2144 = scmp.le.s32.totalorder 2, %s10
    // Predicated region
    $region41: #{upsamp_block_forward.3} parent=5 // pred_check
      %p2145 = pneg %p2144
    $region42: #{upsamp_block_forward.3} parent=5 // pred_check_branch
      %2147 = sbr.rel (%p2145) target = $region44
    $region43: #{upsamp_block_forward.3} parent=5 // pred_region
      %s2148 = ssub.s32 %s10, 2
      // Predicated region
      $region45: #{upsamp_block_forward.3} parent=43 // pred_check
        %p2149 = pneg %p146
      $region46: #{upsamp_block_forward.3} parent=43 // pred_check_branch
        %2151 = sbr.rel (%p2149) target = $region48
      $region47: #{upsamp_block_forward.3} parent=43 // pred_region
        %s2152 = smul.u32 %s21, 2
        %s2153 = sadd.s32 %s2152, %s22
        %s2154 = smul.u32 64, %s2153
        %p2155 = scmp.lt.s32.totalorder %s2154, 255
        %s2156 = scalar_select %p2155, %s2154, 255
        %s2157 = smul.addr %s2156, 8
        %s2158 = scalar_lea.vmem %s4, %s2157
      $region48: #{upsamp_block_forward.3} parent=43 // pred_fallthru
        _
    $region44: #{upsamp_block_forward.3} parent=5 // pred_fallthru
      _
  $region6: #{upsamp_block_forward.3} parent=0 // loop_footer
    %s14 = sadd.s32 1, %s10
  $region7: #{upsamp_block_forward.3} parent=0 // loop_footer_branch
    %9 = sbr.rel target = $region3
  $region8: #{upsamp_block_forward.3} parent=0 // loop_exit
    _

</llo_original>
